<compile_context>
chip_gen: v5e
topology: v5e:2x2
jax: 0.10.0
libtpu: 0.0.40
codegen_flags: <defaults>
</compile_context>

<pallas_src>
import functools
import math

import jax
import jax.numpy as jnp
import numpy as np
from jax import lax
from jax.experimental import pallas as pl
from jax.experimental.pallas import tpu as pltpu

EPS = 1e-5
LANE = 128       # lane width / alignment target (v5e/v6e/v7x)
TM_MAX = 512     # M-tile rows: ~85% of HBM roofline; working set << 32 MiB scoped VMEM


def _round_up(x, m):
    return (x + m - 1) // m * m


# ------------- Pass 1: conv-as-matmul (single resident K block) + BN partial stats ---- #
def _conv_stats_kernel(patches_ref, wt_ref, y_ref, stat_ref):
    # bf16 x bf16 -> f32 MXU matmul; whole K fits in one block so no K-loop, no
    # accumulator scratch, no pl.when / pl.program_id.
    acc = jnp.dot(patches_ref[...], wt_ref[...], preferred_element_type=jnp.float32)
    y_ref[...] = acc
    # Per-tile BN partial statistics.  Zero-padded M rows of `patches` give acc == 0
    # exactly, so they contribute nothing to sum / sumsq -> no row mask needed.
    ps = jnp.sum(acc, axis=0, keepdims=True)          # (1, COP) sum
    pq = jnp.sum(acc * acc, axis=0, keepdims=True)    # (1, COP) sum of squares
    r8 = lax.broadcasted_iota(jnp.int32, (8, 1), 0)
    stat_ref[...] = jnp.where(r8 == 0, ps, jnp.where(r8 == 1, pq, 0.0))


def conv_matmul_stats(patches, wt, *, tm):
    """patches: (MP, KP) bf16; wt: (KP, COP) bf16.  Returns (y f32, per-tile stats)."""
    MP, KP = patches.shape
    COP = wt.shape[1]
    nm = MP // tm
    flops = 2 * MP * KP * COP
    bytes_accessed = patches.size * 2 + wt.size * 2 + MP * COP * 4 + nm * 8 * COP * 4
    return pl.pallas_call(
        _conv_stats_kernel,
        grid=(nm,),
        in_specs=[
            pl.BlockSpec((tm, KP), lambda i: (i, 0)),     # patches tile
            pl.BlockSpec((KP, COP), lambda i: (0, 0)),    # whole weight, resident
        ],
        out_specs=(
            pl.BlockSpec((tm, COP), lambda i: (i, 0)),    # pre-BN conv output (f32)
            pl.BlockSpec((8, COP), lambda i: (i, 0)),     # per-tile (sum, sumsq)
        ),
        out_shape=(
            jax.ShapeDtypeStruct((MP, COP), jnp.float32),
            jax.ShapeDtypeStruct((nm * 8, COP), jnp.float32),
        ),
        compiler_params=pltpu.CompilerParams(
            dimension_semantics=("parallel",),
            vmem_limit_bytes=32 * 1024 * 1024),
        cost_estimate=pl.CostEstimate(flops=flops, transcendentals=0,
                                      bytes_accessed=bytes_accessed),
    )(patches, wt)


# ---------------------- Pass 2: normalize (affine-folded) + ReLU ---------------------- #
def _bn_relu_kernel(y_ref, scale_ref, shift_ref, o_ref):
    y = y_ref[...] * scale_ref[...] + shift_ref[...]
    o_ref[...] = jnp.maximum(y, 0.0).astype(o_ref.dtype)


def bn_relu_apply(y, scale, shift, *, tm, out_dtype):
    MP, COP = y.shape
    nm = MP // tm
    return pl.pallas_call(
        _bn_relu_kernel,
        grid=(nm,),
        in_specs=[
            pl.BlockSpec((tm, COP), lambda i: (i, 0)),
            pl.BlockSpec((1, COP), lambda i: (0, 0)),
            pl.BlockSpec((1, COP), lambda i: (0, 0)),
        ],
        out_specs=pl.BlockSpec((tm, COP), lambda i: (i, 0)),
        out_shape=jax.ShapeDtypeStruct((MP, COP), out_dtype),
        compiler_params=pltpu.CompilerParams(
            dimension_semantics=("parallel",),
            vmem_limit_bytes=32 * 1024 * 1024),
    )(y, scale, shift)


# ------------------------------------ JAX glue ---------------------------------------- #
def im2col_3d_cl(x_cl, ksize, stride, pad, kp):
    """x_cl: (N, D, H, W, C) bf16 -> patches (M, kp) with K laid out channel-major /
    tap-minor, zero taps appended per channel up to kp // C (kp must be divisible by
    C).  Padding the tap axis here avoids a second full-HBM pad pass over (M, K)."""
    N, D, H, W, C = x_cl.shape
    kd, kh, kw = ksize
    taps = kd * kh * kw
    taps_p = kp // C
    xp = jnp.pad(x_cl, ((0, 0), (pad, pad), (pad, pad), (pad, pad), (0, 0)))
    Do = (D + 2 * pad - kd) // stride + 1
    Ho = (H + 2 * pad - kh) // stride + 1
    Wo = (W + 2 * pad - kw) // stride + 1
    cols = []
    for dz in range(kd):
        for dy in range(kh):
            for dx in range(kw):
                cols.append(xp[:, dz:dz + Do * stride:stride,
                               dy:dy + Ho * stride:stride,
                               dx:dx + Wo * stride:stride, :])
    patches = jnp.stack(cols, axis=-1)                       # (N, Do, Ho, Wo, C, taps)
    patches = jnp.pad(patches, ((0, 0),) * 5 + ((0, taps_p - taps),))
    patches = patches.reshape(N * Do * Ho * Wo, C * taps_p)
    return patches, (Do, Ho, Wo)


def prep_weight(w, kp, cop):
    """PyTorch (Cout, Cin, kd, kh, kw) -> (kp, cop) bf16 matching im2col's K layout."""
    Cout, Cin, kd, kh, kw = w.shape
    taps = kd * kh * kw
    taps_p = kp // Cin
    wt = jnp.pad(w.reshape(Cout, Cin, taps).astype(jnp.float32),
                 ((0, 0), (0, 0), (0, taps_p - taps)))
    wt = wt.reshape(Cout, kp).T                              # (kp, Cout)
    wt = jnp.pad(wt, ((0, 0), (0, cop - Cout)))
    return wt.astype(jnp.bfloat16)


def conv_bn_relu_stage(x_cl, w, b, gamma, beta, stride, padding, *, out_dtype):
    """x_cl: (N, D, H, W, Cin); returns (N, Do, Ho, Wo, Cout) channels-last."""
    # The conv bias cancels exactly in train-mode BatchNorm:
    #   (conv + b) - mean(conv + b) == conv - mean(conv), var unchanged.
    del b
    N, D, H, W, Cin = x_cl.shape
    Cout, _, kd, kh, kw = w.shape
    K = Cin * kd * kh * kw
    KP = _round_up(K, math.lcm(LANE, Cin))        # lane-aligned and divisible by Cin
    COP = _round_up(max(Cout, LANE), LANE)        # lane-dense output channels

    patches, (Do, Ho, Wo) = im2col_3d_cl(x_cl.astype(jnp.bfloat16),
                                         (kd, kh, kw), stride, padding, KP)
    M = patches.shape[0]
    tm = min(TM_MAX, _round_up(M, 8))             # >=2 M tiles whenever M > 512 (v7x 2 TCs)
    MP = _round_up(M, tm)
    if MP != M:
        patches = jnp.pad(patches, ((0, MP - M), (0, 0)))

    wt = prep_weight(w, KP, COP)
    gamma_p = jnp.pad(gamma.astype(jnp.float32).reshape(1, Cout),
                      ((0, 0), (0, COP - Cout)))
    beta_p = jnp.pad(beta.astype(jnp.float32).reshape(1, Cout),
                     ((0, 0), (0, COP - Cout)))

    # Pass 1: fused matmul + per-tile (sum, sumsq).
    y, pstat = conv_matmul_stats(patches, wt, tm=tm)

    # Tiny cross-tile combine (nm x 128) in plain JAX.
    stats = pstat.reshape(-1, 8, COP)
    s = jnp.sum(stats[:, 0, :], axis=0)
    sq = jnp.sum(stats[:, 1, :], axis=0)
    mean = s / M
    # TODO(synk): single-pass E[y^2]-E[y]^2 in f32 can lose precision when |mean| >> std;
    #             a shifted / Chan-style tile combine would be more robust.
    var = jnp.maximum(sq / M - mean * mean, 0.0)
    inv_std = lax.rsqrt(var + EPS)
    scale = (gamma_p[0] * inv_std).reshape(1, COP)
    shift = (beta_p[0] - mean * gamma_p[0] * inv_std).reshape(1, COP)

    # Pass 2: normalize + ReLU over lane-dense tiles.
    out = bn_relu_apply(y, scale, shift, tm=tm, out_dtype=out_dtype)
    return out[:M, :Cout].reshape(N, Do, Ho, Wo, Cout)


def conv_block_forward(x, params, *, stride, padding):
    """ConvBlock.forward: [Conv3d -> BatchNorm3d -> ReLU] * stages.
    NCDHW in/out; channels-last (bf16) between stages; final stage emits f32."""
    x_cl = jnp.transpose(x, (0, 2, 3, 4, 1))                 # NDHWC
    n_stages = len(params)
    for i, (w, b, gamma, beta) in enumerate(params):
        out_dtype = jnp.float32 if i == n_stages - 1 else jnp.bfloat16
        x_cl = conv_bn_relu_stage(x_cl, w, b, gamma, beta, stride, padding,
                                  out_dtype=out_dtype)
    return jnp.transpose(x_cl, (0, 4, 1, 2, 3)).astype(jnp.float32)   # NCDHW


# -------------------------------- pure-JAX reference ----------------------------------- #
def reference_forward(x, params, *, stride, padding):
    for (w, b, gamma, beta) in params:
        y = lax.conv_general_dilated(
            x.astype(jnp.bfloat16), w.astype(jnp.bfloat16),
            window_strides=(stride,) * 3,
            padding=[(padding, padding)] * 3,
            dimension_numbers=("NCDHW", "OIDHW", "NCDHW"),
            preferred_element_type=jnp.float32)
        y = y + b.reshape(1, -1, 1, 1, 1)
        mean = jnp.mean(y, axis=(0, 2, 3, 4), keepdims=True)
        var = jnp.mean((y - mean) ** 2, axis=(0, 2, 3, 4), keepdims=True)
        y = (y - mean) * lax.rsqrt(var + EPS)
        y = y * gamma.reshape(1, -1, 1, 1, 1) + beta.reshape(1, -1, 1, 1, 1)
        x = jnp.maximum(y, 0.0)
    return x


# ---------------------------------------- main ----------------------------------------- #
if __name__ == "__main__":
    # ConvBlock(stages=2, in_channels=4, out_channels=8, kernel_size=3,
    #           stride=1, padding=1, upsample=False)
    stages, in_channels, out_channels = 2, 4, 8
    kernel_size, stride, padding = 3, 1, 1
    N, D, H, W = 2, 8, 8, 8

    key = jax.random.PRNGKey(0)
    params = []
    cin = in_channels
    for _ in range(stages):
        key, kw_, kb_, kg_, kbe_ = jax.random.split(key, 5)
        fan_in = cin * kernel_size ** 3
        w = jax.random.normal(
            kw_, (out_channels, cin, kernel_size, kernel_size, kernel_size),
            dtype=jnp.float32) * (1.0 / np.sqrt(fan_in))
        b = jax.random.normal(kb_, (out_channels,), dtype=jnp.float32) * 0.1
        gamma = 1.0 + 0.1 * jax.random.normal(kg_, (out_channels,), dtype=jnp.float32)
        beta = 0.1 * jax.random.normal(kbe_, (out_channels,), dtype=jnp.float32)
        params.append((w, b, gamma, beta))
        cin = out_channels

    key, kx = jax.random.split(key)
    x = jax.random.normal(kx, (N, in_channels, D, H, W), dtype=jnp.float32)

    fwd = jax.jit(functools.partial(conv_block_forward, stride=stride, padding=padding))
    ref_fwd = jax.jit(functools.partial(reference_forward, stride=stride, padding=padding))

    out = jax.block_until_ready(fwd(x, params))
    ref = jax.block_until_ready(ref_fwd(x, params))

    assert out.shape == (N, out_channels, D, H, W)
    np.testing.assert_allclose(np.asarray(out), np.asarray(ref), atol=5e-3, rtol=5e-3)

    print("KERNEL_OK")
</pallas_src>

<mosaic_0001>
module attributes {stable_mosaic.version = 11 : i64} {
  func.func @_conv_stats_kernel(%arg0: i32, %arg1: memref<512x128xbf16, #tpu.memory_space<vmem>>, %arg2: memref<128x128xbf16, #tpu.memory_space<vmem>>, %arg3: memref<512x128xf32, #tpu.memory_space<vmem>>, %arg4: memref<8x128xf32, #tpu.memory_space<vmem>>) attributes {dimension_semantics = [#tpu.dimension_semantics<parallel>], iteration_bounds = array<i64: 2>, scalar_prefetch = 0 : i64, scratch_operands = 0 : i64, tpu.core_type = #tpu.core_type<tc>, window_params = [{transform_indices = @transform_0, window_bounds = array<i64: 512, 128>}, {pipeline_mode = #tpu.pipeline_mode<synchronous>, transform_indices = @transform_1, window_bounds = array<i64: 128, 128>}, {transform_indices = @transform_2, window_bounds = array<i64: 512, 128>}, {transform_indices = @transform_3, window_bounds = array<i64: 8, 128>}]} {
    %c0 = arith.constant 0 : index
    %c0_0 = arith.constant 0 : index
    %0 = vector.load %arg1[%c0, %c0_0] : memref<512x128xbf16, #tpu.memory_space<vmem>>, vector<512x128xbf16>
    %c0_1 = arith.constant 0 : index
    %c0_2 = arith.constant 0 : index
    %1 = vector.load %arg2[%c0_1, %c0_2] : memref<128x128xbf16, #tpu.memory_space<vmem>>, vector<128x128xbf16>
    %cst = arith.constant dense<0.000000e+00> : vector<512x128xf32>
    %2 = tpu.matmul %0, %1, %cst {dimension_numbers = #tpu.dot_dimension_numbers<[1], [0], [0], [1], [0, 0, 1, 1], [], []>} : vector<512x128xbf16>, vector<128x128xbf16>, vector<512x128xf32> -> vector<512x128xf32>
    %c0_3 = arith.constant 0 : index
    %c0_4 = arith.constant 0 : index
    %3 = vector.load %arg3[%c0_3, %c0_4] : memref<512x128xf32, #tpu.memory_space<vmem>>, vector<512x128xf32>
    tpu.vector_store %arg3[%c0_3, %c0_4], %2 {strides = array<i32>} : memref<512x128xf32, #tpu.memory_space<vmem>>, vector<512x128xf32>,
    %cst_5 = arith.constant dense<0.000000e+00> : vector<128xf32>
    %4 = vector.multi_reduction <add>, %2, %cst_5 [0] : vector<512x128xf32> to vector<128xf32>
    %5 = vector.shape_cast %4 : vector<128xf32> to vector<1x128xf32>
    %6 = arith.mulf %2, %2 : vector<512x128xf32>
    %cst_6 = arith.constant dense<0.000000e+00> : vector<128xf32>
    %7 = vector.multi_reduction <add>, %6, %cst_6 [0] : vector<512x128xf32> to vector<128xf32>
    %8 = vector.shape_cast %7 : vector<128xf32> to vector<1x128xf32>
    %9 = tpu.iota {dimensions = array<i32: 0>} : vector<8x1xi32>
    %c0_i32 = arith.constant 0 : i32
    %10 = vector.broadcast %c0_i32 : i32 to vector<8x1xi32>
    %11 = arith.cmpi eq, %9, %10 : vector<8x1xi32>
    %c1_i32 = arith.constant 1 : i32
    %12 = vector.broadcast %c1_i32 : i32 to vector<8x1xi32>
    %13 = arith.cmpi eq, %9, %12 : vector<8x1xi32>
    %cst_7 = arith.constant 0.000000e+00 : f32
    %14 = vector.shape_cast %13 : vector<8x1xi1> to vector<8x1xi1>
    %15 = vector.broadcast %14 : vector<8x1xi1> to vector<8x128xi1>
    %16 = vector.shape_cast %8 : vector<1x128xf32> to vector<1x128xf32>
    %17 = vector.broadcast %16 : vector<1x128xf32> to vector<8x128xf32>
    %18 = vector.broadcast %cst_7 : f32 to vector<8x128xf32>
    %19 = arith.select %15, %17, %18 : vector<8x128xi1>, vector<8x128xf32>
    %20 = vector.shape_cast %11 : vector<8x1xi1> to vector<8x1xi1>
    %21 = vector.broadcast %20 : vector<8x1xi1> to vector<8x128xi1>
    %22 = vector.shape_cast %5 : vector<1x128xf32> to vector<1x128xf32>
    %23 = vector.broadcast %22 : vector<1x128xf32> to vector<8x128xf32>
    %24 = arith.select %21, %23, %19 : vector<8x128xi1>, vector<8x128xf32>
    %c0_8 = arith.constant 0 : index
    %c0_9 = arith.constant 0 : index
    %25 = vector.load %arg4[%c0_8, %c0_9] : memref<8x128xf32, #tpu.memory_space<vmem>>, vector<8x128xf32>
    tpu.vector_store %arg4[%c0_8, %c0_9], %24 {strides = array<i32>} : memref<8x128xf32, #tpu.memory_space<vmem>>, vector<8x128xf32>,
    return
  }
  func.func @transform_0(%arg0: i32) -> (i32, i32) {
    %c0_i32 = arith.constant 0 : i32
    %c0_i32_0 = arith.constant 0 : i32
    return %arg0, %c0_i32 : i32, i32
  }
  func.func @transform_1(%arg0: i32) -> (i32, i32) {
    %c0_i32 = arith.constant 0 : i32
    %c0_i32_0 = arith.constant 0 : i32
    %c0_i32_1 = arith.constant 0 : i32
    return %c0_i32, %c0_i32_0 : i32, i32
  }
  func.func @transform_2(%arg0: i32) -> (i32, i32) {
    %c0_i32 = arith.constant 0 : i32
    %c0_i32_0 = arith.constant 0 : i32
    return %arg0, %c0_i32 : i32, i32
  }
  func.func @transform_3(%arg0: i32) -> (i32, i32) {
    %c0_i32 = arith.constant 0 : i32
    %c0_i32_0 = arith.constant 0 : i32
    return %arg0, %c0_i32 : i32, i32
  }
}

module attributes {stable_mosaic.version = 11 : i64} {
  func.func @_bn_relu_kernel(%arg0: i32, %arg1: memref<512x128xf32, #tpu.memory_space<vmem>>, %arg2: memref<1x128xf32, #tpu.memory_space<vmem>>, %arg3: memref<1x128xf32, #tpu.memory_space<vmem>>, %arg4: memref<512x128xbf16, #tpu.memory_space<vmem>>) attributes {dimension_semantics = [#tpu.dimension_semantics<parallel>], iteration_bounds = array<i64: 2>, scalar_prefetch = 0 : i64, scratch_operands = 0 : i64, tpu.core_type = #tpu.core_type<tc>, window_params = [{transform_indices = @transform_0, window_bounds = array<i64: 512, 128>}, {pipeline_mode = #tpu.pipeline_mode<synchronous>, transform_indices = @transform_1, window_bounds = array<i64: 1, 128>}, {pipeline_mode = #tpu.pipeline_mode<synchronous>, transform_indices = @transform_2, window_bounds = array<i64: 1, 128>}, {transform_indices = @transform_3, window_bounds = array<i64: 512, 128>}]} {
    %c0 = arith.constant 0 : index
    %c0_0 = arith.constant 0 : index
    %0 = vector.load %arg1[%c0, %c0_0] : memref<512x128xf32, #tpu.memory_space<vmem>>, vector<512x128xf32>
    %c0_1 = arith.constant 0 : index
    %c0_2 = arith.constant 0 : index
    %1 = vector.load %arg2[%c0_1, %c0_2] : memref<1x128xf32, #tpu.memory_space<vmem>>, vector<1x128xf32>
    %2 = vector.broadcast %1 : vector<1x128xf32> to vector<512x128xf32>
    %3 = arith.mulf %0, %2 : vector<512x128xf32>
    %c0_3 = arith.constant 0 : index
    %c0_4 = arith.constant 0 : index
    %4 = vector.load %arg3[%c0_3, %c0_4] : memref<1x128xf32, #tpu.memory_space<vmem>>, vector<1x128xf32>
    %5 = vector.broadcast %4 : vector<1x128xf32> to vector<512x128xf32>
    %6 = arith.addf %3, %5 : vector<512x128xf32>
    %cst = arith.constant 0.000000e+00 : f32
    %7 = vector.broadcast %cst : f32 to vector<512x128xf32>
    %8 = arith.maximumf %6, %7 : vector<512x128xf32>
    %9 = arith.truncf %8 : vector<512x128xf32> to vector<512x128xbf16>
    %c0_5 = arith.constant 0 : index
    %c0_6 = arith.constant 0 : index
    %10 = vector.load %arg4[%c0_5, %c0_6] : memref<512x128xbf16, #tpu.memory_space<vmem>>, vector<512x128xbf16>
    tpu.vector_store %arg4[%c0_5, %c0_6], %9 {strides = array<i32>} : memref<512x128xbf16, #tpu.memory_space<vmem>>, vector<512x128xbf16>,
    return
  }
  func.func @transform_0(%arg0: i32) -> (i32, i32) {
    %c0_i32 = arith.constant 0 : i32
    %c0_i32_0 = arith.constant 0 : i32
    return %arg0, %c0_i32 : i32, i32
  }
  func.func @transform_1(%arg0: i32) -> (i32, i32) {
    %c0_i32 = arith.constant 0 : i32
    %c0_i32_0 = arith.constant 0 : i32
    %c0_i32_1 = arith.constant 0 : i32
    return %c0_i32, %c0_i32_0 : i32, i32
  }
  func.func @transform_2(%arg0: i32) -> (i32, i32) {
    %c0_i32 = arith.constant 0 : i32
    %c0_i32_0 = arith.constant 0 : i32
    %c0_i32_1 = arith.constant 0 : i32
    return %c0_i32, %c0_i32_0 : i32, i32
  }
  func.func @transform_3(%arg0: i32) -> (i32, i32) {
    %c0_i32 = arith.constant 0 : i32
    %c0_i32_0 = arith.constant 0 : i32
    return %arg0, %c0_i32 : i32, i32
  }
}

module attributes {stable_mosaic.version = 11 : i64} {
  func.func @_conv_stats_kernel(%arg0: i32, %arg1: memref<512x256xbf16, #tpu.memory_space<vmem>>, %arg2: memref<256x128xbf16, #tpu.memory_space<vmem>>, %arg3: memref<512x128xf32, #tpu.memory_space<vmem>>, %arg4: memref<8x128xf32, #tpu.memory_space<vmem>>) attributes {dimension_semantics = [#tpu.dimension_semantics<parallel>], iteration_bounds = array<i64: 2>, scalar_prefetch = 0 : i64, scratch_operands = 0 : i64, tpu.core_type = #tpu.core_type<tc>, window_params = [{transform_indices = @transform_0, window_bounds = array<i64: 512, 256>}, {pipeline_mode = #tpu.pipeline_mode<synchronous>, transform_indices = @transform_1, window_bounds = array<i64: 256, 128>}, {transform_indices = @transform_2, window_bounds = array<i64: 512, 128>}, {transform_indices = @transform_3, window_bounds = array<i64: 8, 128>}]} {
    %c0 = arith.constant 0 : index
    %c0_0 = arith.constant 0 : index
    %0 = vector.load %arg1[%c0, %c0_0] : memref<512x256xbf16, #tpu.memory_space<vmem>>, vector<512x256xbf16>
    %c0_1 = arith.constant 0 : index
    %c0_2 = arith.constant 0 : index
    %1 = vector.load %arg2[%c0_1, %c0_2] : memref<256x128xbf16, #tpu.memory_space<vmem>>, vector<256x128xbf16>
    %cst = arith.constant dense<0.000000e+00> : vector<512x128xf32>
    %2 = tpu.matmul %0, %1, %cst {dimension_numbers = #tpu.dot_dimension_numbers<[1], [0], [0], [1], [0, 0, 1, 1], [], []>} : vector<512x256xbf16>, vector<256x128xbf16>, vector<512x128xf32> -> vector<512x128xf32>
    %c0_3 = arith.constant 0 : index
    %c0_4 = arith.constant 0 : index
    %3 = vector.load %arg3[%c0_3, %c0_4] : memref<512x128xf32, #tpu.memory_space<vmem>>, vector<512x128xf32>
    tpu.vector_store %arg3[%c0_3, %c0_4], %2 {strides = array<i32>} : memref<512x128xf32, #tpu.memory_space<vmem>>, vector<512x128xf32>,
    %cst_5 = arith.constant dense<0.000000e+00> : vector<128xf32>
    %4 = vector.multi_reduction <add>, %2, %cst_5 [0] : vector<512x128xf32> to vector<128xf32>
    %5 = vector.shape_cast %4 : vector<128xf32> to vector<1x128xf32>
    %6 = arith.mulf %2, %2 : vector<512x128xf32>
    %cst_6 = arith.constant dense<0.000000e+00> : vector<128xf32>
    %7 = vector.multi_reduction <add>, %6, %cst_6 [0] : vector<512x128xf32> to vector<128xf32>
    %8 = vector.shape_cast %7 : vector<128xf32> to vector<1x128xf32>
    %9 = tpu.iota {dimensions = array<i32: 0>} : vector<8x1xi32>
    %c0_i32 = arith.constant 0 : i32
    %10 = vector.broadcast %c0_i32 : i32 to vector<8x1xi32>
    %11 = arith.cmpi eq, %9, %10 : vector<8x1xi32>
    %c1_i32 = arith.constant 1 : i32
    %12 = vector.broadcast %c1_i32 : i32 to vector<8x1xi32>
    %13 = arith.cmpi eq, %9, %12 : vector<8x1xi32>
    %cst_7 = arith.constant 0.000000e+00 : f32
    %14 = vector.shape_cast %13 : vector<8x1xi1> to vector<8x1xi1>
    %15 = vector.broadcast %14 : vector<8x1xi1> to vector<8x128xi1>
    %16 = vector.shape_cast %8 : vector<1x128xf32> to vector<1x128xf32>
    %17 = vector.broadcast %16 : vector<1x128xf32> to vector<8x128xf32>
    %18 = vector.broadcast %cst_7 : f32 to vector<8x128xf32>
    %19 = arith.select %15, %17, %18 : vector<8x128xi1>, vector<8x128xf32>
    %20 = vector.shape_cast %11 : vector<8x1xi1> to vector<8x1xi1>
    %21 = vector.broadcast %20 : vector<8x1xi1> to vector<8x128xi1>
    %22 = vector.shape_cast %5 : vector<1x128xf32> to vector<1x128xf32>
    %23 = vector.broadcast %22 : vector<1x128xf32> to vector<8x128xf32>
    %24 = arith.select %21, %23, %19 : vector<8x128xi1>, vector<8x128xf32>
    %c0_8 = arith.constant 0 : index
    %c0_9 = arith.constant 0 : index
    %25 = vector.load %arg4[%c0_8, %c0_9] : memref<8x128xf32, #tpu.memory_space<vmem>>, vector<8x128xf32>
    tpu.vector_store %arg4[%c0_8, %c0_9], %24 {strides = array<i32>} : memref<8x128xf32, #tpu.memory_space<vmem>>, vector<8x128xf32>,
    return
  }
  func.func @transform_0(%arg0: i32) -> (i32, i32) {
    %c0_i32 = arith.constant 0 : i32
    %c0_i32_0 = arith.constant 0 : i32
    return %arg0, %c0_i32 : i32, i32
  }
  func.func @transform_1(%arg0: i32) -> (i32, i32) {
    %c0_i32 = arith.constant 0 : i32
    %c0_i32_0 = arith.constant 0 : i32
    %c0_i32_1 = arith.constant 0 : i32
    return %c0_i32, %c0_i32_0 : i32, i32
  }
  func.func @transform_2(%arg0: i32) -> (i32, i32) {
    %c0_i32 = arith.constant 0 : i32
    %c0_i32_0 = arith.constant 0 : i32
    return %arg0, %c0_i32 : i32, i32
  }
  func.func @transform_3(%arg0: i32) -> (i32, i32) {
    %c0_i32 = arith.constant 0 : i32
    %c0_i32_0 = arith.constant 0 : i32
    return %arg0, %c0_i32 : i32, i32
  }
}

module attributes {stable_mosaic.version = 11 : i64} {
  func.func @_bn_relu_kernel(%arg0: i32, %arg1: memref<512x128xf32, #tpu.memory_space<vmem>>, %arg2: memref<1x128xf32, #tpu.memory_space<vmem>>, %arg3: memref<1x128xf32, #tpu.memory_space<vmem>>, %arg4: memref<512x128xf32, #tpu.memory_space<vmem>>) attributes {dimension_semantics = [#tpu.dimension_semantics<parallel>], iteration_bounds = array<i64: 2>, scalar_prefetch = 0 : i64, scratch_operands = 0 : i64, tpu.core_type = #tpu.core_type<tc>, window_params = [{transform_indices = @transform_0, window_bounds = array<i64: 512, 128>}, {pipeline_mode = #tpu.pipeline_mode<synchronous>, transform_indices = @transform_1, window_bounds = array<i64: 1, 128>}, {pipeline_mode = #tpu.pipeline_mode<synchronous>, transform_indices = @transform_2, window_bounds = array<i64: 1, 128>}, {transform_indices = @transform_3, window_bounds = array<i64: 512, 128>}]} {
    %c0 = arith.constant 0 : index
    %c0_0 = arith.constant 0 : index
    %0 = vector.load %arg1[%c0, %c0_0] : memref<512x128xf32, #tpu.memory_space<vmem>>, vector<512x128xf32>
    %c0_1 = arith.constant 0 : index
    %c0_2 = arith.constant 0 : index
    %1 = vector.load %arg2[%c0_1, %c0_2] : memref<1x128xf32, #tpu.memory_space<vmem>>, vector<1x128xf32>
    %2 = vector.broadcast %1 : vector<1x128xf32> to vector<512x128xf32>
    %3 = arith.mulf %0, %2 : vector<512x128xf32>
    %c0_3 = arith.constant 0 : index
    %c0_4 = arith.constant 0 : index
    %4 = vector.load %arg3[%c0_3, %c0_4] : memref<1x128xf32, #tpu.memory_space<vmem>>, vector<1x128xf32>
    %5 = vector.broadcast %4 : vector<1x128xf32> to vector<512x128xf32>
    %6 = arith.addf %3, %5 : vector<512x128xf32>
    %cst = arith.constant 0.000000e+00 : f32
    %7 = vector.broadcast %cst : f32 to vector<512x128xf32>
    %8 = arith.maximumf %6, %7 : vector<512x128xf32>
    %c0_5 = arith.constant 0 : index
    %c0_6 = arith.constant 0 : index
    %9 = vector.load %arg4[%c0_5, %c0_6] : memref<512x128xf32, #tpu.memory_space<vmem>>, vector<512x128xf32>
    tpu.vector_store %arg4[%c0_5, %c0_6], %8 {strides = array<i32>} : memref<512x128xf32, #tpu.memory_space<vmem>>, vector<512x128xf32>,
    return
  }
  func.func @transform_0(%arg0: i32) -> (i32, i32) {
    %c0_i32 = arith.constant 0 : i32
    %c0_i32_0 = arith.constant 0 : i32
    return %arg0, %c0_i32 : i32, i32
  }
  func.func @transform_1(%arg0: i32) -> (i32, i32) {
    %c0_i32 = arith.constant 0 : i32
    %c0_i32_0 = arith.constant 0 : i32
    %c0_i32_1 = arith.constant 0 : i32
    return %c0_i32, %c0_i32_0 : i32, i32
  }
  func.func @transform_2(%arg0: i32) -> (i32, i32) {
    %c0_i32 = arith.constant 0 : i32
    %c0_i32_0 = arith.constant 0 : i32
    %c0_i32_1 = arith.constant 0 : i32
    return %c0_i32, %c0_i32_0 : i32, i32
  }
  func.func @transform_3(%arg0: i32) -> (i32, i32) {
    %c0_i32 = arith.constant 0 : i32
    %c0_i32_0 = arith.constant 0 : i32
    return %arg0, %c0_i32 : i32, i32
  }
}

</mosaic_0001>

<llo_original>
// kernel: conv_block_forward.4
$region0: #{conv_block_forward.4}
  #allocation0 [shape = 'u32[]', space=smem, size = 0x4, offset = 0x4, fixed_abs, tag = 'smem constant byte address 0x4 - core index']
  #allocation1 [shape = 'u32[72,128]{1,0:T(1,128)}', space=vmem, size = 0x9000, scoped, tag = 'internal scratch']
  %s0 = inlined_call_operand.vmem [shape: bf16[1024,128], index: 0, kind: input, shape index: {}]
  %s1 = inlined_call_operand.vmem [shape: bf16[128,128], index: 1, kind: input, shape index: {}]
  %s2 = inlined_call_operand.vmem [shape: f32[1024,128], index: 2, kind: output, shape index: {0}]
  %s3 = inlined_call_operand.vmem [shape: f32[16,128], index: 3, kind: output, shape index: {1}]
  %4 = xla_tuple %s2, %s3
  %s5 = sld [smem:[#allocation0]]
  $region49: #{conv_block_forward.4} parent=0
    _
  %s7 = ssub.s32 1, %s5
  %s8 = scalar_select 0, %s7, %s5
  loop: start=0, step=1, limit=4
  $region2: #{conv_block_forward.4} parent=0 // loop_pre_header
    _
  $region3: #{conv_block_forward.4} parent=0 // loop_header
    %s10 = sphi 0, %s14
    %p11 = scmp.ge.s32.totalorder %s10, 4
    %s20 = sphi 0, %s22
    %s23 = sphi 0, %s20
    %s24 = sphi 0, %s23
    %s40 = sphi 0, %s24
    %s44 = sphi 0, %s44
    %s46 = sphi 0, %s44
    %s47 = sphi 0, %s46
    %s61 = sphi 0, %s47
    %s67 = sphi 0, %s69
    %s70 = sphi 0, %s67
    %s71 = sphi 0, %s70
    %s87 = sphi 0, %s71
    %s93 = sphi 0, %s95
    %s96 = sphi 0, %s93
    %s97 = sphi 0, %s96
    %s113 = sphi 0, %s97
  $region4: #{conv_block_forward.4} parent=0 // loop_header_branch
    %13 = sbr.rel (%p11) target = $region8
  $region5: #{conv_block_forward.4} parent=0 // loop_body
    %s15 = ssub.s32 %s10, 1
    %s16 = ssub.s32 %s10, 2
    %s17 = sadd.s32 %s10, 1
    %s18 = ssub.s32 %s10, %s17
    %p19 = scmp.eq.s32.totalorder %s18, 0
    %s21 = sadd.s32 %s20, 1
    %s22 = scalar_select %p19, %s20, %s21
    %p25 = pneg %p19
    %p26 = scmp.eq.s32.totalorder %s10, 1
    %p27 = por %p25, %p26
    %p28 = scmp.ne.s32.totalorder %s20, %s23
    %p29 = scmp.eq.s32.totalorder %s10, 0
    %p30 = por %p28, %p29
    %p31 = scmp.ne.s32.totalorder %s20, %s23
    %p32 = scmp.eq.s32.totalorder %s15, 1
    %p33 = por %p31, %p32
    %p34 = scmp.ne.s32.totalorder %s23, %s24
    %p35 = scmp.eq.s32.totalorder %s15, 0
    %p36 = por %p34, %p35
    %p37 = scmp.ne.s32.totalorder %s23, %s24
    %p38 = scmp.eq.s32.totalorder %s16, 1
    %p39 = por %p37, %p38
    %p41 = scmp.ne.s32.totalorder %s24, %s40
    %p42 = scmp.eq.s32.totalorder %s16, 0
    %p43 = por %p41, %p42
    %s45 = sadd.s32 %s44, 1
    %p48 = scmp.eq.s32.totalorder %s10, 1
    %p49 = scmp.ne.s32.totalorder %s44, %s46
    %p50 = scmp.eq.s32.totalorder %s10, 0
    %p51 = por %p49, %p50
    %p52 = scmp.ne.s32.totalorder %s44, %s46
    %p53 = scmp.eq.s32.totalorder %s15, 1
    %p54 = por %p52, %p53
    %p55 = scmp.ne.s32.totalorder %s46, %s47
    %p56 = scmp.eq.s32.totalorder %s15, 0
    %p57 = por %p55, %p56
    %p58 = scmp.ne.s32.totalorder %s46, %s47
    %p59 = scmp.eq.s32.totalorder %s16, 1
    %p60 = por %p58, %p59
    %p62 = scmp.ne.s32.totalorder %s47, %s61
    %p63 = scmp.eq.s32.totalorder %s16, 0
    %p64 = por %p62, %p63
    %s65 = ssub.s32 %s10, %s17
    %p66 = scmp.eq.s32.totalorder %s65, 0
    %s68 = sadd.s32 %s67, 1
    %s69 = scalar_select %p66, %s67, %s68
    %p72 = pneg %p66
    %p73 = scmp.eq.s32.totalorder %s10, 1
    %p74 = por %p72, %p73
    %p75 = scmp.ne.s32.totalorder %s67, %s70
    %p76 = scmp.eq.s32.totalorder %s10, 0
    %p77 = por %p75, %p76
    %p78 = scmp.ne.s32.totalorder %s67, %s70
    %p79 = scmp.eq.s32.totalorder %s15, 1
    %p80 = por %p78, %p79
    %p81 = scmp.ne.s32.totalorder %s70, %s71
    %p82 = scmp.eq.s32.totalorder %s15, 0
    %p83 = por %p81, %p82
    %p84 = scmp.ne.s32.totalorder %s70, %s71
    %p85 = scmp.eq.s32.totalorder %s16, 1
    %p86 = por %p84, %p85
    %p88 = scmp.ne.s32.totalorder %s71, %s87
    %p89 = scmp.eq.s32.totalorder %s16, 0
    %p90 = por %p88, %p89
    %s91 = ssub.s32 %s10, %s17
    %p92 = scmp.eq.s32.totalorder %s91, 0
    %s94 = sadd.s32 %s93, 1
    %s95 = scalar_select %p92, %s93, %s94
    %p98 = pneg %p92
    %p99 = scmp.eq.s32.totalorder %s10, 1
    %p100 = por %p98, %p99
    %p101 = scmp.ne.s32.totalorder %s93, %s96
    %p102 = scmp.eq.s32.totalorder %s10, 0
    %p103 = por %p101, %p102
    %p104 = scmp.ne.s32.totalorder %s93, %s96
    %p105 = scmp.eq.s32.totalorder %s15, 1
    %p106 = por %p104, %p105
    %p107 = scmp.ne.s32.totalorder %s96, %s97
    %p108 = scmp.eq.s32.totalorder %s15, 0
    %p109 = por %p107, %p108
    %p110 = scmp.ne.s32.totalorder %s96, %s97
    %p111 = scmp.eq.s32.totalorder %s16, 1
    %p112 = por %p110, %p111
    %p114 = scmp.ne.s32.totalorder %s97, %s113
    %p115 = scmp.eq.s32.totalorder %s16, 0
    %p116 = por %p114, %p115
    %p117 = scmp.le.s32.totalorder 1, %s10
    %p118 = scmp.lt.s32.totalorder %s10, 3
    %p119 = pnand %p117, %p118
    %p120 = pneg %p119
    // Predicated region
    $region9: #{conv_block_forward.4} parent=5 // pred_check
      _
    $region10: #{conv_block_forward.4} parent=5 // pred_check_branch
      %122 = sbr.rel (%p119) target = $region12
    $region11: #{conv_block_forward.4} parent=5 // pred_region
      %s123 = ssub.s32 %s10, 1
      // Predicated region
      $region13: #{conv_block_forward.4} parent=11 // pred_check
        %p124 = pneg %p57
      $region14: #{conv_block_forward.4} parent=11 // pred_check_branch
        %126 = sbr.rel (%p124) target = $region16
      $region15: #{conv_block_forward.4} parent=11 // pred_region
        _
      $region16: #{conv_block_forward.4} parent=11 // pred_fallthru
        _
    $region12: #{conv_block_forward.4} parent=5 // pred_fallthru
      _
    %p127 = scmp.lt.s32.totalorder %s10, 2
    // Predicated region
    $region17: #{conv_block_forward.4} parent=5 // pred_check
      %p128 = pneg %p127
    $region18: #{conv_block_forward.4} parent=5 // pred_check_branch
      %130 = sbr.rel (%p128) target = $region20
    $region19: #{conv_block_forward.4} parent=5 // pred_region
      // Predicated region
      $region21: #{conv_block_forward.4} parent=19 // pred_check
        %p131 = pneg %p30
      $region22: #{conv_block_forward.4} parent=19 // pred_check_branch
        %133 = sbr.rel (%p131) target = $region24
      $region23: #{conv_block_forward.4} parent=19 // pred_region
        %s134 = smul.u32 64, %s10
        %p135 = scmp.lt.s32.totalorder %s134, 127
        %s136 = scalar_select %p135, %s134, 127
        %s137 = smul.addr %s136, 4
        %s138 = scalar_lea.vmem %s0, %s137
        %s139 = smul.u32 64, %s10
      $region24: #{conv_block_forward.4} parent=19 // pred_fallthru
        _
    $region20: #{conv_block_forward.4} parent=5 // pred_fallthru
      _
    %p140 = scmp.le.s32.totalorder 1, %s10
    %p141 = scmp.lt.s32.totalorder %s10, 3
    %p142 = pnand %p140, %p141
    %p143 = pneg %p142
    // Predicated region
    $region25: #{conv_block_forward.4} parent=5 // pred_check
      _
    $region26: #{conv_block_forward.4} parent=5 // pred_check_branch
      %145 = sbr.rel (%p142) target = $region28
    $region27: #{conv_block_forward.4} parent=5 // pred_region
      %s146 = ssub.s32 %s10, 1
      %s147 = smul.u32 64, %s15
      %p148 = scmp.lt.s32.totalorder %s147, 127
      %s149 = scalar_select %p148, %s147, 127
      %s150 = smul.addr %s149, 4
      %s151 = scalar_lea.vmem %s0, %s150
      %p152 = pneg %p36
      %p153 = pneg %p33
      %p154 = pneg %p57
      %p155 = pneg %p54
      %p156 = pneg %p83
      %p157 = pneg %p80
      %s158 = smul.u32 64, %s15
      %p159 = scmp.lt.s32.totalorder %s158, 127
      %s160 = scalar_select %p159, %s158, 127
      %s161 = smul.addr %s160, 8
      %s162 = scalar_lea.vmem %s2, %s161
      %p163 = pneg %p109
      %p164 = pneg %p106
      %p165 = scmp.lt.s32.totalorder %s15, 1
      %s166 = scalar_select %p165, %s15, 1
      %s167 = smul.addr %s166, 8
      %s168 = scalar_lea.vmem %s3, %s167
      %s169 = smul.u32 64, %s15
      %p170 = scmp.lt.s32.totalorder %s169, 127
      %s171 = scalar_select %p170, %s169, 127
      %s172 = smul.addr %s171, 4
      %s173 = scalar_lea.vmem %s0, %s172
      %s174 = smul.u32 64, %s15
      %s175 = smul.u32 64, %s15
      %p176 = scmp.lt.s32.totalorder %s175, 127
      %s177 = scalar_select %p176, %s175, 127
      %s178 = smul.addr %s177, 8
      %s179 = scalar_lea.vmem %s2, %s178
      %s180 = smul.u32 64, %s15
      %p181 = scmp.lt.s32.totalorder %s15, 1
      %s182 = scalar_select %p181, %s15, 1
      %s183 = smul.addr %s182, 8
      %s184 = scalar_lea.vmem %s3, %s183
      %v185 = vld [vmem:[%s173] sm:$0xf]
      %v186 = vld [vmem:[%s173 + $0x4] sm:$0xf]
      %v187 = vld [vmem:[%s173 + $0x8] sm:$0xf]
      %v188 = vld [vmem:[%s173 + $0xc] sm:$0xf]
      %v189 = vld [vmem:[%s173 + $0x10] sm:$0xf]
      %v190 = vld [vmem:[%s173 + $0x14] sm:$0xf]
      %v191 = vld [vmem:[%s173 + $0x18] sm:$0xf]
      %v192 = vld [vmem:[%s173 + $0x1c] sm:$0xf]
      %v193 = vld [vmem:[%s173 + $0x20] sm:$0xf]
      %v194 = vld [vmem:[%s173 + $0x24] sm:$0xf]
      %v195 = vld [vmem:[%s173 + $0x28] sm:$0xf]
      %v196 = vld [vmem:[%s173 + $0x2c] sm:$0xf]
      %v197 = vld [vmem:[%s173 + $0x30] sm:$0xf]
      %v198 = vld [vmem:[%s173 + $0x34] sm:$0xf]
      %v199 = vld [vmem:[%s173 + $0x38] sm:$0xf]
      %v200 = vld [vmem:[%s173 + $0x3c] sm:$0xf]
      %v201 = vld [vmem:[%s173 + $0x40] sm:$0xf]
      %v202 = vld [vmem:[%s173 + $0x44] sm:$0xf]
      %v203 = vld [vmem:[%s173 + $0x48] sm:$0xf]
      %v204 = vld [vmem:[%s173 + $0x4c] sm:$0xf]
      %v205 = vld [vmem:[%s173 + $0x50] sm:$0xf]
      %v206 = vld [vmem:[%s173 + $0x54] sm:$0xf]
      %v207 = vld [vmem:[%s173 + $0x58] sm:$0xf]
      %v208 = vld [vmem:[%s173 + $0x5c] sm:$0xf]
      %v209 = vld [vmem:[%s173 + $0x60] sm:$0xf]
      %v210 = vld [vmem:[%s173 + $0x64] sm:$0xf]
      %v211 = vld [vmem:[%s173 + $0x68] sm:$0xf]
      %v212 = vld [vmem:[%s173 + $0x6c] sm:$0xf]
      %v213 = vld [vmem:[%s173 + $0x70] sm:$0xf]
      %v214 = vld [vmem:[%s173 + $0x74] sm:$0xf]
      %v215 = vld [vmem:[%s173 + $0x78] sm:$0xf]
      %v216 = vld [vmem:[%s173 + $0x7c] sm:$0xf]
      %v217 = vld [vmem:[%s173 + $0x80] sm:$0xf]
      %v218 = vld [vmem:[%s173 + $0x84] sm:$0xf]
      %v219 = vld [vmem:[%s173 + $0x88] sm:$0xf]
      %v220 = vld [vmem:[%s173 + $0x8c] sm:$0xf]
      %v221 = vld [vmem:[%s173 + $0x90] sm:$0xf]
      %v222 = vld [vmem:[%s173 + $0x94] sm:$0xf]
      %v223 = vld [vmem:[%s173 + $0x98] sm:$0xf]
      %v224 = vld [vmem:[%s173 + $0x9c] sm:$0xf]
      %v225 = vld [vmem:[%s173 + $0xa0] sm:$0xf]
      %v226 = vld [vmem:[%s173 + $0xa4] sm:$0xf]
      %v227 = vld [vmem:[%s173 + $0xa8] sm:$0xf]
      %v228 = vld [vmem:[%s173 + $0xac] sm:$0xf]
      %v229 = vld [vmem:[%s173 + $0xb0] sm:$0xf]
      %v230 = vld [vmem:[%s173 + $0xb4] sm:$0xf]
      %v231 = vld [vmem:[%s173 + $0xb8] sm:$0xf]
      %v232 = vld [vmem:[%s173 + $0xbc] sm:$0xf]
      %v233 = vld [vmem:[%s173 + $0xc0] sm:$0xf]
      %v234 = vld [vmem:[%s173 + $0xc4] sm:$0xf]
      %v235 = vld [vmem:[%s173 + $0xc8] sm:$0xf]
      %v236 = vld [vmem:[%s173 + $0xcc] sm:$0xf]
      %v237 = vld [vmem:[%s173 + $0xd0] sm:$0xf]
      %v238 = vld [vmem:[%s173 + $0xd4] sm:$0xf]
      %v239 = vld [vmem:[%s173 + $0xd8] sm:$0xf]
      %v240 = vld [vmem:[%s173 + $0xdc] sm:$0xf]
      %v241 = vld [vmem:[%s173 + $0xe0] sm:$0xf]
      %v242 = vld [vmem:[%s173 + $0xe4] sm:$0xf]
      %v243 = vld [vmem:[%s173 + $0xe8] sm:$0xf]
      %v244 = vld [vmem:[%s173 + $0xec] sm:$0xf]
      %v245 = vld [vmem:[%s173 + $0xf0] sm:$0xf]
      %v246 = vld [vmem:[%s173 + $0xf4] sm:$0xf]
      %v247 = vld [vmem:[%s173 + $0xf8] sm:$0xf]
      %v248 = vld [vmem:[%s173 + $0xfc] sm:$0xf]
      %v249 = vld [vmem:[%s1] sm:$0xf]
      %v250 = vld [vmem:[%s1 + $0x4] sm:$0xf]
      %v251 = vld [vmem:[%s1 + $0x8] sm:$0xf]
      %v252 = vld [vmem:[%s1 + $0xc] sm:$0xf]
      %v253 = vld [vmem:[%s1 + $0x10] sm:$0xf]
      %v254 = vld [vmem:[%s1 + $0x14] sm:$0xf]
      %v255 = vld [vmem:[%s1 + $0x18] sm:$0xf]
      %v256 = vld [vmem:[%s1 + $0x1c] sm:$0xf]
      %v257 = vld [vmem:[%s1 + $0x20] sm:$0xf]
      %v258 = vld [vmem:[%s1 + $0x24] sm:$0xf]
      %v259 = vld [vmem:[%s1 + $0x28] sm:$0xf]
      %v260 = vld [vmem:[%s1 + $0x2c] sm:$0xf]
      %v261 = vld [vmem:[%s1 + $0x30] sm:$0xf]
      %v262 = vld [vmem:[%s1 + $0x34] sm:$0xf]
      %v263 = vld [vmem:[%s1 + $0x38] sm:$0xf]
      %v264 = vld [vmem:[%s1 + $0x3c] sm:$0xf]
      %v329 = vunpack.c.l.b16 %v185
      %v330 = vunpack.c.l.b16 %v186
      %v331 = vunpack.c.l.b16 %v187
      %v332 = vunpack.c.l.b16 %v188
      %v333 = vunpack.c.l.b16 %v189
      %v334 = vunpack.c.l.b16 %v190
      %v335 = vunpack.c.l.b16 %v191
      %v336 = vunpack.c.l.b16 %v192
      %v337 = vunpack.c.l.b16 %v193
      %v338 = vunpack.c.l.b16 %v194
      %v339 = vunpack.c.l.b16 %v195
      %v340 = vunpack.c.l.b16 %v196
      %v341 = vunpack.c.l.b16 %v197
      %v342 = vunpack.c.l.b16 %v198
      %v343 = vunpack.c.l.b16 %v199
      %v344 = vunpack.c.l.b16 %v200
      %v345 = vunpack.c.l.b16 %v201
      %v346 = vunpack.c.l.b16 %v202
      %v347 = vunpack.c.l.b16 %v203
      %v348 = vunpack.c.l.b16 %v204
      %v349 = vunpack.c.l.b16 %v205
      %v350 = vunpack.c.l.b16 %v206
      %v351 = vunpack.c.l.b16 %v207
      %v352 = vunpack.c.l.b16 %v208
      %v353 = vunpack.c.l.b16 %v209
      %v354 = vunpack.c.l.b16 %v210
      %v355 = vunpack.c.l.b16 %v211
      %v356 = vunpack.c.l.b16 %v212
      %v357 = vunpack.c.l.b16 %v213
      %v358 = vunpack.c.l.b16 %v214
      %v359 = vunpack.c.l.b16 %v215
      %v360 = vunpack.c.l.b16 %v216
      %v361 = vunpack.c.l.b16 %v217
      %v362 = vunpack.c.l.b16 %v218
      %v363 = vunpack.c.l.b16 %v219
      %v364 = vunpack.c.l.b16 %v220
      %v365 = vunpack.c.l.b16 %v221
      %v366 = vunpack.c.l.b16 %v222
      %v367 = vunpack.c.l.b16 %v223
      %v368 = vunpack.c.l.b16 %v224
      %v369 = vunpack.c.l.b16 %v225
      %v370 = vunpack.c.l.b16 %v226
      %v371 = vunpack.c.l.b16 %v227
      %v372 = vunpack.c.l.b16 %v228
      %v373 = vunpack.c.l.b16 %v229
      %v374 = vunpack.c.l.b16 %v230
      %v375 = vunpack.c.l.b16 %v231
      %v376 = vunpack.c.l.b16 %v232
      %v377 = vunpack.c.l.b16 %v233
      %v378 = vunpack.c.l.b16 %v234
      %v379 = vunpack.c.l.b16 %v235
      %v380 = vunpack.c.l.b16 %v236
      %v381 = vunpack.c.l.b16 %v237
      %v382 = vunpack.c.l.b16 %v238
      %v383 = vunpack.c.l.b16 %v239
      %v384 = vunpack.c.l.b16 %v240
      %v385 = vunpack.c.l.b16 %v241
      %v386 = vunpack.c.l.b16 %v242
      %v387 = vunpack.c.l.b16 %v243
      %v388 = vunpack.c.l.b16 %v244
      %v389 = vunpack.c.l.b16 %v245
      %v390 = vunpack.c.l.b16 %v246
      %v391 = vunpack.c.l.b16 %v247
      %v392 = vunpack.c.l.b16 %v248
      %v393 = vpack.c.b16 %v330, %v329
      %v394 = vpack.c.b16 %v332, %v331
      %v395 = vpack.c.b16 %v334, %v333
      %v396 = vpack.c.b16 %v336, %v335
      %v397 = vpack.c.b16 %v338, %v337
      %v398 = vpack.c.b16 %v340, %v339
      %v399 = vpack.c.b16 %v342, %v341
      %v400 = vpack.c.b16 %v344, %v343
      %v401 = vpack.c.b16 %v346, %v345
      %v402 = vpack.c.b16 %v348, %v347
      %v403 = vpack.c.b16 %v350, %v349
      %v404 = vpack.c.b16 %v352, %v351
      %v405 = vpack.c.b16 %v354, %v353
      %v406 = vpack.c.b16 %v356, %v355
      %v407 = vpack.c.b16 %v358, %v357
      %v408 = vpack.c.b16 %v360, %v359
      %v409 = vpack.c.b16 %v362, %v361
      %v410 = vpack.c.b16 %v364, %v363
      %v411 = vpack.c.b16 %v366, %v365
      %v412 = vpack.c.b16 %v368, %v367
      %v413 = vpack.c.b16 %v370, %v369
      %v414 = vpack.c.b16 %v372, %v371
      %v415 = vpack.c.b16 %v374, %v373
      %v416 = vpack.c.b16 %v376, %v375
      %v417 = vpack.c.b16 %v378, %v377
      %v418 = vpack.c.b16 %v380, %v379
      %v419 = vpack.c.b16 %v382, %v381
      %v420 = vpack.c.b16 %v384, %v383
      %v421 = vpack.c.b16 %v386, %v385
      %v422 = vpack.c.b16 %v388, %v387
      %v423 = vpack.c.b16 %v390, %v389
      %v424 = vpack.c.b16 %v392, %v391
      %v473 = vunpack.c.l.b16 %v249
      %v474 = vunpack.c.l.b16 %v250
      %v475 = vunpack.c.l.b16 %v251
      %v476 = vunpack.c.l.b16 %v252
      %v477 = vunpack.c.l.b16 %v253
      %v478 = vunpack.c.l.b16 %v254
      %v479 = vunpack.c.l.b16 %v255
      %v480 = vunpack.c.l.b16 %v256
      %v481 = vunpack.c.l.b16 %v257
      %v482 = vunpack.c.l.b16 %v258
      %v483 = vunpack.c.l.b16 %v259
      %v484 = vunpack.c.l.b16 %v260
      %v485 = vunpack.c.l.b16 %v261
      %v486 = vunpack.c.l.b16 %v262
      %v487 = vunpack.c.l.b16 %v263
      %v488 = vunpack.c.l.b16 %v264
      %v489 = vpack.c.b16 %v474, %v473
      %v490 = vpack.c.b16 %v476, %v475
      %v491 = vpack.c.b16 %v478, %v477
      %v492 = vpack.c.b16 %v480, %v479
      %v493 = vpack.c.b16 %v482, %v481
      %v494 = vpack.c.b16 %v484, %v483
      %v495 = vpack.c.b16 %v486, %v485
      %v496 = vpack.c.b16 %v488, %v487
      %505 = vmatpush.bf16.msra.mxu0 %v496
      %506 = vmatpush.bf16.msra.mxu0 %v495
      %507 = vmatpush.bf16.msra.mxu0 %v494
      %508 = vmatpush.bf16.msra.mxu0 %v493
      %509 = vmatpush.bf16.msra.mxu0 %v492
      %510 = vmatpush.bf16.msra.mxu0 %v491
      %511 = vmatpush.bf16.msra.mxu0 %v490
      %512 = vmatpush.bf16.msra.mxu0 %v489
      %513 = vmatmul.bf16.gmra.mxu0 %v393
      %v514 = vpop.f32.mrf.mxu0
      %v515 = vadd.f32 0.0, %v514
      %v516 = vpop.f32.mrf.mxu0
      %v517 = vadd.f32 0.0, %v516
      %518 = vmatmul.bf16.gmra.mxu0 %v394
      %v519 = vpop.f32.mrf.mxu0
      %v520 = vadd.f32 0.0, %v519
      %v521 = vpop.f32.mrf.mxu0
      %v522 = vadd.f32 0.0, %v521
      %523 = vmatmul.bf16.gmra.mxu0 %v395
      %v524 = vpop.f32.mrf.mxu0
      %v525 = vadd.f32 0.0, %v524
      %v526 = vpop.f32.mrf.mxu0
      %v527 = vadd.f32 0.0, %v526
      %528 = vmatmul.bf16.gmra.mxu0 %v396
      %v529 = vpop.f32.mrf.mxu0
      %v530 = vadd.f32 0.0, %v529
      %v531 = vpop.f32.mrf.mxu0
      %v532 = vadd.f32 0.0, %v531
      %533 = vmatmul.bf16.gmra.mxu0 %v397
      %v534 = vpop.f32.mrf.mxu0
      %v535 = vadd.f32 0.0, %v534
      %v536 = vpop.f32.mrf.mxu0
      %v537 = vadd.f32 0.0, %v536
      %538 = vmatmul.bf16.gmra.mxu0 %v398
      %v539 = vpop.f32.mrf.mxu0
      %v540 = vadd.f32 0.0, %v539
      %v541 = vpop.f32.mrf.mxu0
      %v542 = vadd.f32 0.0, %v541
      %543 = vmatmul.bf16.gmra.mxu0 %v399
      %v544 = vpop.f32.mrf.mxu0
      %v545 = vadd.f32 0.0, %v544
      %v546 = vpop.f32.mrf.mxu0
      %v547 = vadd.f32 0.0, %v546
      %548 = vmatmul.bf16.gmra.mxu0 %v400
      %v549 = vpop.f32.mrf.mxu0
      %v550 = vadd.f32 0.0, %v549
      %v551 = vpop.f32.mrf.mxu0
      %v552 = vadd.f32 0.0, %v551
      %553 = vmatmul.bf16.gmra.mxu0 %v401
      %v554 = vpop.f32.mrf.mxu0
      %v555 = vadd.f32 0.0, %v554
      %v556 = vpop.f32.mrf.mxu0
      %v557 = vadd.f32 0.0, %v556
      %558 = vmatmul.bf16.gmra.mxu0 %v402
      %v559 = vpop.f32.mrf.mxu0
      %v560 = vadd.f32 0.0, %v559
      %v561 = vpop.f32.mrf.mxu0
      %v562 = vadd.f32 0.0, %v561
      %563 = vmatmul.bf16.gmra.mxu0 %v403
      %v564 = vpop.f32.mrf.mxu0
      %v565 = vadd.f32 0.0, %v564
      %v566 = vpop.f32.mrf.mxu0
      %v567 = vadd.f32 0.0, %v566
      %568 = vmatmul.bf16.gmra.mxu0 %v404
      %v569 = vpop.f32.mrf.mxu0
      %v570 = vadd.f32 0.0, %v569
      %v571 = vpop.f32.mrf.mxu0
      %v572 = vadd.f32 0.0, %v571
      %573 = vmatmul.bf16.gmra.mxu0 %v405
      %v574 = vpop.f32.mrf.mxu0
      %v575 = vadd.f32 0.0, %v574
      %v576 = vpop.f32.mrf.mxu0
      %v577 = vadd.f32 0.0, %v576
      %578 = vmatmul.bf16.gmra.mxu0 %v406
      %v579 = vpop.f32.mrf.mxu0
      %v580 = vadd.f32 0.0, %v579
      %v581 = vpop.f32.mrf.mxu0
      %v582 = vadd.f32 0.0, %v581
      %583 = vmatmul.bf16.gmra.mxu0 %v407
      %v584 = vpop.f32.mrf.mxu0
      %v585 = vadd.f32 0.0, %v584
      %v586 = vpop.f32.mrf.mxu0
      %v587 = vadd.f32 0.0, %v586
      %588 = vmatmul.bf16.gmra.mxu0 %v408
      %v589 = vpop.f32.mrf.mxu0
      %v590 = vadd.f32 0.0, %v589
      %v591 = vpop.f32.mrf.mxu0
      %v592 = vadd.f32 0.0, %v591
      %593 = vmatmul.bf16.gmra.mxu0 %v409
      %v594 = vpop.f32.mrf.mxu0
      %v595 = vadd.f32 0.0, %v594
      %v596 = vpop.f32.mrf.mxu0
      %v597 = vadd.f32 0.0, %v596
      %598 = vmatmul.bf16.gmra.mxu0 %v410
      %v599 = vpop.f32.mrf.mxu0
      %v600 = vadd.f32 0.0, %v599
      %v601 = vpop.f32.mrf.mxu0
      %v602 = vadd.f32 0.0, %v601
      %603 = vmatmul.bf16.gmra.mxu0 %v411
      %v604 = vpop.f32.mrf.mxu0
      %v605 = vadd.f32 0.0, %v604
      %v606 = vpop.f32.mrf.mxu0
      %v607 = vadd.f32 0.0, %v606
      %608 = vmatmul.bf16.gmra.mxu0 %v412
      %v609 = vpop.f32.mrf.mxu0
      %v610 = vadd.f32 0.0, %v609
      %v611 = vpop.f32.mrf.mxu0
      %v612 = vadd.f32 0.0, %v611
      %613 = vmatmul.bf16.gmra.mxu0 %v413
      %v614 = vpop.f32.mrf.mxu0
      %v615 = vadd.f32 0.0, %v614
      %v616 = vpop.f32.mrf.mxu0
      %v617 = vadd.f32 0.0, %v616
      %618 = vmatmul.bf16.gmra.mxu0 %v414
      %v619 = vpop.f32.mrf.mxu0
      %v620 = vadd.f32 0.0, %v619
      %v621 = vpop.f32.mrf.mxu0
      %v622 = vadd.f32 0.0, %v621
      %623 = vmatmul.bf16.gmra.mxu0 %v415
      %v624 = vpop.f32.mrf.mxu0
      %v625 = vadd.f32 0.0, %v624
      %v626 = vpop.f32.mrf.mxu0
      %v627 = vadd.f32 0.0, %v626
      %628 = vmatmul.bf16.gmra.mxu0 %v416
      %v629 = vpop.f32.mrf.mxu0
      %v630 = vadd.f32 0.0, %v629
      %v631 = vpop.f32.mrf.mxu0
      %v632 = vadd.f32 0.0, %v631
      %633 = vmatmul.bf16.gmra.mxu0 %v417
      %v634 = vpop.f32.mrf.mxu0
      %v635 = vadd.f32 0.0, %v634
      %v636 = vpop.f32.mrf.mxu0
      %v637 = vadd.f32 0.0, %v636
      %638 = vmatmul.bf16.gmra.mxu0 %v418
      %v639 = vpop.f32.mrf.mxu0
      %v640 = vadd.f32 0.0, %v639
      %v641 = vpop.f32.mrf.mxu0
      %v642 = vadd.f32 0.0, %v641
      %643 = vmatmul.bf16.gmra.mxu0 %v419
      %v644 = vpop.f32.mrf.mxu0
      %v645 = vadd.f32 0.0, %v644
      %v646 = vpop.f32.mrf.mxu0
      %v647 = vadd.f32 0.0, %v646
      %648 = vmatmul.bf16.gmra.mxu0 %v420
      %v649 = vpop.f32.mrf.mxu0
      %v650 = vadd.f32 0.0, %v649
      %v651 = vpop.f32.mrf.mxu0
      %v652 = vadd.f32 0.0, %v651
      %653 = vmatmul.bf16.gmra.mxu0 %v421
      %v654 = vpop.f32.mrf.mxu0
      %v655 = vadd.f32 0.0, %v654
      %v656 = vpop.f32.mrf.mxu0
      %v657 = vadd.f32 0.0, %v656
      %658 = vmatmul.bf16.gmra.mxu0 %v422
      %v659 = vpop.f32.mrf.mxu0
      %v660 = vadd.f32 0.0, %v659
      %v661 = vpop.f32.mrf.mxu0
      %v662 = vadd.f32 0.0, %v661
      %663 = vmatmul.bf16.gmra.mxu0 %v423
      %v664 = vpop.f32.mrf.mxu0
      %v665 = vadd.f32 0.0, %v664
      %v666 = vpop.f32.mrf.mxu0
      %v667 = vadd.f32 0.0, %v666
      %668 = vmatmul.bf16.gmra.mxu0 %v424
      %v669 = vpop.f32.mrf.mxu0
      %v670 = vadd.f32 0.0, %v669
      %v671 = vpop.f32.mrf.mxu0
      %v672 = vadd.f32 0.0, %v671
      %673 = vdwg.mxu0
      %674 = vst [vmem:[%s179] sm:$0xff] %v515
      %675 = vst [vmem:[%s179 + $0x8] sm:$0xff] %v517
      %676 = vst [vmem:[%s179 + $0x10] sm:$0xff] %v520
      %677 = vst [vmem:[%s179 + $0x18] sm:$0xff] %v522
      %678 = vst [vmem:[%s179 + $0x20] sm:$0xff] %v525
      %679 = vst [vmem:[%s179 + $0x28] sm:$0xff] %v527
      %680 = vst [vmem:[%s179 + $0x30] sm:$0xff] %v530
      %681 = vst [vmem:[%s179 + $0x38] sm:$0xff] %v532
      %682 = vst [vmem:[%s179 + $0x40] sm:$0xff] %v535
      %683 = vst [vmem:[%s179 + $0x48] sm:$0xff] %v537
      %684 = vst [vmem:[%s179 + $0x50] sm:$0xff] %v540
      %685 = vst [vmem:[%s179 + $0x58] sm:$0xff] %v542
      %686 = vst [vmem:[%s179 + $0x60] sm:$0xff] %v545
      %687 = vst [vmem:[%s179 + $0x68] sm:$0xff] %v547
      %688 = vst [vmem:[%s179 + $0x70] sm:$0xff] %v550
      %689 = vst [vmem:[%s179 + $0x78] sm:$0xff] %v552
      %690 = vst [vmem:[%s179 + $0x80] sm:$0xff] %v555
      %691 = vst [vmem:[%s179 + $0x88] sm:$0xff] %v557
      %692 = vst [vmem:[%s179 + $0x90] sm:$0xff] %v560
      %693 = vst [vmem:[%s179 + $0x98] sm:$0xff] %v562
      %694 = vst [vmem:[%s179 + $0xa0] sm:$0xff] %v565
      %695 = vst [vmem:[%s179 + $0xa8] sm:$0xff] %v567
      %696 = vst [vmem:[%s179 + $0xb0] sm:$0xff] %v570
      %697 = vst [vmem:[%s179 + $0xb8] sm:$0xff] %v572
      %698 = vst [vmem:[%s179 + $0xc0] sm:$0xff] %v575
      %699 = vst [vmem:[%s179 + $0xc8] sm:$0xff] %v577
      %700 = vst [vmem:[%s179 + $0xd0] sm:$0xff] %v580
      %701 = vst [vmem:[%s179 + $0xd8] sm:$0xff] %v582
      %702 = vst [vmem:[%s179 + $0xe0] sm:$0xff] %v585
      %703 = vst [vmem:[%s179 + $0xe8] sm:$0xff] %v587
      %704 = vst [vmem:[%s179 + $0xf0] sm:$0xff] %v590
      %705 = vst [vmem:[%s179 + $0xf8] sm:$0xff] %v592
      %706 = vst [vmem:[%s179 + $0x100] sm:$0xff] %v595
      %707 = vst [vmem:[%s179 + $0x108] sm:$0xff] %v597
      %708 = vst [vmem:[%s179 + $0x110] sm:$0xff] %v600
      %709 = vst [vmem:[%s179 + $0x118] sm:$0xff] %v602
      %710 = vst [vmem:[%s179 + $0x120] sm:$0xff] %v605
      %711 = vst [vmem:[%s179 + $0x128] sm:$0xff] %v607
      %712 = vst [vmem:[%s179 + $0x130] sm:$0xff] %v610
      %713 = vst [vmem:[%s179 + $0x138] sm:$0xff] %v612
      %714 = vst [vmem:[%s179 + $0x140] sm:$0xff] %v615
      %715 = vst [vmem:[%s179 + $0x148] sm:$0xff] %v617
      %716 = vst [vmem:[%s179 + $0x150] sm:$0xff] %v620
      %717 = vst [vmem:[%s179 + $0x158] sm:$0xff] %v622
      %718 = vst [vmem:[%s179 + $0x160] sm:$0xff] %v625
      %719 = vst [vmem:[%s179 + $0x168] sm:$0xff] %v627
      %720 = vst [vmem:[%s179 + $0x170] sm:$0xff] %v630
      %721 = vst [vmem:[%s179 + $0x178] sm:$0xff] %v632
      %722 = vst [vmem:[%s179 + $0x180] sm:$0xff] %v635
      %723 = vst [vmem:[%s179 + $0x188] sm:$0xff] %v637
      %724 = vst [vmem:[%s179 + $0x190] sm:$0xff] %v640
      %725 = vst [vmem:[%s179 + $0x198] sm:$0xff] %v642
      %726 = vst [vmem:[%s179 + $0x1a0] sm:$0xff] %v645
      %727 = vst [vmem:[%s179 + $0x1a8] sm:$0xff] %v647
      %728 = vst [vmem:[%s179 + $0x1b0] sm:$0xff] %v650
      %729 = vst [vmem:[%s179 + $0x1b8] sm:$0xff] %v652
      %730 = vst [vmem:[%s179 + $0x1c0] sm:$0xff] %v655
      %731 = vst [vmem:[%s179 + $0x1c8] sm:$0xff] %v657
      %732 = vst [vmem:[%s179 + $0x1d0] sm:$0xff] %v660
      %733 = vst [vmem:[%s179 + $0x1d8] sm:$0xff] %v662
      %734 = vst [vmem:[%s179 + $0x1e0] sm:$0xff] %v665
      %735 = vst [vmem:[%s179 + $0x1e8] sm:$0xff] %v667
      %736 = vst [vmem:[%s179 + $0x1f0] sm:$0xff] %v670
      %737 = vst [vmem:[%s179 + $0x1f8] sm:$0xff] %v672
      %v738 = vadd.f32 %v515, %v517
      %v739 = vadd.f32 %v738, %v520
      %v740 = vadd.f32 %v739, %v522
      %v741 = vadd.f32 %v740, %v525
      %v742 = vadd.f32 %v741, %v527
      %v743 = vadd.f32 %v742, %v530
      %v744 = vadd.f32 %v743, %v532
      %v745 = vadd.f32 %v744, %v535
      %v746 = vadd.f32 %v745, %v537
      %v747 = vadd.f32 %v746, %v540
      %v748 = vadd.f32 %v747, %v542
      %v749 = vadd.f32 %v748, %v545
      %v750 = vadd.f32 %v749, %v547
      %v751 = vadd.f32 %v750, %v550
      %v752 = vadd.f32 %v751, %v552
      %v753 = vadd.f32 %v752, %v555
      %v754 = vadd.f32 %v753, %v557
      %v755 = vadd.f32 %v754, %v560
      %v756 = vadd.f32 %v755, %v562
      %v757 = vadd.f32 %v756, %v565
      %v758 = vadd.f32 %v757, %v567
      %v759 = vadd.f32 %v758, %v570
      %v760 = vadd.f32 %v759, %v572
      %v761 = vadd.f32 %v760, %v575
      %v762 = vadd.f32 %v761, %v577
      %v763 = vadd.f32 %v762, %v580
      %v764 = vadd.f32 %v763, %v582
      %v765 = vadd.f32 %v764, %v585
      %v766 = vadd.f32 %v765, %v587
      %v767 = vadd.f32 %v766, %v590
      %v768 = vadd.f32 %v767, %v592
      %v769 = vadd.f32 %v768, %v595
      %v770 = vadd.f32 %v769, %v597
      %v771 = vadd.f32 %v770, %v600
      %v772 = vadd.f32 %v771, %v602
      %v773 = vadd.f32 %v772, %v605
      %v774 = vadd.f32 %v773, %v607
      %v775 = vadd.f32 %v774, %v610
      %v776 = vadd.f32 %v775, %v612
      %v777 = vadd.f32 %v776, %v615
      %v778 = vadd.f32 %v777, %v617
      %v779 = vadd.f32 %v778, %v620
      %v780 = vadd.f32 %v779, %v622
      %v781 = vadd.f32 %v780, %v625
      %v782 = vadd.f32 %v781, %v627
      %v783 = vadd.f32 %v782, %v630
      %v784 = vadd.f32 %v783, %v632
      %v785 = vadd.f32 %v784, %v635
      %v786 = vadd.f32 %v785, %v637
      %v787 = vadd.f32 %v786, %v640
      %v788 = vadd.f32 %v787, %v642
      %v789 = vadd.f32 %v788, %v645
      %v790 = vadd.f32 %v789, %v647
      %v791 = vadd.f32 %v790, %v650
      %v792 = vadd.f32 %v791, %v652
      %v793 = vadd.f32 %v792, %v655
      %v794 = vadd.f32 %v793, %v657
      %v795 = vadd.f32 %v794, %v660
      %v796 = vadd.f32 %v795, %v662
      %v797 = vadd.f32 %v796, %v665
      %v798 = vadd.f32 %v797, %v667
      %v799 = vadd.f32 %v798, %v670
      %v800 = vadd.f32 %v799, %v672
      %v801 = vrot.slane %v800, 4
      %v802 = vadd.f32 %v800, %v801
      %v803 = vrot.slane %v802, 2
      %v804 = vadd.f32 %v802, %v803
      %v805 = vrot.slane %v804, 1
      %v806 = vadd.f32 %v804, %v805
      %v807 = vmul.f32 %v515, %v515
      %v808 = vmul.f32 %v517, %v517
      %v809 = vmul.f32 %v520, %v520
      %v810 = vmul.f32 %v522, %v522
      %v811 = vmul.f32 %v525, %v525
      %v812 = vmul.f32 %v527, %v527
      %v813 = vmul.f32 %v530, %v530
      %v814 = vmul.f32 %v532, %v532
      %v815 = vmul.f32 %v535, %v535
      %v816 = vmul.f32 %v537, %v537
      %v817 = vmul.f32 %v540, %v540
      %v818 = vmul.f32 %v542, %v542
      %v819 = vmul.f32 %v545, %v545
      %v820 = vmul.f32 %v547, %v547
      %v821 = vmul.f32 %v550, %v550
      %v822 = vmul.f32 %v552, %v552
      %v823 = vmul.f32 %v555, %v555
      %v824 = vmul.f32 %v557, %v557
      %v825 = vmul.f32 %v560, %v560
      %v826 = vmul.f32 %v562, %v562
      %v827 = vmul.f32 %v565, %v565
      %v828 = vmul.f32 %v567, %v567
      %v829 = vmul.f32 %v570, %v570
      %v830 = vmul.f32 %v572, %v572
      %v831 = vmul.f32 %v575, %v575
      %v832 = vmul.f32 %v577, %v577
      %v833 = vmul.f32 %v580, %v580
      %v834 = vmul.f32 %v582, %v582
      %v835 = vmul.f32 %v585, %v585
      %v836 = vmul.f32 %v587, %v587
      %v837 = vmul.f32 %v590, %v590
      %v838 = vmul.f32 %v592, %v592
      %v839 = vmul.f32 %v595, %v595
      %v840 = vmul.f32 %v597, %v597
      %v841 = vmul.f32 %v600, %v600
      %v842 = vmul.f32 %v602, %v602
      %v843 = vmul.f32 %v605, %v605
      %v844 = vmul.f32 %v607, %v607
      %v845 = vmul.f32 %v610, %v610
      %v846 = vmul.f32 %v612, %v612
      %v847 = vmul.f32 %v615, %v615
      %v848 = vmul.f32 %v617, %v617
      %v849 = vmul.f32 %v620, %v620
      %v850 = vmul.f32 %v622, %v622
      %v851 = vmul.f32 %v625, %v625
      %v852 = vmul.f32 %v627, %v627
      %v853 = vmul.f32 %v630, %v630
      %v854 = vmul.f32 %v632, %v632
      %v855 = vmul.f32 %v635, %v635
      %v856 = vmul.f32 %v637, %v637
      %v857 = vmul.f32 %v640, %v640
      %v858 = vmul.f32 %v642, %v642
      %v859 = vmul.f32 %v645, %v645
      %v860 = vmul.f32 %v647, %v647
      %v861 = vmul.f32 %v650, %v650
      %v862 = vmul.f32 %v652, %v652
      %v863 = vmul.f32 %v655, %v655
      %v864 = vmul.f32 %v657, %v657
      %v865 = vmul.f32 %v660, %v660
      %v866 = vmul.f32 %v662, %v662
      %v867 = vmul.f32 %v665, %v665
      %v868 = vmul.f32 %v667, %v667
      %v869 = vmul.f32 %v670, %v670
      %v870 = vmul.f32 %v672, %v672
      %v871 = vadd.f32 %v807, %v808
      %v872 = vadd.f32 %v871, %v809
      %v873 = vadd.f32 %v872, %v810
      %v874 = vadd.f32 %v873, %v811
      %v875 = vadd.f32 %v874, %v812
      %v876 = vadd.f32 %v875, %v813
      %v877 = vadd.f32 %v876, %v814
      %v878 = vadd.f32 %v877, %v815
      %v879 = vadd.f32 %v878, %v816
      %v880 = vadd.f32 %v879, %v817
      %v881 = vadd.f32 %v880, %v818
      %v882 = vadd.f32 %v881, %v819
      %v883 = vadd.f32 %v882, %v820
      %v884 = vadd.f32 %v883, %v821
      %v885 = vadd.f32 %v884, %v822
      %v886 = vadd.f32 %v885, %v823
      %v887 = vadd.f32 %v886, %v824
      %v888 = vadd.f32 %v887, %v825
      %v889 = vadd.f32 %v888, %v826
      %v890 = vadd.f32 %v889, %v827
      %v891 = vadd.f32 %v890, %v828
      %v892 = vadd.f32 %v891, %v829
      %v893 = vadd.f32 %v892, %v830
      %v894 = vadd.f32 %v893, %v831
      %v895 = vadd.f32 %v894, %v832
      %v896 = vadd.f32 %v895, %v833
      %v897 = vadd.f32 %v896, %v834
      %v898 = vadd.f32 %v897, %v835
      %v899 = vadd.f32 %v898, %v836
      %v900 = vadd.f32 %v899, %v837
      %v901 = vadd.f32 %v900, %v838
      %v902 = vadd.f32 %v901, %v839
      %v903 = vadd.f32 %v902, %v840
      %v904 = vadd.f32 %v903, %v841
      %v905 = vadd.f32 %v904, %v842
      %v906 = vadd.f32 %v905, %v843
      %v907 = vadd.f32 %v906, %v844
      %v908 = vadd.f32 %v907, %v845
      %v909 = vadd.f32 %v908, %v846
      %v910 = vadd.f32 %v909, %v847
      %v911 = vadd.f32 %v910, %v848
      %v912 = vadd.f32 %v911, %v849
      %v913 = vadd.f32 %v912, %v850
      %v914 = vadd.f32 %v913, %v851
      %v915 = vadd.f32 %v914, %v852
      %v916 = vadd.f32 %v915, %v853
      %v917 = vadd.f32 %v916, %v854
      %v918 = vadd.f32 %v917, %v855
      %v919 = vadd.f32 %v918, %v856
      %v920 = vadd.f32 %v919, %v857
      %v921 = vadd.f32 %v920, %v858
      %v922 = vadd.f32 %v921, %v859
      %v923 = vadd.f32 %v922, %v860
      %v924 = vadd.f32 %v923, %v861
      %v925 = vadd.f32 %v924, %v862
      %v926 = vadd.f32 %v925, %v863
      %v927 = vadd.f32 %v926, %v864
      %v928 = vadd.f32 %v927, %v865
      %v929 = vadd.f32 %v928, %v866
      %v930 = vadd.f32 %v929, %v867
      %v931 = vadd.f32 %v930, %v868
      %v932 = vadd.f32 %v931, %v869
      %v933 = vadd.f32 %v932, %v870
      %v934 = vrot.slane %v933, 4
      %v935 = vadd.f32 %v933, %v934
      %v936 = vrot.slane %v935, 2
      %v937 = vadd.f32 %v935, %v936
      %v938 = vrot.slane %v937, 1
      %v939 = vadd.f32 %v937, %v938
      %v940 = vlaneseq
      %v941 = vshrl.u32 %v940, 7
      %vm942 = vcmp.eq.s32.totalorder %v941, 0
      %vm943 = vcmp.eq.s32.totalorder %v941, 1
      %v944 = vsel %vm943, 1, 0
      %vm945 = vcmp.eq.s32.totalorder %v944, 1
      %v946 = vsel %vm945, %v939, 0.0
      %v947 = vsel %vm942, 1, 0
      %vm948 = vcmp.eq.s32.totalorder %v947, 1
      %v949 = vsel %vm948, %v806, %v946
      %950 = vst [vmem:[%s184] sm:$0xff] %v949
      %s951 = smul.u32 64, %s15
      %p952 = scmp.lt.s32.totalorder %s951, 127
      %s953 = scalar_select %p952, %s951, 127
      %s954 = smul.addr %s953, 8
      %s955 = scalar_lea.vmem %s2, %s954
      %p956 = scmp.lt.s32.totalorder %s15, 1
      %s957 = scalar_select %p956, %s15, 1
      %s958 = smul.addr %s957, 8
      %s959 = scalar_lea.vmem %s3, %s958
      // Predicated region
      $region29: #{conv_block_forward.4} parent=27 // pred_check
        %p960 = pneg %p80
      $region30: #{conv_block_forward.4} parent=27 // pred_check_branch
        %962 = sbr.rel (%p960) target = $region32
      $region31: #{conv_block_forward.4} parent=27 // pred_region
        %s963 = smul.u32 64, %s15
      $region32: #{conv_block_forward.4} parent=27 // pred_fallthru
        _
      // Predicated region
      $region33: #{conv_block_forward.4} parent=27 // pred_check
        %p964 = pneg %p106
      $region34: #{conv_block_forward.4} parent=27 // pred_check_branch
        %966 = sbr.rel (%p964) target = $region36
      $region35: #{conv_block_forward.4} parent=27 // pred_region
        _
      $region36: #{conv_block_forward.4} parent=27 // pred_fallthru
        _
    $region28: #{conv_block_forward.4} parent=5 // pred_fallthru
      _
    %p967 = scmp.le.s32.totalorder 2, %s10
    // Predicated region
    $region37: #{conv_block_forward.4} parent=5 // pred_check
      %p968 = pneg %p967
    $region38: #{conv_block_forward.4} parent=5 // pred_check_branch
      %970 = sbr.rel (%p968) target = $region40
    $region39: #{conv_block_forward.4} parent=5 // pred_region
      %s971 = ssub.s32 %s10, 2
      // Predicated region
      $region41: #{conv_block_forward.4} parent=39 // pred_check
        %p972 = pneg %p86
      $region42: #{conv_block_forward.4} parent=39 // pred_check_branch
        %974 = sbr.rel (%p972) target = $region44
      $region43: #{conv_block_forward.4} parent=39 // pred_region
        %s975 = smul.u32 64, %s16
        %p976 = scmp.lt.s32.totalorder %s975, 127
        %s977 = scalar_select %p976, %s975, 127
        %s978 = smul.addr %s977, 8
        %s979 = scalar_lea.vmem %s2, %s978
      $region44: #{conv_block_forward.4} parent=39 // pred_fallthru
        _
      // Predicated region
      $region45: #{conv_block_forward.4} parent=39 // pred_check
        %p980 = pneg %p112
      $region46: #{conv_block_forward.4} parent=39 // pred_check_branch
        %982 = sbr.rel (%p980) target = $region48
      $region47: #{conv_block_forward.4} parent=39 // pred_region
        %p983 = scmp.lt.s32.totalorder %s16, 1
        %s984 = scalar_select %p983, %s16, 1
        %s985 = smul.addr %s984, 8
        %s986 = scalar_lea.vmem %s3, %s985
      $region48: #{conv_block_forward.4} parent=39 // pred_fallthru
        _
    $region40: #{conv_block_forward.4} parent=5 // pred_fallthru
      _
  $region6: #{conv_block_forward.4} parent=0 // loop_footer
    %s14 = sadd.s32 1, %s10
  $region7: #{conv_block_forward.4} parent=0 // loop_footer_branch
    %9 = sbr.rel target = $region3
  $region8: #{conv_block_forward.4} parent=0 // loop_exit
    _

// kernel: conv_block_forward.5
$region0: #{conv_block_forward.5}
  #allocation0 [shape = 'u32[]', space=smem, size = 0x4, offset = 0x4, fixed_abs, tag = 'smem constant byte address 0x4 - core index']
  #allocation1 [shape = 'u32[72,128]{1,0:T(1,128)}', space=vmem, size = 0x9000, scoped, tag = 'internal scratch']
  %s0 = inlined_call_operand.vmem [shape: f32[1024,128], index: 0, kind: input, shape index: {}]
  %s1 = inlined_call_operand.vmem [shape: f32[1,128], index: 1, kind: input, shape index: {}]
  %s2 = inlined_call_operand.vmem [shape: f32[1,128], index: 2, kind: input, shape index: {}]
  %s3 = inlined_call_operand.vmem [shape: bf16[1024,128], index: 3, kind: output, shape index: {}]
  %s4 = sld [smem:[#allocation0]]
  $region45: #{conv_block_forward.5} parent=0
    _
  %s6 = ssub.s32 1, %s4
  %s7 = scalar_select 0, %s6, %s4
  loop: start=0, step=1, limit=4
  $region2: #{conv_block_forward.5} parent=0 // loop_pre_header
    _
  $region3: #{conv_block_forward.5} parent=0 // loop_header
    %s9 = sphi 0, %s13
    %p10 = scmp.ge.s32.totalorder %s9, 4
    %s19 = sphi 0, %s21
    %s22 = sphi 0, %s19
    %s23 = sphi 0, %s22
    %s39 = sphi 0, %s23
    %s43 = sphi 0, %s43
    %s45 = sphi 0, %s43
    %s46 = sphi 0, %s45
    %s60 = sphi 0, %s46
    %s64 = sphi 0, %s64
    %s66 = sphi 0, %s64
    %s67 = sphi 0, %s66
    %s81 = sphi 0, %s67
    %s87 = sphi 0, %s89
    %s90 = sphi 0, %s87
    %s91 = sphi 0, %s90
    %s107 = sphi 0, %s91
  $region4: #{conv_block_forward.5} parent=0 // loop_header_branch
    %12 = sbr.rel (%p10) target = $region8
  $region5: #{conv_block_forward.5} parent=0 // loop_body
    %s14 = ssub.s32 %s9, 1
    %s15 = ssub.s32 %s9, 2
    %s16 = sadd.s32 %s9, 1
    %s17 = ssub.s32 %s9, %s16
    %p18 = scmp.eq.s32.totalorder %s17, 0
    %s20 = sadd.s32 %s19, 1
    %s21 = scalar_select %p18, %s19, %s20
    %p24 = pneg %p18
    %p25 = scmp.eq.s32.totalorder %s9, 1
    %p26 = por %p24, %p25
    %p27 = scmp.ne.s32.totalorder %s19, %s22
    %p28 = scmp.eq.s32.totalorder %s9, 0
    %p29 = por %p27, %p28
    %p30 = scmp.ne.s32.totalorder %s19, %s22
    %p31 = scmp.eq.s32.totalorder %s14, 1
    %p32 = por %p30, %p31
    %p33 = scmp.ne.s32.totalorder %s22, %s23
    %p34 = scmp.eq.s32.totalorder %s14, 0
    %p35 = por %p33, %p34
    %p36 = scmp.ne.s32.totalorder %s22, %s23
    %p37 = scmp.eq.s32.totalorder %s15, 1
    %p38 = por %p36, %p37
    %p40 = scmp.ne.s32.totalorder %s23, %s39
    %p41 = scmp.eq.s32.totalorder %s15, 0
    %p42 = por %p40, %p41
    %s44 = sadd.s32 %s43, 1
    %p47 = scmp.eq.s32.totalorder %s9, 1
    %p48 = scmp.ne.s32.totalorder %s43, %s45
    %p49 = scmp.eq.s32.totalorder %s9, 0
    %p50 = por %p48, %p49
    %p51 = scmp.ne.s32.totalorder %s43, %s45
    %p52 = scmp.eq.s32.totalorder %s14, 1
    %p53 = por %p51, %p52
    %p54 = scmp.ne.s32.totalorder %s45, %s46
    %p55 = scmp.eq.s32.totalorder %s14, 0
    %p56 = por %p54, %p55
    %p57 = scmp.ne.s32.totalorder %s45, %s46
    %p58 = scmp.eq.s32.totalorder %s15, 1
    %p59 = por %p57, %p58
    %p61 = scmp.ne.s32.totalorder %s46, %s60
    %p62 = scmp.eq.s32.totalorder %s15, 0
    %p63 = por %p61, %p62
    %s65 = sadd.s32 %s64, 1
    %p68 = scmp.eq.s32.totalorder %s9, 1
    %p69 = scmp.ne.s32.totalorder %s64, %s66
    %p70 = scmp.eq.s32.totalorder %s9, 0
    %p71 = por %p69, %p70
    %p72 = scmp.ne.s32.totalorder %s64, %s66
    %p73 = scmp.eq.s32.totalorder %s14, 1
    %p74 = por %p72, %p73
    %p75 = scmp.ne.s32.totalorder %s66, %s67
    %p76 = scmp.eq.s32.totalorder %s14, 0
    %p77 = por %p75, %p76
    %p78 = scmp.ne.s32.totalorder %s66, %s67
    %p79 = scmp.eq.s32.totalorder %s15, 1
    %p80 = por %p78, %p79
    %p82 = scmp.ne.s32.totalorder %s67, %s81
    %p83 = scmp.eq.s32.totalorder %s15, 0
    %p84 = por %p82, %p83
    %s85 = ssub.s32 %s9, %s16
    %p86 = scmp.eq.s32.totalorder %s85, 0
    %s88 = sadd.s32 %s87, 1
    %s89 = scalar_select %p86, %s87, %s88
    %p92 = pneg %p86
    %p93 = scmp.eq.s32.totalorder %s9, 1
    %p94 = por %p92, %p93
    %p95 = scmp.ne.s32.totalorder %s87, %s90
    %p96 = scmp.eq.s32.totalorder %s9, 0
    %p97 = por %p95, %p96
    %p98 = scmp.ne.s32.totalorder %s87, %s90
    %p99 = scmp.eq.s32.totalorder %s14, 1
    %p100 = por %p98, %p99
    %p101 = scmp.ne.s32.totalorder %s90, %s91
    %p102 = scmp.eq.s32.totalorder %s14, 0
    %p103 = por %p101, %p102
    %p104 = scmp.ne.s32.totalorder %s90, %s91
    %p105 = scmp.eq.s32.totalorder %s15, 1
    %p106 = por %p104, %p105
    %p108 = scmp.ne.s32.totalorder %s91, %s107
    %p109 = scmp.eq.s32.totalorder %s15, 0
    %p110 = por %p108, %p109
    %p111 = scmp.le.s32.totalorder 1, %s9
    %p112 = scmp.lt.s32.totalorder %s9, 3
    %p113 = pnand %p111, %p112
    %p114 = pneg %p113
    // Predicated region
    $region9: #{conv_block_forward.5} parent=5 // pred_check
      _
    $region10: #{conv_block_forward.5} parent=5 // pred_check_branch
      %116 = sbr.rel (%p113) target = $region12
    $region11: #{conv_block_forward.5} parent=5 // pred_region
      %s117 = ssub.s32 %s9, 1
      // Predicated region
      $region13: #{conv_block_forward.5} parent=11 // pred_check
        %p118 = pneg %p56
      $region14: #{conv_block_forward.5} parent=11 // pred_check_branch
        %120 = sbr.rel (%p118) target = $region16
      $region15: #{conv_block_forward.5} parent=11 // pred_region
        _
      $region16: #{conv_block_forward.5} parent=11 // pred_fallthru
        _
      // Predicated region
      $region17: #{conv_block_forward.5} parent=11 // pred_check
        %p121 = pneg %p77
      $region18: #{conv_block_forward.5} parent=11 // pred_check_branch
        %123 = sbr.rel (%p121) target = $region20
      $region19: #{conv_block_forward.5} parent=11 // pred_region
        _
      $region20: #{conv_block_forward.5} parent=11 // pred_fallthru
        _
    $region12: #{conv_block_forward.5} parent=5 // pred_fallthru
      _
    %p124 = scmp.lt.s32.totalorder %s9, 2
    // Predicated region
    $region21: #{conv_block_forward.5} parent=5 // pred_check
      %p125 = pneg %p124
    $region22: #{conv_block_forward.5} parent=5 // pred_check_branch
      %127 = sbr.rel (%p125) target = $region24
    $region23: #{conv_block_forward.5} parent=5 // pred_region
      // Predicated region
      $region25: #{conv_block_forward.5} parent=23 // pred_check
        %p128 = pneg %p29
      $region26: #{conv_block_forward.5} parent=23 // pred_check_branch
        %130 = sbr.rel (%p128) target = $region28
      $region27: #{conv_block_forward.5} parent=23 // pred_region
        %s131 = smul.u32 64, %s9
        %p132 = scmp.lt.s32.totalorder %s131, 127
        %s133 = scalar_select %p132, %s131, 127
        %s134 = smul.addr %s133, 8
        %s135 = scalar_lea.vmem %s0, %s134
        %s136 = smul.u32 64, %s9
      $region28: #{conv_block_forward.5} parent=23 // pred_fallthru
        _
    $region24: #{conv_block_forward.5} parent=5 // pred_fallthru
      _
    %p137 = scmp.le.s32.totalorder 1, %s9
    %p138 = scmp.lt.s32.totalorder %s9, 3
    %p139 = pnand %p137, %p138
    %p140 = pneg %p139
    // Predicated region
    $region29: #{conv_block_forward.5} parent=5 // pred_check
      _
    $region30: #{conv_block_forward.5} parent=5 // pred_check_branch
      %142 = sbr.rel (%p139) target = $region32
    $region31: #{conv_block_forward.5} parent=5 // pred_region
      %s143 = ssub.s32 %s9, 1
      %s144 = smul.u32 64, %s14
      %p145 = scmp.lt.s32.totalorder %s144, 127
      %s146 = scalar_select %p145, %s144, 127
      %s147 = smul.addr %s146, 8
      %s148 = scalar_lea.vmem %s0, %s147
      %p149 = pneg %p35
      %p150 = pneg %p32
      %p151 = pneg %p56
      %p152 = pneg %p53
      %p153 = pneg %p77
      %p154 = pneg %p74
      %p155 = pneg %p103
      %p156 = pneg %p100
      %s157 = smul.u32 64, %s14
      %p158 = scmp.lt.s32.totalorder %s157, 127
      %s159 = scalar_select %p158, %s157, 127
      %s160 = smul.addr %s159, 4
      %s161 = scalar_lea.vmem %s3, %s160
      %s162 = smul.u32 64, %s14
      %p163 = scmp.lt.s32.totalorder %s162, 127
      %s164 = scalar_select %p163, %s162, 127
      %s165 = smul.addr %s164, 8
      %s166 = scalar_lea.vmem %s0, %s165
      %s167 = smul.u32 64, %s14
      %s168 = smul.u32 64, %s14
      %p169 = scmp.lt.s32.totalorder %s168, 127
      %s170 = scalar_select %p169, %s168, 127
      %s171 = smul.addr %s170, 4
      %s172 = scalar_lea.vmem %s3, %s171
      %s173 = smul.u32 64, %s14
      %v174 = vld [vmem:[%s166] sm:$0xff]
      %v175 = vld [vmem:[%s166 + $0x8] sm:$0xff]
      %v176 = vld [vmem:[%s166 + $0x10] sm:$0xff]
      %v177 = vld [vmem:[%s166 + $0x18] sm:$0xff]
      %v178 = vld [vmem:[%s166 + $0x20] sm:$0xff]
      %v179 = vld [vmem:[%s166 + $0x28] sm:$0xff]
      %v180 = vld [vmem:[%s166 + $0x30] sm:$0xff]
      %v181 = vld [vmem:[%s166 + $0x38] sm:$0xff]
      %v182 = vld [vmem:[%s166 + $0x40] sm:$0xff]
      %v183 = vld [vmem:[%s166 + $0x48] sm:$0xff]
      %v184 = vld [vmem:[%s166 + $0x50] sm:$0xff]
      %v185 = vld [vmem:[%s166 + $0x58] sm:$0xff]
      %v186 = vld [vmem:[%s166 + $0x60] sm:$0xff]
      %v187 = vld [vmem:[%s166 + $0x68] sm:$0xff]
      %v188 = vld [vmem:[%s166 + $0x70] sm:$0xff]
      %v189 = vld [vmem:[%s166 + $0x78] sm:$0xff]
      %v190 = vld [vmem:[%s166 + $0x80] sm:$0xff]
      %v191 = vld [vmem:[%s166 + $0x88] sm:$0xff]
      %v192 = vld [vmem:[%s166 + $0x90] sm:$0xff]
      %v193 = vld [vmem:[%s166 + $0x98] sm:$0xff]
      %v194 = vld [vmem:[%s166 + $0xa0] sm:$0xff]
      %v195 = vld [vmem:[%s166 + $0xa8] sm:$0xff]
      %v196 = vld [vmem:[%s166 + $0xb0] sm:$0xff]
      %v197 = vld [vmem:[%s166 + $0xb8] sm:$0xff]
      %v198 = vld [vmem:[%s166 + $0xc0] sm:$0xff]
      %v199 = vld [vmem:[%s166 + $0xc8] sm:$0xff]
      %v200 = vld [vmem:[%s166 + $0xd0] sm:$0xff]
      %v201 = vld [vmem:[%s166 + $0xd8] sm:$0xff]
      %v202 = vld [vmem:[%s166 + $0xe0] sm:$0xff]
      %v203 = vld [vmem:[%s166 + $0xe8] sm:$0xff]
      %v204 = vld [vmem:[%s166 + $0xf0] sm:$0xff]
      %v205 = vld [vmem:[%s166 + $0xf8] sm:$0xff]
      %v206 = vld [vmem:[%s166 + $0x100] sm:$0xff]
      %v207 = vld [vmem:[%s166 + $0x108] sm:$0xff]
      %v208 = vld [vmem:[%s166 + $0x110] sm:$0xff]
      %v209 = vld [vmem:[%s166 + $0x118] sm:$0xff]
      %v210 = vld [vmem:[%s166 + $0x120] sm:$0xff]
      %v211 = vld [vmem:[%s166 + $0x128] sm:$0xff]
      %v212 = vld [vmem:[%s166 + $0x130] sm:$0xff]
      %v213 = vld [vmem:[%s166 + $0x138] sm:$0xff]
      %v214 = vld [vmem:[%s166 + $0x140] sm:$0xff]
      %v215 = vld [vmem:[%s166 + $0x148] sm:$0xff]
      %v216 = vld [vmem:[%s166 + $0x150] sm:$0xff]
      %v217 = vld [vmem:[%s166 + $0x158] sm:$0xff]
      %v218 = vld [vmem:[%s166 + $0x160] sm:$0xff]
      %v219 = vld [vmem:[%s166 + $0x168] sm:$0xff]
      %v220 = vld [vmem:[%s166 + $0x170] sm:$0xff]
      %v221 = vld [vmem:[%s166 + $0x178] sm:$0xff]
      %v222 = vld [vmem:[%s166 + $0x180] sm:$0xff]
      %v223 = vld [vmem:[%s166 + $0x188] sm:$0xff]
      %v224 = vld [vmem:[%s166 + $0x190] sm:$0xff]
      %v225 = vld [vmem:[%s166 + $0x198] sm:$0xff]
      %v226 = vld [vmem:[%s166 + $0x1a0] sm:$0xff]
      %v227 = vld [vmem:[%s166 + $0x1a8] sm:$0xff]
      %v228 = vld [vmem:[%s166 + $0x1b0] sm:$0xff]
      %v229 = vld [vmem:[%s166 + $0x1b8] sm:$0xff]
      %v230 = vld [vmem:[%s166 + $0x1c0] sm:$0xff]
      %v231 = vld [vmem:[%s166 + $0x1c8] sm:$0xff]
      %v232 = vld [vmem:[%s166 + $0x1d0] sm:$0xff]
      %v233 = vld [vmem:[%s166 + $0x1d8] sm:$0xff]
      %v234 = vld [vmem:[%s166 + $0x1e0] sm:$0xff]
      %v235 = vld [vmem:[%s166 + $0x1e8] sm:$0xff]
      %v236 = vld [vmem:[%s166 + $0x1f0] sm:$0xff]
      %v237 = vld [vmem:[%s166 + $0x1f8] sm:$0xff]
      %v238 = vld [vmem:[%s1] sm:$0x1]
      %v240 = vperm.slane %v238, 0
      %v242 = vmul.f32 %v174, %v240
      %v243 = vmul.f32 %v175, %v240
      %v244 = vmul.f32 %v176, %v240
      %v245 = vmul.f32 %v177, %v240
      %v246 = vmul.f32 %v178, %v240
      %v247 = vmul.f32 %v179, %v240
      %v248 = vmul.f32 %v180, %v240
      %v249 = vmul.f32 %v181, %v240
      %v250 = vmul.f32 %v182, %v240
      %v251 = vmul.f32 %v183, %v240
      %v252 = vmul.f32 %v184, %v240
      %v253 = vmul.f32 %v185, %v240
      %v254 = vmul.f32 %v186, %v240
      %v255 = vmul.f32 %v187, %v240
      %v256 = vmul.f32 %v188, %v240
      %v257 = vmul.f32 %v189, %v240
      %v258 = vmul.f32 %v190, %v240
      %v259 = vmul.f32 %v191, %v240
      %v260 = vmul.f32 %v192, %v240
      %v261 = vmul.f32 %v193, %v240
      %v262 = vmul.f32 %v194, %v240
      %v263 = vmul.f32 %v195, %v240
      %v264 = vmul.f32 %v196, %v240
      %v265 = vmul.f32 %v197, %v240
      %v266 = vmul.f32 %v198, %v240
      %v267 = vmul.f32 %v199, %v240
      %v268 = vmul.f32 %v200, %v240
      %v269 = vmul.f32 %v201, %v240
      %v270 = vmul.f32 %v202, %v240
      %v271 = vmul.f32 %v203, %v240
      %v272 = vmul.f32 %v204, %v240
      %v273 = vmul.f32 %v205, %v240
      %v274 = vmul.f32 %v206, %v240
      %v275 = vmul.f32 %v207, %v240
      %v276 = vmul.f32 %v208, %v240
      %v277 = vmul.f32 %v209, %v240
      %v278 = vmul.f32 %v210, %v240
      %v279 = vmul.f32 %v211, %v240
      %v280 = vmul.f32 %v212, %v240
      %v281 = vmul.f32 %v213, %v240
      %v282 = vmul.f32 %v214, %v240
      %v283 = vmul.f32 %v215, %v240
      %v284 = vmul.f32 %v216, %v240
      %v285 = vmul.f32 %v217, %v240
      %v286 = vmul.f32 %v218, %v240
      %v287 = vmul.f32 %v219, %v240
      %v288 = vmul.f32 %v220, %v240
      %v289 = vmul.f32 %v221, %v240
      %v290 = vmul.f32 %v222, %v240
      %v291 = vmul.f32 %v223, %v240
      %v292 = vmul.f32 %v224, %v240
      %v293 = vmul.f32 %v225, %v240
      %v294 = vmul.f32 %v226, %v240
      %v295 = vmul.f32 %v227, %v240
      %v296 = vmul.f32 %v228, %v240
      %v297 = vmul.f32 %v229, %v240
      %v298 = vmul.f32 %v230, %v240
      %v299 = vmul.f32 %v231, %v240
      %v300 = vmul.f32 %v232, %v240
      %v301 = vmul.f32 %v233, %v240
      %v302 = vmul.f32 %v234, %v240
      %v303 = vmul.f32 %v235, %v240
      %v304 = vmul.f32 %v236, %v240
      %v305 = vmul.f32 %v237, %v240
      %v306 = vld [vmem:[%s2] sm:$0x1]
      %v308 = vperm.slane %v306, 0
      %v310 = vadd.f32 %v242, %v308
      %v311 = vadd.f32 %v243, %v308
      %v312 = vadd.f32 %v244, %v308
      %v313 = vadd.f32 %v245, %v308
      %v314 = vadd.f32 %v246, %v308
      %v315 = vadd.f32 %v247, %v308
      %v316 = vadd.f32 %v248, %v308
      %v317 = vadd.f32 %v249, %v308
      %v318 = vadd.f32 %v250, %v308
      %v319 = vadd.f32 %v251, %v308
      %v320 = vadd.f32 %v252, %v308
      %v321 = vadd.f32 %v253, %v308
      %v322 = vadd.f32 %v254, %v308
      %v323 = vadd.f32 %v255, %v308
      %v324 = vadd.f32 %v256, %v308
      %v325 = vadd.f32 %v257, %v308
      %v326 = vadd.f32 %v258, %v308
      %v327 = vadd.f32 %v259, %v308
      %v328 = vadd.f32 %v260, %v308
      %v329 = vadd.f32 %v261, %v308
      %v330 = vadd.f32 %v262, %v308
      %v331 = vadd.f32 %v263, %v308
      %v332 = vadd.f32 %v264, %v308
      %v333 = vadd.f32 %v265, %v308
      %v334 = vadd.f32 %v266, %v308
      %v335 = vadd.f32 %v267, %v308
      %v336 = vadd.f32 %v268, %v308
      %v337 = vadd.f32 %v269, %v308
      %v338 = vadd.f32 %v270, %v308
      %v339 = vadd.f32 %v271, %v308
      %v340 = vadd.f32 %v272, %v308
      %v341 = vadd.f32 %v273, %v308
      %v342 = vadd.f32 %v274, %v308
      %v343 = vadd.f32 %v275, %v308
      %v344 = vadd.f32 %v276, %v308
      %v345 = vadd.f32 %v277, %v308
      %v346 = vadd.f32 %v278, %v308
      %v347 = vadd.f32 %v279, %v308
      %v348 = vadd.f32 %v280, %v308
      %v349 = vadd.f32 %v281, %v308
      %v350 = vadd.f32 %v282, %v308
      %v351 = vadd.f32 %v283, %v308
      %v352 = vadd.f32 %v284, %v308
      %v353 = vadd.f32 %v285, %v308
      %v354 = vadd.f32 %v286, %v308
      %v355 = vadd.f32 %v287, %v308
      %v356 = vadd.f32 %v288, %v308
      %v357 = vadd.f32 %v289, %v308
      %v358 = vadd.f32 %v290, %v308
      %v359 = vadd.f32 %v291, %v308
      %v360 = vadd.f32 %v292, %v308
      %v361 = vadd.f32 %v293, %v308
      %v362 = vadd.f32 %v294, %v308
      %v363 = vadd.f32 %v295, %v308
      %v364 = vadd.f32 %v296, %v308
      %v365 = vadd.f32 %v297, %v308
      %v366 = vadd.f32 %v298, %v308
      %v367 = vadd.f32 %v299, %v308
      %v368 = vadd.f32 %v300, %v308
      %v369 = vadd.f32 %v301, %v308
      %v370 = vadd.f32 %v302, %v308
      %v371 = vadd.f32 %v303, %v308
      %v372 = vadd.f32 %v304, %v308
      %v373 = vadd.f32 %v305, %v308
      %v374 = vmax.f32 %v310, 0.0
      %v375 = vmax.f32 %v311, 0.0
      %v376 = vmax.f32 %v312, 0.0
      %v377 = vmax.f32 %v313, 0.0
      %v378 = vmax.f32 %v314, 0.0
      %v379 = vmax.f32 %v315, 0.0
      %v380 = vmax.f32 %v316, 0.0
      %v381 = vmax.f32 %v317, 0.0
      %v382 = vmax.f32 %v318, 0.0
      %v383 = vmax.f32 %v319, 0.0
      %v384 = vmax.f32 %v320, 0.0
      %v385 = vmax.f32 %v321, 0.0
      %v386 = vmax.f32 %v322, 0.0
      %v387 = vmax.f32 %v323, 0.0
      %v388 = vmax.f32 %v324, 0.0
      %v389 = vmax.f32 %v325, 0.0
      %v390 = vmax.f32 %v326, 0.0
      %v391 = vmax.f32 %v327, 0.0
      %v392 = vmax.f32 %v328, 0.0
      %v393 = vmax.f32 %v329, 0.0
      %v394 = vmax.f32 %v330, 0.0
      %v395 = vmax.f32 %v331, 0.0
      %v396 = vmax.f32 %v332, 0.0
      %v397 = vmax.f32 %v333, 0.0
      %v398 = vmax.f32 %v334, 0.0
      %v399 = vmax.f32 %v335, 0.0
      %v400 = vmax.f32 %v336, 0.0
      %v401 = vmax.f32 %v337, 0.0
      %v402 = vmax.f32 %v338, 0.0
      %v403 = vmax.f32 %v339, 0.0
      %v404 = vmax.f32 %v340, 0.0
      %v405 = vmax.f32 %v341, 0.0
      %v406 = vmax.f32 %v342, 0.0
      %v407 = vmax.f32 %v343, 0.0
      %v408 = vmax.f32 %v344, 0.0
      %v409 = vmax.f32 %v345, 0.0
      %v410 = vmax.f32 %v346, 0.0
      %v411 = vmax.f32 %v347, 0.0
      %v412 = vmax.f32 %v348, 0.0
      %v413 = vmax.f32 %v349, 0.0
      %v414 = vmax.f32 %v350, 0.0
      %v415 = vmax.f32 %v351, 0.0
      %v416 = vmax.f32 %v352, 0.0
      %v417 = vmax.f32 %v353, 0.0
      %v418 = vmax.f32 %v354, 0.0
      %v419 = vmax.f32 %v355, 0.0
      %v420 = vmax.f32 %v356, 0.0
      %v421 = vmax.f32 %v357, 0.0
      %v422 = vmax.f32 %v358, 0.0
      %v423 = vmax.f32 %v359, 0.0
      %v424 = vmax.f32 %v360, 0.0
      %v425 = vmax.f32 %v361, 0.0
      %v426 = vmax.f32 %v362, 0.0
      %v427 = vmax.f32 %v363, 0.0
      %v428 = vmax.f32 %v364, 0.0
      %v429 = vmax.f32 %v365, 0.0
      %v430 = vmax.f32 %v366, 0.0
      %v431 = vmax.f32 %v367, 0.0
      %v432 = vmax.f32 %v368, 0.0
      %v433 = vmax.f32 %v369, 0.0
      %v434 = vmax.f32 %v370, 0.0
      %v435 = vmax.f32 %v371, 0.0
      %v436 = vmax.f32 %v372, 0.0
      %v437 = vmax.f32 %v373, 0.0
      %v438 = vpack.c.bf16 %v374, %v374
      %v439 = vpack.c.bf16 %v375, %v375
      %v440 = vpack.c.bf16 %v376, %v376
      %v441 = vpack.c.bf16 %v377, %v377
      %v442 = vpack.c.bf16 %v378, %v378
      %v443 = vpack.c.bf16 %v379, %v379
      %v444 = vpack.c.bf16 %v380, %v380
      %v445 = vpack.c.bf16 %v381, %v381
      %v446 = vpack.c.bf16 %v382, %v382
      %v447 = vpack.c.bf16 %v383, %v383
      %v448 = vpack.c.bf16 %v384, %v384
      %v449 = vpack.c.bf16 %v385, %v385
      %v450 = vpack.c.bf16 %v386, %v386
      %v451 = vpack.c.bf16 %v387, %v387
      %v452 = vpack.c.bf16 %v388, %v388
      %v453 = vpack.c.bf16 %v389, %v389
      %v454 = vpack.c.bf16 %v390, %v390
      %v455 = vpack.c.bf16 %v391, %v391
      %v456 = vpack.c.bf16 %v392, %v392
      %v457 = vpack.c.bf16 %v393, %v393
      %v458 = vpack.c.bf16 %v394, %v394
      %v459 = vpack.c.bf16 %v395, %v395
      %v460 = vpack.c.bf16 %v396, %v396
      %v461 = vpack.c.bf16 %v397, %v397
      %v462 = vpack.c.bf16 %v398, %v398
      %v463 = vpack.c.bf16 %v399, %v399
      %v464 = vpack.c.bf16 %v400, %v400
      %v465 = vpack.c.bf16 %v401, %v401
      %v466 = vpack.c.bf16 %v402, %v402
      %v467 = vpack.c.bf16 %v403, %v403
      %v468 = vpack.c.bf16 %v404, %v404
      %v469 = vpack.c.bf16 %v405, %v405
      %v470 = vpack.c.bf16 %v406, %v406
      %v471 = vpack.c.bf16 %v407, %v407
      %v472 = vpack.c.bf16 %v408, %v408
      %v473 = vpack.c.bf16 %v409, %v409
      %v474 = vpack.c.bf16 %v410, %v410
      %v475 = vpack.c.bf16 %v411, %v411
      %v476 = vpack.c.bf16 %v412, %v412
      %v477 = vpack.c.bf16 %v413, %v413
      %v478 = vpack.c.bf16 %v414, %v414
      %v479 = vpack.c.bf16 %v415, %v415
      %v480 = vpack.c.bf16 %v416, %v416
      %v481 = vpack.c.bf16 %v417, %v417
      %v482 = vpack.c.bf16 %v418, %v418
      %v483 = vpack.c.bf16 %v419, %v419
      %v484 = vpack.c.bf16 %v420, %v420
      %v485 = vpack.c.bf16 %v421, %v421
      %v486 = vpack.c.bf16 %v422, %v422
      %v487 = vpack.c.bf16 %v423, %v423
      %v488 = vpack.c.bf16 %v424, %v424
      %v489 = vpack.c.bf16 %v425, %v425
      %v490 = vpack.c.bf16 %v426, %v426
      %v491 = vpack.c.bf16 %v427, %v427
      %v492 = vpack.c.bf16 %v428, %v428
      %v493 = vpack.c.bf16 %v429, %v429
      %v494 = vpack.c.bf16 %v430, %v430
      %v495 = vpack.c.bf16 %v431, %v431
      %v496 = vpack.c.bf16 %v432, %v432
      %v497 = vpack.c.bf16 %v433, %v433
      %v498 = vpack.c.bf16 %v434, %v434
      %v499 = vpack.c.bf16 %v435, %v435
      %v500 = vpack.c.bf16 %v436, %v436
      %v501 = vpack.c.bf16 %v437, %v437
      %502 = vst [vmem:[%s172] sm:$0xf] %v438
      %503 = vst [vmem:[%s172 + $0x4] sm:$0xf] %v439
      %504 = vst [vmem:[%s172 + $0x8] sm:$0xf] %v440
      %505 = vst [vmem:[%s172 + $0xc] sm:$0xf] %v441
      %506 = vst [vmem:[%s172 + $0x10] sm:$0xf] %v442
      %507 = vst [vmem:[%s172 + $0x14] sm:$0xf] %v443
      %508 = vst [vmem:[%s172 + $0x18] sm:$0xf] %v444
      %509 = vst [vmem:[%s172 + $0x1c] sm:$0xf] %v445
      %510 = vst [vmem:[%s172 + $0x20] sm:$0xf] %v446
      %511 = vst [vmem:[%s172 + $0x24] sm:$0xf] %v447
      %512 = vst [vmem:[%s172 + $0x28] sm:$0xf] %v448
      %513 = vst [vmem:[%s172 + $0x2c] sm:$0xf] %v449
      %514 = vst [vmem:[%s172 + $0x30] sm:$0xf] %v450
      %515 = vst [vmem:[%s172 + $0x34] sm:$0xf] %v451
      %516 = vst [vmem:[%s172 + $0x38] sm:$0xf] %v452
      %517 = vst [vmem:[%s172 + $0x3c] sm:$0xf] %v453
      %518 = vst [vmem:[%s172 + $0x40] sm:$0xf] %v454
      %519 = vst [vmem:[%s172 + $0x44] sm:$0xf] %v455
      %520 = vst [vmem:[%s172 + $0x48] sm:$0xf] %v456
      %521 = vst [vmem:[%s172 + $0x4c] sm:$0xf] %v457
      %522 = vst [vmem:[%s172 + $0x50] sm:$0xf] %v458
      %523 = vst [vmem:[%s172 + $0x54] sm:$0xf] %v459
      %524 = vst [vmem:[%s172 + $0x58] sm:$0xf] %v460
      %525 = vst [vmem:[%s172 + $0x5c] sm:$0xf] %v461
      %526 = vst [vmem:[%s172 + $0x60] sm:$0xf] %v462
      %527 = vst [vmem:[%s172 + $0x64] sm:$0xf] %v463
      %528 = vst [vmem:[%s172 + $0x68] sm:$0xf] %v464
      %529 = vst [vmem:[%s172 + $0x6c] sm:$0xf] %v465
      %530 = vst [vmem:[%s172 + $0x70] sm:$0xf] %v466
      %531 = vst [vmem:[%s172 + $0x74] sm:$0xf] %v467
      %532 = vst [vmem:[%s172 + $0x78] sm:$0xf] %v468
      %533 = vst [vmem:[%s172 + $0x7c] sm:$0xf] %v469
      %534 = vst [vmem:[%s172 + $0x80] sm:$0xf] %v470
      %535 = vst [vmem:[%s172 + $0x84] sm:$0xf] %v471
      %536 = vst [vmem:[%s172 + $0x88] sm:$0xf] %v472
      %537 = vst [vmem:[%s172 + $0x8c] sm:$0xf] %v473
      %538 = vst [vmem:[%s172 + $0x90] sm:$0xf] %v474
      %539 = vst [vmem:[%s172 + $0x94] sm:$0xf] %v475
      %540 = vst [vmem:[%s172 + $0x98] sm:$0xf] %v476
      %541 = vst [vmem:[%s172 + $0x9c] sm:$0xf] %v477
      %542 = vst [vmem:[%s172 + $0xa0] sm:$0xf] %v478
      %543 = vst [vmem:[%s172 + $0xa4] sm:$0xf] %v479
      %544 = vst [vmem:[%s172 + $0xa8] sm:$0xf] %v480
      %545 = vst [vmem:[%s172 + $0xac] sm:$0xf] %v481
      %546 = vst [vmem:[%s172 + $0xb0] sm:$0xf] %v482
      %547 = vst [vmem:[%s172 + $0xb4] sm:$0xf] %v483
      %548 = vst [vmem:[%s172 + $0xb8] sm:$0xf] %v484
      %549 = vst [vmem:[%s172 + $0xbc] sm:$0xf] %v485
      %550 = vst [vmem:[%s172 + $0xc0] sm:$0xf] %v486
      %551 = vst [vmem:[%s172 + $0xc4] sm:$0xf] %v487
      %552 = vst [vmem:[%s172 + $0xc8] sm:$0xf] %v488
      %553 = vst [vmem:[%s172 + $0xcc] sm:$0xf] %v489
      %554 = vst [vmem:[%s172 + $0xd0] sm:$0xf] %v490
      %555 = vst [vmem:[%s172 + $0xd4] sm:$0xf] %v491
      %556 = vst [vmem:[%s172 + $0xd8] sm:$0xf] %v492
      %557 = vst [vmem:[%s172 + $0xdc] sm:$0xf] %v493
      %558 = vst [vmem:[%s172 + $0xe0] sm:$0xf] %v494
      %559 = vst [vmem:[%s172 + $0xe4] sm:$0xf] %v495
      %560 = vst [vmem:[%s172 + $0xe8] sm:$0xf] %v496
      %561 = vst [vmem:[%s172 + $0xec] sm:$0xf] %v497
      %562 = vst [vmem:[%s172 + $0xf0] sm:$0xf] %v498
      %563 = vst [vmem:[%s172 + $0xf4] sm:$0xf] %v499
      %564 = vst [vmem:[%s172 + $0xf8] sm:$0xf] %v500
      %565 = vst [vmem:[%s172 + $0xfc] sm:$0xf] %v501
      %s566 = smul.u32 64, %s14
      %p567 = scmp.lt.s32.totalorder %s566, 127
      %s568 = scalar_select %p567, %s566, 127
      %s569 = smul.addr %s568, 4
      %s570 = scalar_lea.vmem %s3, %s569
      // Predicated region
      $region33: #{conv_block_forward.5} parent=31 // pred_check
        %p571 = pneg %p100
      $region34: #{conv_block_forward.5} parent=31 // pred_check_branch
        %573 = sbr.rel (%p571) target = $region36
      $region35: #{conv_block_forward.5} parent=31 // pred_region
        %s574 = smul.u32 64, %s14
      $region36: #{conv_block_forward.5} parent=31 // pred_fallthru
        _
    $region32: #{conv_block_forward.5} parent=5 // pred_fallthru
      _
    %p575 = scmp.le.s32.totalorder 2, %s9
    // Predicated region
    $region37: #{conv_block_forward.5} parent=5 // pred_check
      %p576 = pneg %p575
    $region38: #{conv_block_forward.5} parent=5 // pred_check_branch
      %578 = sbr.rel (%p576) target = $region40
    $region39: #{conv_block_forward.5} parent=5 // pred_region
      %s579 = ssub.s32 %s9, 2
      // Predicated region
      $region41: #{conv_block_forward.5} parent=39 // pred_check
        %p580 = pneg %p106
      $region42: #{conv_block_forward.5} parent=39 // pred_check_branch
        %582 = sbr.rel (%p580) target = $region44
      $region43: #{conv_block_forward.5} parent=39 // pred_region
        %s583 = smul.u32 64, %s15
        %p584 = scmp.lt.s32.totalorder %s583, 127
        %s585 = scalar_select %p584, %s583, 127
        %s586 = smul.addr %s585, 4
        %s587 = scalar_lea.vmem %s3, %s586
      $region44: #{conv_block_forward.5} parent=39 // pred_fallthru
        _
    $region40: #{conv_block_forward.5} parent=5 // pred_fallthru
      _
  $region6: #{conv_block_forward.5} parent=0 // loop_footer
    %s13 = sadd.s32 1, %s9
  $region7: #{conv_block_forward.5} parent=0 // loop_footer_branch
    %8 = sbr.rel target = $region3
  $region8: #{conv_block_forward.5} parent=0 // loop_exit
    _

// kernel: conv_block_forward.6
$region0: #{conv_block_forward.6}
  #allocation0 [shape = 'u32[]', space=smem, size = 0x4, offset = 0x4, fixed_abs, tag = 'smem constant byte address 0x4 - core index']
  #allocation1 [shape = 'u32[72,128]{1,0:T(1,128)}', space=vmem, size = 0x9000, scoped, tag = 'internal scratch']
  %s0 = inlined_call_operand.vmem [shape: bf16[1024,256], index: 0, kind: input, shape index: {}]
  %s1 = inlined_call_operand.vmem [shape: bf16[256,128], index: 1, kind: input, shape index: {}]
  %s2 = inlined_call_operand.vmem [shape: f32[1024,128], index: 2, kind: output, shape index: {0}]
  %s3 = inlined_call_operand.vmem [shape: f32[16,128], index: 3, kind: output, shape index: {1}]
  %4 = xla_tuple %s2, %s3
  %s5 = sld [smem:[#allocation0]]
  $region49: #{conv_block_forward.6} parent=0
    _
  %s7 = ssub.s32 1, %s5
  %s8 = scalar_select 0, %s7, %s5
  loop: start=0, step=1, limit=4
  $region2: #{conv_block_forward.6} parent=0 // loop_pre_header
    _
  $region3: #{conv_block_forward.6} parent=0 // loop_header
    %s10 = sphi 0, %s14
    %p11 = scmp.ge.s32.totalorder %s10, 4
    %s20 = sphi 0, %s22
    %s23 = sphi 0, %s20
    %s24 = sphi 0, %s23
    %s40 = sphi 0, %s24
    %s44 = sphi 0, %s44
    %s46 = sphi 0, %s44
    %s47 = sphi 0, %s46
    %s61 = sphi 0, %s47
    %s67 = sphi 0, %s69
    %s70 = sphi 0, %s67
    %s71 = sphi 0, %s70
    %s87 = sphi 0, %s71
    %s93 = sphi 0, %s95
    %s96 = sphi 0, %s93
    %s97 = sphi 0, %s96
    %s113 = sphi 0, %s97
  $region4: #{conv_block_forward.6} parent=0 // loop_header_branch
    %13 = sbr.rel (%p11) target = $region8
  $region5: #{conv_block_forward.6} parent=0 // loop_body
    %s15 = ssub.s32 %s10, 1
    %s16 = ssub.s32 %s10, 2
    %s17 = sadd.s32 %s10, 1
    %s18 = ssub.s32 %s10, %s17
    %p19 = scmp.eq.s32.totalorder %s18, 0
    %s21 = sadd.s32 %s20, 1
    %s22 = scalar_select %p19, %s20, %s21
    %p25 = pneg %p19
    %p26 = scmp.eq.s32.totalorder %s10, 1
    %p27 = por %p25, %p26
    %p28 = scmp.ne.s32.totalorder %s20, %s23
    %p29 = scmp.eq.s32.totalorder %s10, 0
    %p30 = por %p28, %p29
    %p31 = scmp.ne.s32.totalorder %s20, %s23
    %p32 = scmp.eq.s32.totalorder %s15, 1
    %p33 = por %p31, %p32
    %p34 = scmp.ne.s32.totalorder %s23, %s24
    %p35 = scmp.eq.s32.totalorder %s15, 0
    %p36 = por %p34, %p35
    %p37 = scmp.ne.s32.totalorder %s23, %s24
    %p38 = scmp.eq.s32.totalorder %s16, 1
    %p39 = por %p37, %p38
    %p41 = scmp.ne.s32.totalorder %s24, %s40
    %p42 = scmp.eq.s32.totalorder %s16, 0
    %p43 = por %p41, %p42
    %s45 = sadd.s32 %s44, 1
    %p48 = scmp.eq.s32.totalorder %s10, 1
    %p49 = scmp.ne.s32.totalorder %s44, %s46
    %p50 = scmp.eq.s32.totalorder %s10, 0
    %p51 = por %p49, %p50
    %p52 = scmp.ne.s32.totalorder %s44, %s46
    %p53 = scmp.eq.s32.totalorder %s15, 1
    %p54 = por %p52, %p53
    %p55 = scmp.ne.s32.totalorder %s46, %s47
    %p56 = scmp.eq.s32.totalorder %s15, 0
    %p57 = por %p55, %p56
    %p58 = scmp.ne.s32.totalorder %s46, %s47
    %p59 = scmp.eq.s32.totalorder %s16, 1
    %p60 = por %p58, %p59
    %p62 = scmp.ne.s32.totalorder %s47, %s61
    %p63 = scmp.eq.s32.totalorder %s16, 0
    %p64 = por %p62, %p63
    %s65 = ssub.s32 %s10, %s17
    %p66 = scmp.eq.s32.totalorder %s65, 0
    %s68 = sadd.s32 %s67, 1
    %s69 = scalar_select %p66, %s67, %s68
    %p72 = pneg %p66
    %p73 = scmp.eq.s32.totalorder %s10, 1
    %p74 = por %p72, %p73
    %p75 = scmp.ne.s32.totalorder %s67, %s70
    %p76 = scmp.eq.s32.totalorder %s10, 0
    %p77 = por %p75, %p76
    %p78 = scmp.ne.s32.totalorder %s67, %s70
    %p79 = scmp.eq.s32.totalorder %s15, 1
    %p80 = por %p78, %p79
    %p81 = scmp.ne.s32.totalorder %s70, %s71
    %p82 = scmp.eq.s32.totalorder %s15, 0
    %p83 = por %p81, %p82
    %p84 = scmp.ne.s32.totalorder %s70, %s71
    %p85 = scmp.eq.s32.totalorder %s16, 1
    %p86 = por %p84, %p85
    %p88 = scmp.ne.s32.totalorder %s71, %s87
    %p89 = scmp.eq.s32.totalorder %s16, 0
    %p90 = por %p88, %p89
    %s91 = ssub.s32 %s10, %s17
    %p92 = scmp.eq.s32.totalorder %s91, 0
    %s94 = sadd.s32 %s93, 1
    %s95 = scalar_select %p92, %s93, %s94
    %p98 = pneg %p92
    %p99 = scmp.eq.s32.totalorder %s10, 1
    %p100 = por %p98, %p99
    %p101 = scmp.ne.s32.totalorder %s93, %s96
    %p102 = scmp.eq.s32.totalorder %s10, 0
    %p103 = por %p101, %p102
    %p104 = scmp.ne.s32.totalorder %s93, %s96
    %p105 = scmp.eq.s32.totalorder %s15, 1
    %p106 = por %p104, %p105
    %p107 = scmp.ne.s32.totalorder %s96, %s97
    %p108 = scmp.eq.s32.totalorder %s15, 0
    %p109 = por %p107, %p108
    %p110 = scmp.ne.s32.totalorder %s96, %s97
    %p111 = scmp.eq.s32.totalorder %s16, 1
    %p112 = por %p110, %p111
    %p114 = scmp.ne.s32.totalorder %s97, %s113
    %p115 = scmp.eq.s32.totalorder %s16, 0
    %p116 = por %p114, %p115
    %p117 = scmp.le.s32.totalorder 1, %s10
    %p118 = scmp.lt.s32.totalorder %s10, 3
    %p119 = pnand %p117, %p118
    %p120 = pneg %p119
    // Predicated region
    $region9: #{conv_block_forward.6} parent=5 // pred_check
      _
    $region10: #{conv_block_forward.6} parent=5 // pred_check_branch
      %122 = sbr.rel (%p119) target = $region12
    $region11: #{conv_block_forward.6} parent=5 // pred_region
      %s123 = ssub.s32 %s10, 1
      // Predicated region
      $region13: #{conv_block_forward.6} parent=11 // pred_check
        %p124 = pneg %p57
      $region14: #{conv_block_forward.6} parent=11 // pred_check_branch
        %126 = sbr.rel (%p124) target = $region16
      $region15: #{conv_block_forward.6} parent=11 // pred_region
        _
      $region16: #{conv_block_forward.6} parent=11 // pred_fallthru
        _
    $region12: #{conv_block_forward.6} parent=5 // pred_fallthru
      _
    %p127 = scmp.lt.s32.totalorder %s10, 2
    // Predicated region
    $region17: #{conv_block_forward.6} parent=5 // pred_check
      %p128 = pneg %p127
    $region18: #{conv_block_forward.6} parent=5 // pred_check_branch
      %130 = sbr.rel (%p128) target = $region20
    $region19: #{conv_block_forward.6} parent=5 // pred_region
      // Predicated region
      $region21: #{conv_block_forward.6} parent=19 // pred_check
        %p131 = pneg %p30
      $region22: #{conv_block_forward.6} parent=19 // pred_check_branch
        %133 = sbr.rel (%p131) target = $region24
      $region23: #{conv_block_forward.6} parent=19 // pred_region
        %s134 = smul.u32 64, %s10
        %p135 = scmp.lt.s32.totalorder %s134, 127
        %s136 = scalar_select %p135, %s134, 127
        %s137 = smul.addr %s136, 2
        %s138 = smul.addr %s137, 4
        %s139 = scalar_lea.vmem %s0, %s138
        %s140 = smul.u32 64, %s10
      $region24: #{conv_block_forward.6} parent=19 // pred_fallthru
        _
    $region20: #{conv_block_forward.6} parent=5 // pred_fallthru
      _
    %p141 = scmp.le.s32.totalorder 1, %s10
    %p142 = scmp.lt.s32.totalorder %s10, 3
    %p143 = pnand %p141, %p142
    %p144 = pneg %p143
    // Predicated region
    $region25: #{conv_block_forward.6} parent=5 // pred_check
      _
    $region26: #{conv_block_forward.6} parent=5 // pred_check_branch
      %146 = sbr.rel (%p143) target = $region28
    $region27: #{conv_block_forward.6} parent=5 // pred_region
      %s147 = ssub.s32 %s10, 1
      %s148 = smul.u32 64, %s15
      %p149 = scmp.lt.s32.totalorder %s148, 127
      %s150 = scalar_select %p149, %s148, 127
      %s151 = smul.addr %s150, 2
      %s152 = smul.addr %s151, 4
      %s153 = scalar_lea.vmem %s0, %s152
      %p154 = pneg %p36
      %p155 = pneg %p33
      %p156 = pneg %p57
      %p157 = pneg %p54
      %p158 = pneg %p83
      %p159 = pneg %p80
      %s160 = smul.u32 64, %s15
      %p161 = scmp.lt.s32.totalorder %s160, 127
      %s162 = scalar_select %p161, %s160, 127
      %s163 = smul.addr %s162, 8
      %s164 = scalar_lea.vmem %s2, %s163
      %p165 = pneg %p109
      %p166 = pneg %p106
      %p167 = scmp.lt.s32.totalorder %s15, 1
      %s168 = scalar_select %p167, %s15, 1
      %s169 = smul.addr %s168, 8
      %s170 = scalar_lea.vmem %s3, %s169
      %s171 = smul.u32 64, %s15
      %p172 = scmp.lt.s32.totalorder %s171, 127
      %s173 = scalar_select %p172, %s171, 127
      %s174 = smul.addr %s173, 2
      %s175 = smul.addr %s174, 4
      %s176 = scalar_lea.vmem %s0, %s175
      %s177 = smul.u32 64, %s15
      %s178 = smul.u32 64, %s15
      %p179 = scmp.lt.s32.totalorder %s178, 127
      %s180 = scalar_select %p179, %s178, 127
      %s181 = smul.addr %s180, 8
      %s182 = scalar_lea.vmem %s2, %s181
      %s183 = smul.u32 64, %s15
      %p184 = scmp.lt.s32.totalorder %s15, 1
      %s185 = scalar_select %p184, %s15, 1
      %s186 = smul.addr %s185, 8
      %s187 = scalar_lea.vmem %s3, %s186
      %v188 = vld [vmem:[%s176] sm:$0xff]
      %v189 = vld [vmem:[%s176 + $0x8] sm:$0xff]
      %v190 = vld [vmem:[%s176 + $0x10] sm:$0xff]
      %v191 = vld [vmem:[%s176 + $0x18] sm:$0xff]
      %v192 = vld [vmem:[%s176 + $0x20] sm:$0xff]
      %v193 = vld [vmem:[%s176 + $0x28] sm:$0xff]
      %v194 = vld [vmem:[%s176 + $0x30] sm:$0xff]
      %v195 = vld [vmem:[%s176 + $0x38] sm:$0xff]
      %v196 = vld [vmem:[%s176 + $0x40] sm:$0xff]
      %v197 = vld [vmem:[%s176 + $0x48] sm:$0xff]
      %v198 = vld [vmem:[%s176 + $0x50] sm:$0xff]
      %v199 = vld [vmem:[%s176 + $0x58] sm:$0xff]
      %v200 = vld [vmem:[%s176 + $0x60] sm:$0xff]
      %v201 = vld [vmem:[%s176 + $0x68] sm:$0xff]
      %v202 = vld [vmem:[%s176 + $0x70] sm:$0xff]
      %v203 = vld [vmem:[%s176 + $0x78] sm:$0xff]
      %v204 = vld [vmem:[%s176 + $0x80] sm:$0xff]
      %v205 = vld [vmem:[%s176 + $0x88] sm:$0xff]
      %v206 = vld [vmem:[%s176 + $0x90] sm:$0xff]
      %v207 = vld [vmem:[%s176 + $0x98] sm:$0xff]
      %v208 = vld [vmem:[%s176 + $0xa0] sm:$0xff]
      %v209 = vld [vmem:[%s176 + $0xa8] sm:$0xff]
      %v210 = vld [vmem:[%s176 + $0xb0] sm:$0xff]
      %v211 = vld [vmem:[%s176 + $0xb8] sm:$0xff]
      %v212 = vld [vmem:[%s176 + $0xc0] sm:$0xff]
      %v213 = vld [vmem:[%s176 + $0xc8] sm:$0xff]
      %v214 = vld [vmem:[%s176 + $0xd0] sm:$0xff]
      %v215 = vld [vmem:[%s176 + $0xd8] sm:$0xff]
      %v216 = vld [vmem:[%s176 + $0xe0] sm:$0xff]
      %v217 = vld [vmem:[%s176 + $0xe8] sm:$0xff]
      %v218 = vld [vmem:[%s176 + $0xf0] sm:$0xff]
      %v219 = vld [vmem:[%s176 + $0xf8] sm:$0xff]
      %v220 = vld [vmem:[%s176 + $0x100] sm:$0xff]
      %v221 = vld [vmem:[%s176 + $0x108] sm:$0xff]
      %v222 = vld [vmem:[%s176 + $0x110] sm:$0xff]
      %v223 = vld [vmem:[%s176 + $0x118] sm:$0xff]
      %v224 = vld [vmem:[%s176 + $0x120] sm:$0xff]
      %v225 = vld [vmem:[%s176 + $0x128] sm:$0xff]
      %v226 = vld [vmem:[%s176 + $0x130] sm:$0xff]
      %v227 = vld [vmem:[%s176 + $0x138] sm:$0xff]
      %v228 = vld [vmem:[%s176 + $0x140] sm:$0xff]
      %v229 = vld [vmem:[%s176 + $0x148] sm:$0xff]
      %v230 = vld [vmem:[%s176 + $0x150] sm:$0xff]
      %v231 = vld [vmem:[%s176 + $0x158] sm:$0xff]
      %v232 = vld [vmem:[%s176 + $0x160] sm:$0xff]
      %v233 = vld [vmem:[%s176 + $0x168] sm:$0xff]
      %v234 = vld [vmem:[%s176 + $0x170] sm:$0xff]
      %v235 = vld [vmem:[%s176 + $0x178] sm:$0xff]
      %v236 = vld [vmem:[%s176 + $0x180] sm:$0xff]
      %v237 = vld [vmem:[%s176 + $0x188] sm:$0xff]
      %v238 = vld [vmem:[%s176 + $0x190] sm:$0xff]
      %v239 = vld [vmem:[%s176 + $0x198] sm:$0xff]
      %v240 = vld [vmem:[%s176 + $0x1a0] sm:$0xff]
      %v241 = vld [vmem:[%s176 + $0x1a8] sm:$0xff]
      %v242 = vld [vmem:[%s176 + $0x1b0] sm:$0xff]
      %v243 = vld [vmem:[%s176 + $0x1b8] sm:$0xff]
      %v244 = vld [vmem:[%s176 + $0x1c0] sm:$0xff]
      %v245 = vld [vmem:[%s176 + $0x1c8] sm:$0xff]
      %v246 = vld [vmem:[%s176 + $0x1d0] sm:$0xff]
      %v247 = vld [vmem:[%s176 + $0x1d8] sm:$0xff]
      %v248 = vld [vmem:[%s176 + $0x1e0] sm:$0xff]
      %v249 = vld [vmem:[%s176 + $0x1e8] sm:$0xff]
      %v250 = vld [vmem:[%s176 + $0x1f0] sm:$0xff]
      %v251 = vld [vmem:[%s176 + $0x1f8] sm:$0xff]
      %v252 = vld [vmem:[%s1] sm:$0xf]
      %v253 = vld [vmem:[%s1 + $0x4] sm:$0xf]
      %v254 = vld [vmem:[%s1 + $0x8] sm:$0xf]
      %v255 = vld [vmem:[%s1 + $0xc] sm:$0xf]
      %v256 = vld [vmem:[%s1 + $0x10] sm:$0xf]
      %v257 = vld [vmem:[%s1 + $0x14] sm:$0xf]
      %v258 = vld [vmem:[%s1 + $0x18] sm:$0xf]
      %v259 = vld [vmem:[%s1 + $0x1c] sm:$0xf]
      %v260 = vld [vmem:[%s1 + $0x20] sm:$0xf]
      %v261 = vld [vmem:[%s1 + $0x24] sm:$0xf]
      %v262 = vld [vmem:[%s1 + $0x28] sm:$0xf]
      %v263 = vld [vmem:[%s1 + $0x2c] sm:$0xf]
      %v264 = vld [vmem:[%s1 + $0x30] sm:$0xf]
      %v265 = vld [vmem:[%s1 + $0x34] sm:$0xf]
      %v266 = vld [vmem:[%s1 + $0x38] sm:$0xf]
      %v267 = vld [vmem:[%s1 + $0x3c] sm:$0xf]
      %v268 = vld [vmem:[%s1 + $0x40] sm:$0xf]
      %v269 = vld [vmem:[%s1 + $0x44] sm:$0xf]
      %v270 = vld [vmem:[%s1 + $0x48] sm:$0xf]
      %v271 = vld [vmem:[%s1 + $0x4c] sm:$0xf]
      %v272 = vld [vmem:[%s1 + $0x50] sm:$0xf]
      %v273 = vld [vmem:[%s1 + $0x54] sm:$0xf]
      %v274 = vld [vmem:[%s1 + $0x58] sm:$0xf]
      %v275 = vld [vmem:[%s1 + $0x5c] sm:$0xf]
      %v276 = vld [vmem:[%s1 + $0x60] sm:$0xf]
      %v277 = vld [vmem:[%s1 + $0x64] sm:$0xf]
      %v278 = vld [vmem:[%s1 + $0x68] sm:$0xf]
      %v279 = vld [vmem:[%s1 + $0x6c] sm:$0xf]
      %v280 = vld [vmem:[%s1 + $0x70] sm:$0xf]
      %v281 = vld [vmem:[%s1 + $0x74] sm:$0xf]
      %v282 = vld [vmem:[%s1 + $0x78] sm:$0xf]
      %v283 = vld [vmem:[%s1 + $0x7c] sm:$0xf]
      %v348 = vunpack.c.l.b16 %v188
      %v349 = vunpack.c.h.b16 %v188
      %v350 = vunpack.c.l.b16 %v189
      %v351 = vunpack.c.h.b16 %v189
      %v352 = vunpack.c.l.b16 %v190
      %v353 = vunpack.c.h.b16 %v190
      %v354 = vunpack.c.l.b16 %v191
      %v355 = vunpack.c.h.b16 %v191
      %v356 = vunpack.c.l.b16 %v192
      %v357 = vunpack.c.h.b16 %v192
      %v358 = vunpack.c.l.b16 %v193
      %v359 = vunpack.c.h.b16 %v193
      %v360 = vunpack.c.l.b16 %v194
      %v361 = vunpack.c.h.b16 %v194
      %v362 = vunpack.c.l.b16 %v195
      %v363 = vunpack.c.h.b16 %v195
      %v364 = vunpack.c.l.b16 %v196
      %v365 = vunpack.c.h.b16 %v196
      %v366 = vunpack.c.l.b16 %v197
      %v367 = vunpack.c.h.b16 %v197
      %v368 = vunpack.c.l.b16 %v198
      %v369 = vunpack.c.h.b16 %v198
      %v370 = vunpack.c.l.b16 %v199
      %v371 = vunpack.c.h.b16 %v199
      %v372 = vunpack.c.l.b16 %v200
      %v373 = vunpack.c.h.b16 %v200
      %v374 = vunpack.c.l.b16 %v201
      %v375 = vunpack.c.h.b16 %v201
      %v376 = vunpack.c.l.b16 %v202
      %v377 = vunpack.c.h.b16 %v202
      %v378 = vunpack.c.l.b16 %v203
      %v379 = vunpack.c.h.b16 %v203
      %v380 = vunpack.c.l.b16 %v204
      %v381 = vunpack.c.h.b16 %v204
      %v382 = vunpack.c.l.b16 %v205
      %v383 = vunpack.c.h.b16 %v205
      %v384 = vunpack.c.l.b16 %v206
      %v385 = vunpack.c.h.b16 %v206
      %v386 = vunpack.c.l.b16 %v207
      %v387 = vunpack.c.h.b16 %v207
      %v388 = vunpack.c.l.b16 %v208
      %v389 = vunpack.c.h.b16 %v208
      %v390 = vunpack.c.l.b16 %v209
      %v391 = vunpack.c.h.b16 %v209
      %v392 = vunpack.c.l.b16 %v210
      %v393 = vunpack.c.h.b16 %v210
      %v394 = vunpack.c.l.b16 %v211
      %v395 = vunpack.c.h.b16 %v211
      %v396 = vunpack.c.l.b16 %v212
      %v397 = vunpack.c.h.b16 %v212
      %v398 = vunpack.c.l.b16 %v213
      %v399 = vunpack.c.h.b16 %v213
      %v400 = vunpack.c.l.b16 %v214
      %v401 = vunpack.c.h.b16 %v214
      %v402 = vunpack.c.l.b16 %v215
      %v403 = vunpack.c.h.b16 %v215
      %v404 = vunpack.c.l.b16 %v216
      %v405 = vunpack.c.h.b16 %v216
      %v406 = vunpack.c.l.b16 %v217
      %v407 = vunpack.c.h.b16 %v217
      %v408 = vunpack.c.l.b16 %v218
      %v409 = vunpack.c.h.b16 %v218
      %v410 = vunpack.c.l.b16 %v219
      %v411 = vunpack.c.h.b16 %v219
      %v412 = vunpack.c.l.b16 %v220
      %v413 = vunpack.c.h.b16 %v220
      %v414 = vunpack.c.l.b16 %v221
      %v415 = vunpack.c.h.b16 %v221
      %v416 = vunpack.c.l.b16 %v222
      %v417 = vunpack.c.h.b16 %v222
      %v418 = vunpack.c.l.b16 %v223
      %v419 = vunpack.c.h.b16 %v223
      %v420 = vunpack.c.l.b16 %v224
      %v421 = vunpack.c.h.b16 %v224
      %v422 = vunpack.c.l.b16 %v225
      %v423 = vunpack.c.h.b16 %v225
      %v424 = vunpack.c.l.b16 %v226
      %v425 = vunpack.c.h.b16 %v226
      %v426 = vunpack.c.l.b16 %v227
      %v427 = vunpack.c.h.b16 %v227
      %v428 = vunpack.c.l.b16 %v228
      %v429 = vunpack.c.h.b16 %v228
      %v430 = vunpack.c.l.b16 %v229
      %v431 = vunpack.c.h.b16 %v229
      %v432 = vunpack.c.l.b16 %v230
      %v433 = vunpack.c.h.b16 %v230
      %v434 = vunpack.c.l.b16 %v231
      %v435 = vunpack.c.h.b16 %v231
      %v436 = vunpack.c.l.b16 %v232
      %v437 = vunpack.c.h.b16 %v232
      %v438 = vunpack.c.l.b16 %v233
      %v439 = vunpack.c.h.b16 %v233
      %v440 = vunpack.c.l.b16 %v234
      %v441 = vunpack.c.h.b16 %v234
      %v442 = vunpack.c.l.b16 %v235
      %v443 = vunpack.c.h.b16 %v235
      %v444 = vunpack.c.l.b16 %v236
      %v445 = vunpack.c.h.b16 %v236
      %v446 = vunpack.c.l.b16 %v237
      %v447 = vunpack.c.h.b16 %v237
      %v448 = vunpack.c.l.b16 %v238
      %v449 = vunpack.c.h.b16 %v238
      %v450 = vunpack.c.l.b16 %v239
      %v451 = vunpack.c.h.b16 %v239
      %v452 = vunpack.c.l.b16 %v240
      %v453 = vunpack.c.h.b16 %v240
      %v454 = vunpack.c.l.b16 %v241
      %v455 = vunpack.c.h.b16 %v241
      %v456 = vunpack.c.l.b16 %v242
      %v457 = vunpack.c.h.b16 %v242
      %v458 = vunpack.c.l.b16 %v243
      %v459 = vunpack.c.h.b16 %v243
      %v460 = vunpack.c.l.b16 %v244
      %v461 = vunpack.c.h.b16 %v244
      %v462 = vunpack.c.l.b16 %v245
      %v463 = vunpack.c.h.b16 %v245
      %v464 = vunpack.c.l.b16 %v246
      %v465 = vunpack.c.h.b16 %v246
      %v466 = vunpack.c.l.b16 %v247
      %v467 = vunpack.c.h.b16 %v247
      %v468 = vunpack.c.l.b16 %v248
      %v469 = vunpack.c.h.b16 %v248
      %v470 = vunpack.c.l.b16 %v249
      %v471 = vunpack.c.h.b16 %v249
      %v472 = vunpack.c.l.b16 %v250
      %v473 = vunpack.c.h.b16 %v250
      %v474 = vunpack.c.l.b16 %v251
      %v475 = vunpack.c.h.b16 %v251
      %v476 = vpack.c.b16 %v350, %v348
      %v477 = vpack.c.b16 %v351, %v349
      %v478 = vpack.c.b16 %v354, %v352
      %v479 = vpack.c.b16 %v355, %v353
      %v480 = vpack.c.b16 %v358, %v356
      %v481 = vpack.c.b16 %v359, %v357
      %v482 = vpack.c.b16 %v362, %v360
      %v483 = vpack.c.b16 %v363, %v361
      %v484 = vpack.c.b16 %v366, %v364
      %v485 = vpack.c.b16 %v367, %v365
      %v486 = vpack.c.b16 %v370, %v368
      %v487 = vpack.c.b16 %v371, %v369
      %v488 = vpack.c.b16 %v374, %v372
      %v489 = vpack.c.b16 %v375, %v373
      %v490 = vpack.c.b16 %v378, %v376
      %v491 = vpack.c.b16 %v379, %v377
      %v492 = vpack.c.b16 %v382, %v380
      %v493 = vpack.c.b16 %v383, %v381
      %v494 = vpack.c.b16 %v386, %v384
      %v495 = vpack.c.b16 %v387, %v385
      %v496 = vpack.c.b16 %v390, %v388
      %v497 = vpack.c.b16 %v391, %v389
      %v498 = vpack.c.b16 %v394, %v392
      %v499 = vpack.c.b16 %v395, %v393
      %v500 = vpack.c.b16 %v398, %v396
      %v501 = vpack.c.b16 %v399, %v397
      %v502 = vpack.c.b16 %v402, %v400
      %v503 = vpack.c.b16 %v403, %v401
      %v504 = vpack.c.b16 %v406, %v404
      %v505 = vpack.c.b16 %v407, %v405
      %v506 = vpack.c.b16 %v410, %v408
      %v507 = vpack.c.b16 %v411, %v409
      %v508 = vpack.c.b16 %v414, %v412
      %v509 = vpack.c.b16 %v415, %v413
      %v510 = vpack.c.b16 %v418, %v416
      %v511 = vpack.c.b16 %v419, %v417
      %v512 = vpack.c.b16 %v422, %v420
      %v513 = vpack.c.b16 %v423, %v421
      %v514 = vpack.c.b16 %v426, %v424
      %v515 = vpack.c.b16 %v427, %v425
      %v516 = vpack.c.b16 %v430, %v428
      %v517 = vpack.c.b16 %v431, %v429
      %v518 = vpack.c.b16 %v434, %v432
      %v519 = vpack.c.b16 %v435, %v433
      %v520 = vpack.c.b16 %v438, %v436
      %v521 = vpack.c.b16 %v439, %v437
      %v522 = vpack.c.b16 %v442, %v440
      %v523 = vpack.c.b16 %v443, %v441
      %v524 = vpack.c.b16 %v446, %v444
      %v525 = vpack.c.b16 %v447, %v445
      %v526 = vpack.c.b16 %v450, %v448
      %v527 = vpack.c.b16 %v451, %v449
      %v528 = vpack.c.b16 %v454, %v452
      %v529 = vpack.c.b16 %v455, %v453
      %v530 = vpack.c.b16 %v458, %v456
      %v531 = vpack.c.b16 %v459, %v457
      %v532 = vpack.c.b16 %v462, %v460
      %v533 = vpack.c.b16 %v463, %v461
      %v534 = vpack.c.b16 %v466, %v464
      %v535 = vpack.c.b16 %v467, %v465
      %v536 = vpack.c.b16 %v470, %v468
      %v537 = vpack.c.b16 %v471, %v469
      %v538 = vpack.c.b16 %v474, %v472
      %v539 = vpack.c.b16 %v475, %v473
      %v636 = vunpack.c.l.b16 %v252
      %v637 = vunpack.c.l.b16 %v253
      %v638 = vunpack.c.l.b16 %v254
      %v639 = vunpack.c.l.b16 %v255
      %v640 = vunpack.c.l.b16 %v256
      %v641 = vunpack.c.l.b16 %v257
      %v642 = vunpack.c.l.b16 %v258
      %v643 = vunpack.c.l.b16 %v259
      %v644 = vunpack.c.l.b16 %v260
      %v645 = vunpack.c.l.b16 %v261
      %v646 = vunpack.c.l.b16 %v262
      %v647 = vunpack.c.l.b16 %v263
      %v648 = vunpack.c.l.b16 %v264
      %v649 = vunpack.c.l.b16 %v265
      %v650 = vunpack.c.l.b16 %v266
      %v651 = vunpack.c.l.b16 %v267
      %v652 = vunpack.c.l.b16 %v268
      %v653 = vunpack.c.l.b16 %v269
      %v654 = vunpack.c.l.b16 %v270
      %v655 = vunpack.c.l.b16 %v271
      %v656 = vunpack.c.l.b16 %v272
      %v657 = vunpack.c.l.b16 %v273
      %v658 = vunpack.c.l.b16 %v274
      %v659 = vunpack.c.l.b16 %v275
      %v660 = vunpack.c.l.b16 %v276
      %v661 = vunpack.c.l.b16 %v277
      %v662 = vunpack.c.l.b16 %v278
      %v663 = vunpack.c.l.b16 %v279
      %v664 = vunpack.c.l.b16 %v280
      %v665 = vunpack.c.l.b16 %v281
      %v666 = vunpack.c.l.b16 %v282
      %v667 = vunpack.c.l.b16 %v283
      %v668 = vpack.c.b16 %v637, %v636
      %v669 = vpack.c.b16 %v639, %v638
      %v670 = vpack.c.b16 %v641, %v640
      %v671 = vpack.c.b16 %v643, %v642
      %v672 = vpack.c.b16 %v645, %v644
      %v673 = vpack.c.b16 %v647, %v646
      %v674 = vpack.c.b16 %v649, %v648
      %v675 = vpack.c.b16 %v651, %v650
      %v676 = vpack.c.b16 %v653, %v652
      %v677 = vpack.c.b16 %v655, %v654
      %v678 = vpack.c.b16 %v657, %v656
      %v679 = vpack.c.b16 %v659, %v658
      %v680 = vpack.c.b16 %v661, %v660
      %v681 = vpack.c.b16 %v663, %v662
      %v682 = vpack.c.b16 %v665, %v664
      %v683 = vpack.c.b16 %v667, %v666
      %700 = vmatpush.bf16.msra.mxu0 %v675
      %701 = vmatpush.bf16.msra.mxu0 %v674
      %702 = vmatpush.bf16.msra.mxu0 %v673
      %703 = vmatpush.bf16.msra.mxu0 %v672
      %704 = vmatpush.bf16.msra.mxu0 %v671
      %705 = vmatpush.bf16.msra.mxu0 %v670
      %706 = vmatpush.bf16.msra.mxu0 %v669
      %707 = vmatpush.bf16.msra.mxu0 %v668
      %708 = vmatmul.bf16.gmra.mxu0 %v476
      %v709 = vpop.f32.mrf.mxu0
      %v710 = vadd.f32 0.0, %v709
      %v711 = vpop.f32.mrf.mxu0
      %v712 = vadd.f32 0.0, %v711
      %713 = vmatmul.bf16.gmra.mxu0 %v478
      %v714 = vpop.f32.mrf.mxu0
      %v715 = vadd.f32 0.0, %v714
      %v716 = vpop.f32.mrf.mxu0
      %v717 = vadd.f32 0.0, %v716
      %718 = vmatmul.bf16.gmra.mxu0 %v480
      %v719 = vpop.f32.mrf.mxu0
      %v720 = vadd.f32 0.0, %v719
      %v721 = vpop.f32.mrf.mxu0
      %v722 = vadd.f32 0.0, %v721
      %723 = vmatmul.bf16.gmra.mxu0 %v482
      %v724 = vpop.f32.mrf.mxu0
      %v725 = vadd.f32 0.0, %v724
      %v726 = vpop.f32.mrf.mxu0
      %v727 = vadd.f32 0.0, %v726
      %728 = vmatmul.bf16.gmra.mxu0 %v484
      %v729 = vpop.f32.mrf.mxu0
      %v730 = vadd.f32 0.0, %v729
      %v731 = vpop.f32.mrf.mxu0
      %v732 = vadd.f32 0.0, %v731
      %733 = vmatmul.bf16.gmra.mxu0 %v486
      %v734 = vpop.f32.mrf.mxu0
      %v735 = vadd.f32 0.0, %v734
      %v736 = vpop.f32.mrf.mxu0
      %v737 = vadd.f32 0.0, %v736
      %738 = vmatmul.bf16.gmra.mxu0 %v488
      %v739 = vpop.f32.mrf.mxu0
      %v740 = vadd.f32 0.0, %v739
      %v741 = vpop.f32.mrf.mxu0
      %v742 = vadd.f32 0.0, %v741
      %743 = vmatmul.bf16.gmra.mxu0 %v490
      %v744 = vpop.f32.mrf.mxu0
      %v745 = vadd.f32 0.0, %v744
      %v746 = vpop.f32.mrf.mxu0
      %v747 = vadd.f32 0.0, %v746
      %748 = vmatmul.bf16.gmra.mxu0 %v492
      %v749 = vpop.f32.mrf.mxu0
      %v750 = vadd.f32 0.0, %v749
      %v751 = vpop.f32.mrf.mxu0
      %v752 = vadd.f32 0.0, %v751
      %753 = vmatmul.bf16.gmra.mxu0 %v494
      %v754 = vpop.f32.mrf.mxu0
      %v755 = vadd.f32 0.0, %v754
      %v756 = vpop.f32.mrf.mxu0
      %v757 = vadd.f32 0.0, %v756
      %758 = vmatmul.bf16.gmra.mxu0 %v496
      %v759 = vpop.f32.mrf.mxu0
      %v760 = vadd.f32 0.0, %v759
      %v761 = vpop.f32.mrf.mxu0
      %v762 = vadd.f32 0.0, %v761
      %763 = vmatmul.bf16.gmra.mxu0 %v498
      %v764 = vpop.f32.mrf.mxu0
      %v765 = vadd.f32 0.0, %v764
      %v766 = vpop.f32.mrf.mxu0
      %v767 = vadd.f32 0.0, %v766
      %768 = vmatmul.bf16.gmra.mxu0 %v500
      %v769 = vpop.f32.mrf.mxu0
      %v770 = vadd.f32 0.0, %v769
      %v771 = vpop.f32.mrf.mxu0
      %v772 = vadd.f32 0.0, %v771
      %773 = vmatmul.bf16.gmra.mxu0 %v502
      %v774 = vpop.f32.mrf.mxu0
      %v775 = vadd.f32 0.0, %v774
      %v776 = vpop.f32.mrf.mxu0
      %v777 = vadd.f32 0.0, %v776
      %778 = vmatmul.bf16.gmra.mxu0 %v504
      %v779 = vpop.f32.mrf.mxu0
      %v780 = vadd.f32 0.0, %v779
      %v781 = vpop.f32.mrf.mxu0
      %v782 = vadd.f32 0.0, %v781
      %783 = vmatmul.bf16.gmra.mxu0 %v506
      %v784 = vpop.f32.mrf.mxu0
      %v785 = vadd.f32 0.0, %v784
      %v786 = vpop.f32.mrf.mxu0
      %v787 = vadd.f32 0.0, %v786
      %788 = vmatmul.bf16.gmra.mxu0 %v508
      %v789 = vpop.f32.mrf.mxu0
      %v790 = vadd.f32 0.0, %v789
      %v791 = vpop.f32.mrf.mxu0
      %v792 = vadd.f32 0.0, %v791
      %793 = vmatmul.bf16.gmra.mxu0 %v510
      %v794 = vpop.f32.mrf.mxu0
      %v795 = vadd.f32 0.0, %v794
      %v796 = vpop.f32.mrf.mxu0
      %v797 = vadd.f32 0.0, %v796
      %798 = vmatmul.bf16.gmra.mxu0 %v512
      %v799 = vpop.f32.mrf.mxu0
      %v800 = vadd.f32 0.0, %v799
      %v801 = vpop.f32.mrf.mxu0
      %v802 = vadd.f32 0.0, %v801
      %803 = vmatmul.bf16.gmra.mxu0 %v514
      %v804 = vpop.f32.mrf.mxu0
      %v805 = vadd.f32 0.0, %v804
      %v806 = vpop.f32.mrf.mxu0
      %v807 = vadd.f32 0.0, %v806
      %808 = vmatmul.bf16.gmra.mxu0 %v516
      %v809 = vpop.f32.mrf.mxu0
      %v810 = vadd.f32 0.0, %v809
      %v811 = vpop.f32.mrf.mxu0
      %v812 = vadd.f32 0.0, %v811
      %813 = vmatmul.bf16.gmra.mxu0 %v518
      %v814 = vpop.f32.mrf.mxu0
      %v815 = vadd.f32 0.0, %v814
      %v816 = vpop.f32.mrf.mxu0
      %v817 = vadd.f32 0.0, %v816
      %818 = vmatmul.bf16.gmra.mxu0 %v520
      %v819 = vpop.f32.mrf.mxu0
      %v820 = vadd.f32 0.0, %v819
      %v821 = vpop.f32.mrf.mxu0
      %v822 = vadd.f32 0.0, %v821
      %823 = vmatmul.bf16.gmra.mxu0 %v522
      %v824 = vpop.f32.mrf.mxu0
      %v825 = vadd.f32 0.0, %v824
      %v826 = vpop.f32.mrf.mxu0
      %v827 = vadd.f32 0.0, %v826
      %828 = vmatmul.bf16.gmra.mxu0 %v524
      %v829 = vpop.f32.mrf.mxu0
      %v830 = vadd.f32 0.0, %v829
      %v831 = vpop.f32.mrf.mxu0
      %v832 = vadd.f32 0.0, %v831
      %833 = vmatmul.bf16.gmra.mxu0 %v526
      %v834 = vpop.f32.mrf.mxu0
      %v835 = vadd.f32 0.0, %v834
      %v836 = vpop.f32.mrf.mxu0
      %v837 = vadd.f32 0.0, %v836
      %838 = vmatmul.bf16.gmra.mxu0 %v528
      %v839 = vpop.f32.mrf.mxu0
      %v840 = vadd.f32 0.0, %v839
      %v841 = vpop.f32.mrf.mxu0
      %v842 = vadd.f32 0.0, %v841
      %843 = vmatmul.bf16.gmra.mxu0 %v530
      %v844 = vpop.f32.mrf.mxu0
      %v845 = vadd.f32 0.0, %v844
      %v846 = vpop.f32.mrf.mxu0
      %v847 = vadd.f32 0.0, %v846
      %848 = vmatmul.bf16.gmra.mxu0 %v532
      %v849 = vpop.f32.mrf.mxu0
      %v850 = vadd.f32 0.0, %v849
      %v851 = vpop.f32.mrf.mxu0
      %v852 = vadd.f32 0.0, %v851
      %853 = vmatmul.bf16.gmra.mxu0 %v534
      %v854 = vpop.f32.mrf.mxu0
      %v855 = vadd.f32 0.0, %v854
      %v856 = vpop.f32.mrf.mxu0
      %v857 = vadd.f32 0.0, %v856
      %858 = vmatmul.bf16.gmra.mxu0 %v536
      %v859 = vpop.f32.mrf.mxu0
      %v860 = vadd.f32 0.0, %v859
      %v861 = vpop.f32.mrf.mxu0
      %v862 = vadd.f32 0.0, %v861
      %863 = vmatmul.bf16.gmra.mxu0 %v538
      %v864 = vpop.f32.mrf.mxu0
      %v865 = vadd.f32 0.0, %v864
      %v866 = vpop.f32.mrf.mxu0
      %v867 = vadd.f32 0.0, %v866
      %868 = vdwg.mxu0
      %869 = vmatpush.bf16.msra.mxu0 %v683
      %870 = vmatpush.bf16.msra.mxu0 %v682
      %871 = vmatpush.bf16.msra.mxu0 %v681
      %872 = vmatpush.bf16.msra.mxu0 %v680
      %873 = vmatpush.bf16.msra.mxu0 %v679
      %874 = vmatpush.bf16.msra.mxu0 %v678
      %875 = vmatpush.bf16.msra.mxu0 %v677
      %876 = vmatpush.bf16.msra.mxu0 %v676
      %877 = vmatmul.bf16.gmra.mxu0 %v477
      %v878 = vpop.f32.mrf.mxu0
      %v879 = vadd.f32 %v710, %v878
      %v880 = vpop.f32.mrf.mxu0
      %v881 = vadd.f32 %v712, %v880
      %882 = vmatmul.bf16.gmra.mxu0 %v479
      %v883 = vpop.f32.mrf.mxu0
      %v884 = vadd.f32 %v715, %v883
      %v885 = vpop.f32.mrf.mxu0
      %v886 = vadd.f32 %v717, %v885
      %887 = vmatmul.bf16.gmra.mxu0 %v481
      %v888 = vpop.f32.mrf.mxu0
      %v889 = vadd.f32 %v720, %v888
      %v890 = vpop.f32.mrf.mxu0
      %v891 = vadd.f32 %v722, %v890
      %892 = vmatmul.bf16.gmra.mxu0 %v483
      %v893 = vpop.f32.mrf.mxu0
      %v894 = vadd.f32 %v725, %v893
      %v895 = vpop.f32.mrf.mxu0
      %v896 = vadd.f32 %v727, %v895
      %897 = vmatmul.bf16.gmra.mxu0 %v485
      %v898 = vpop.f32.mrf.mxu0
      %v899 = vadd.f32 %v730, %v898
      %v900 = vpop.f32.mrf.mxu0
      %v901 = vadd.f32 %v732, %v900
      %902 = vmatmul.bf16.gmra.mxu0 %v487
      %v903 = vpop.f32.mrf.mxu0
      %v904 = vadd.f32 %v735, %v903
      %v905 = vpop.f32.mrf.mxu0
      %v906 = vadd.f32 %v737, %v905
      %907 = vmatmul.bf16.gmra.mxu0 %v489
      %v908 = vpop.f32.mrf.mxu0
      %v909 = vadd.f32 %v740, %v908
      %v910 = vpop.f32.mrf.mxu0
      %v911 = vadd.f32 %v742, %v910
      %912 = vmatmul.bf16.gmra.mxu0 %v491
      %v913 = vpop.f32.mrf.mxu0
      %v914 = vadd.f32 %v745, %v913
      %v915 = vpop.f32.mrf.mxu0
      %v916 = vadd.f32 %v747, %v915
      %917 = vmatmul.bf16.gmra.mxu0 %v493
      %v918 = vpop.f32.mrf.mxu0
      %v919 = vadd.f32 %v750, %v918
      %v920 = vpop.f32.mrf.mxu0
      %v921 = vadd.f32 %v752, %v920
      %922 = vmatmul.bf16.gmra.mxu0 %v495
      %v923 = vpop.f32.mrf.mxu0
      %v924 = vadd.f32 %v755, %v923
      %v925 = vpop.f32.mrf.mxu0
      %v926 = vadd.f32 %v757, %v925
      %927 = vmatmul.bf16.gmra.mxu0 %v497
      %v928 = vpop.f32.mrf.mxu0
      %v929 = vadd.f32 %v760, %v928
      %v930 = vpop.f32.mrf.mxu0
      %v931 = vadd.f32 %v762, %v930
      %932 = vmatmul.bf16.gmra.mxu0 %v499
      %v933 = vpop.f32.mrf.mxu0
      %v934 = vadd.f32 %v765, %v933
      %v935 = vpop.f32.mrf.mxu0
      %v936 = vadd.f32 %v767, %v935
      %937 = vmatmul.bf16.gmra.mxu0 %v501
      %v938 = vpop.f32.mrf.mxu0
      %v939 = vadd.f32 %v770, %v938
      %v940 = vpop.f32.mrf.mxu0
      %v941 = vadd.f32 %v772, %v940
      %942 = vmatmul.bf16.gmra.mxu0 %v503
      %v943 = vpop.f32.mrf.mxu0
      %v944 = vadd.f32 %v775, %v943
      %v945 = vpop.f32.mrf.mxu0
      %v946 = vadd.f32 %v777, %v945
      %947 = vmatmul.bf16.gmra.mxu0 %v505
      %v948 = vpop.f32.mrf.mxu0
      %v949 = vadd.f32 %v780, %v948
      %v950 = vpop.f32.mrf.mxu0
      %v951 = vadd.f32 %v782, %v950
      %952 = vmatmul.bf16.gmra.mxu0 %v507
      %v953 = vpop.f32.mrf.mxu0
      %v954 = vadd.f32 %v785, %v953
      %v955 = vpop.f32.mrf.mxu0
      %v956 = vadd.f32 %v787, %v955
      %957 = vmatmul.bf16.gmra.mxu0 %v509
      %v958 = vpop.f32.mrf.mxu0
      %v959 = vadd.f32 %v790, %v958
      %v960 = vpop.f32.mrf.mxu0
      %v961 = vadd.f32 %v792, %v960
      %962 = vmatmul.bf16.gmra.mxu0 %v511
      %v963 = vpop.f32.mrf.mxu0
      %v964 = vadd.f32 %v795, %v963
      %v965 = vpop.f32.mrf.mxu0
      %v966 = vadd.f32 %v797, %v965
      %967 = vmatmul.bf16.gmra.mxu0 %v513
      %v968 = vpop.f32.mrf.mxu0
      %v969 = vadd.f32 %v800, %v968
      %v970 = vpop.f32.mrf.mxu0
      %v971 = vadd.f32 %v802, %v970
      %972 = vmatmul.bf16.gmra.mxu0 %v515
      %v973 = vpop.f32.mrf.mxu0
      %v974 = vadd.f32 %v805, %v973
      %v975 = vpop.f32.mrf.mxu0
      %v976 = vadd.f32 %v807, %v975
      %977 = vmatmul.bf16.gmra.mxu0 %v517
      %v978 = vpop.f32.mrf.mxu0
      %v979 = vadd.f32 %v810, %v978
      %v980 = vpop.f32.mrf.mxu0
      %v981 = vadd.f32 %v812, %v980
      %982 = vmatmul.bf16.gmra.mxu0 %v519
      %v983 = vpop.f32.mrf.mxu0
      %v984 = vadd.f32 %v815, %v983
      %v985 = vpop.f32.mrf.mxu0
      %v986 = vadd.f32 %v817, %v985
      %987 = vmatmul.bf16.gmra.mxu0 %v521
      %v988 = vpop.f32.mrf.mxu0
      %v989 = vadd.f32 %v820, %v988
      %v990 = vpop.f32.mrf.mxu0
      %v991 = vadd.f32 %v822, %v990
      %992 = vmatmul.bf16.gmra.mxu0 %v523
      %v993 = vpop.f32.mrf.mxu0
      %v994 = vadd.f32 %v825, %v993
      %v995 = vpop.f32.mrf.mxu0
      %v996 = vadd.f32 %v827, %v995
      %997 = vmatmul.bf16.gmra.mxu0 %v525
      %v998 = vpop.f32.mrf.mxu0
      %v999 = vadd.f32 %v830, %v998
      %v1000 = vpop.f32.mrf.mxu0
      %v1001 = vadd.f32 %v832, %v1000
      %1002 = vmatmul.bf16.gmra.mxu0 %v527
      %v1003 = vpop.f32.mrf.mxu0
      %v1004 = vadd.f32 %v835, %v1003
      %v1005 = vpop.f32.mrf.mxu0
      %v1006 = vadd.f32 %v837, %v1005
      %1007 = vmatmul.bf16.gmra.mxu0 %v529
      %v1008 = vpop.f32.mrf.mxu0
      %v1009 = vadd.f32 %v840, %v1008
      %v1010 = vpop.f32.mrf.mxu0
      %v1011 = vadd.f32 %v842, %v1010
      %1012 = vmatmul.bf16.gmra.mxu0 %v531
      %v1013 = vpop.f32.mrf.mxu0
      %v1014 = vadd.f32 %v845, %v1013
      %v1015 = vpop.f32.mrf.mxu0
      %v1016 = vadd.f32 %v847, %v1015
      %1017 = vmatmul.bf16.gmra.mxu0 %v533
      %v1018 = vpop.f32.mrf.mxu0
      %v1019 = vadd.f32 %v850, %v1018
      %v1020 = vpop.f32.mrf.mxu0
      %v1021 = vadd.f32 %v852, %v1020
      %1022 = vmatmul.bf16.gmra.mxu0 %v535
      %v1023 = vpop.f32.mrf.mxu0
      %v1024 = vadd.f32 %v855, %v1023
      %v1025 = vpop.f32.mrf.mxu0
      %v1026 = vadd.f32 %v857, %v1025
      %1027 = vmatmul.bf16.gmra.mxu0 %v537
      %v1028 = vpop.f32.mrf.mxu0
      %v1029 = vadd.f32 %v860, %v1028
      %v1030 = vpop.f32.mrf.mxu0
      %v1031 = vadd.f32 %v862, %v1030
      %1032 = vmatmul.bf16.gmra.mxu0 %v539
      %v1033 = vpop.f32.mrf.mxu0
      %v1034 = vadd.f32 %v865, %v1033
      %v1035 = vpop.f32.mrf.mxu0
      %v1036 = vadd.f32 %v867, %v1035
      %1037 = vdwg.mxu0
      %1038 = vst [vmem:[%s182] sm:$0xff] %v879
      %1039 = vst [vmem:[%s182 + $0x8] sm:$0xff] %v881
      %1040 = vst [vmem:[%s182 + $0x10] sm:$0xff] %v884
      %1041 = vst [vmem:[%s182 + $0x18] sm:$0xff] %v886
      %1042 = vst [vmem:[%s182 + $0x20] sm:$0xff] %v889
      %1043 = vst [vmem:[%s182 + $0x28] sm:$0xff] %v891
      %1044 = vst [vmem:[%s182 + $0x30] sm:$0xff] %v894
      %1045 = vst [vmem:[%s182 + $0x38] sm:$0xff] %v896
      %1046 = vst [vmem:[%s182 + $0x40] sm:$0xff] %v899
      %1047 = vst [vmem:[%s182 + $0x48] sm:$0xff] %v901
      %1048 = vst [vmem:[%s182 + $0x50] sm:$0xff] %v904
      %1049 = vst [vmem:[%s182 + $0x58] sm:$0xff] %v906
      %1050 = vst [vmem:[%s182 + $0x60] sm:$0xff] %v909
      %1051 = vst [vmem:[%s182 + $0x68] sm:$0xff] %v911
      %1052 = vst [vmem:[%s182 + $0x70] sm:$0xff] %v914
      %1053 = vst [vmem:[%s182 + $0x78] sm:$0xff] %v916
      %1054 = vst [vmem:[%s182 + $0x80] sm:$0xff] %v919
      %1055 = vst [vmem:[%s182 + $0x88] sm:$0xff] %v921
      %1056 = vst [vmem:[%s182 + $0x90] sm:$0xff] %v924
      %1057 = vst [vmem:[%s182 + $0x98] sm:$0xff] %v926
      %1058 = vst [vmem:[%s182 + $0xa0] sm:$0xff] %v929
      %1059 = vst [vmem:[%s182 + $0xa8] sm:$0xff] %v931
      %1060 = vst [vmem:[%s182 + $0xb0] sm:$0xff] %v934
      %1061 = vst [vmem:[%s182 + $0xb8] sm:$0xff] %v936
      %1062 = vst [vmem:[%s182 + $0xc0] sm:$0xff] %v939
      %1063 = vst [vmem:[%s182 + $0xc8] sm:$0xff] %v941
      %1064 = vst [vmem:[%s182 + $0xd0] sm:$0xff] %v944
      %1065 = vst [vmem:[%s182 + $0xd8] sm:$0xff] %v946
      %1066 = vst [vmem:[%s182 + $0xe0] sm:$0xff] %v949
      %1067 = vst [vmem:[%s182 + $0xe8] sm:$0xff] %v951
      %1068 = vst [vmem:[%s182 + $0xf0] sm:$0xff] %v954
      %1069 = vst [vmem:[%s182 + $0xf8] sm:$0xff] %v956
      %1070 = vst [vmem:[%s182 + $0x100] sm:$0xff] %v959
      %1071 = vst [vmem:[%s182 + $0x108] sm:$0xff] %v961
      %1072 = vst [vmem:[%s182 + $0x110] sm:$0xff] %v964
      %1073 = vst [vmem:[%s182 + $0x118] sm:$0xff] %v966
      %1074 = vst [vmem:[%s182 + $0x120] sm:$0xff] %v969
      %1075 = vst [vmem:[%s182 + $0x128] sm:$0xff] %v971
      %1076 = vst [vmem:[%s182 + $0x130] sm:$0xff] %v974
      %1077 = vst [vmem:[%s182 + $0x138] sm:$0xff] %v976
      %1078 = vst [vmem:[%s182 + $0x140] sm:$0xff] %v979
      %1079 = vst [vmem:[%s182 + $0x148] sm:$0xff] %v981
      %1080 = vst [vmem:[%s182 + $0x150] sm:$0xff] %v984
      %1081 = vst [vmem:[%s182 + $0x158] sm:$0xff] %v986
      %1082 = vst [vmem:[%s182 + $0x160] sm:$0xff] %v989
      %1083 = vst [vmem:[%s182 + $0x168] sm:$0xff] %v991
      %1084 = vst [vmem:[%s182 + $0x170] sm:$0xff] %v994
      %1085 = vst [vmem:[%s182 + $0x178] sm:$0xff] %v996
      %1086 = vst [vmem:[%s182 + $0x180] sm:$0xff] %v999
      %1087 = vst [vmem:[%s182 + $0x188] sm:$0xff] %v1001
      %1088 = vst [vmem:[%s182 + $0x190] sm:$0xff] %v1004
      %1089 = vst [vmem:[%s182 + $0x198] sm:$0xff] %v1006
      %1090 = vst [vmem:[%s182 + $0x1a0] sm:$0xff] %v1009
      %1091 = vst [vmem:[%s182 + $0x1a8] sm:$0xff] %v1011
      %1092 = vst [vmem:[%s182 + $0x1b0] sm:$0xff] %v1014
      %1093 = vst [vmem:[%s182 + $0x1b8] sm:$0xff] %v1016
      %1094 = vst [vmem:[%s182 + $0x1c0] sm:$0xff] %v1019
      %1095 = vst [vmem:[%s182 + $0x1c8] sm:$0xff] %v1021
      %1096 = vst [vmem:[%s182 + $0x1d0] sm:$0xff] %v1024
      %1097 = vst [vmem:[%s182 + $0x1d8] sm:$0xff] %v1026
      %1098 = vst [vmem:[%s182 + $0x1e0] sm:$0xff] %v1029
      %1099 = vst [vmem:[%s182 + $0x1e8] sm:$0xff] %v1031
      %1100 = vst [vmem:[%s182 + $0x1f0] sm:$0xff] %v1034
      %1101 = vst [vmem:[%s182 + $0x1f8] sm:$0xff] %v1036
      %v1102 = vadd.f32 %v879, %v881
      %v1103 = vadd.f32 %v1102, %v884
      %v1104 = vadd.f32 %v1103, %v886
      %v1105 = vadd.f32 %v1104, %v889
      %v1106 = vadd.f32 %v1105, %v891
      %v1107 = vadd.f32 %v1106, %v894
      %v1108 = vadd.f32 %v1107, %v896
      %v1109 = vadd.f32 %v1108, %v899
      %v1110 = vadd.f32 %v1109, %v901
      %v1111 = vadd.f32 %v1110, %v904
      %v1112 = vadd.f32 %v1111, %v906
      %v1113 = vadd.f32 %v1112, %v909
      %v1114 = vadd.f32 %v1113, %v911
      %v1115 = vadd.f32 %v1114, %v914
      %v1116 = vadd.f32 %v1115, %v916
      %v1117 = vadd.f32 %v1116, %v919
      %v1118 = vadd.f32 %v1117, %v921
      %v1119 = vadd.f32 %v1118, %v924
      %v1120 = vadd.f32 %v1119, %v926
      %v1121 = vadd.f32 %v1120, %v929
      %v1122 = vadd.f32 %v1121, %v931
      %v1123 = vadd.f32 %v1122, %v934
      %v1124 = vadd.f32 %v1123, %v936
      %v1125 = vadd.f32 %v1124, %v939
      %v1126 = vadd.f32 %v1125, %v941
      %v1127 = vadd.f32 %v1126, %v944
      %v1128 = vadd.f32 %v1127, %v946
      %v1129 = vadd.f32 %v1128, %v949
      %v1130 = vadd.f32 %v1129, %v951
      %v1131 = vadd.f32 %v1130, %v954
      %v1132 = vadd.f32 %v1131, %v956
      %v1133 = vadd.f32 %v1132, %v959
      %v1134 = vadd.f32 %v1133, %v961
      %v1135 = vadd.f32 %v1134, %v964
      %v1136 = vadd.f32 %v1135, %v966
      %v1137 = vadd.f32 %v1136, %v969
      %v1138 = vadd.f32 %v1137, %v971
      %v1139 = vadd.f32 %v1138, %v974
      %v1140 = vadd.f32 %v1139, %v976
      %v1141 = vadd.f32 %v1140, %v979
      %v1142 = vadd.f32 %v1141, %v981
      %v1143 = vadd.f32 %v1142, %v984
      %v1144 = vadd.f32 %v1143, %v986
      %v1145 = vadd.f32 %v1144, %v989
      %v1146 = vadd.f32 %v1145, %v991
      %v1147 = vadd.f32 %v1146, %v994
      %v1148 = vadd.f32 %v1147, %v996
      %v1149 = vadd.f32 %v1148, %v999
      %v1150 = vadd.f32 %v1149, %v1001
      %v1151 = vadd.f32 %v1150, %v1004
      %v1152 = vadd.f32 %v1151, %v1006
      %v1153 = vadd.f32 %v1152, %v1009
      %v1154 = vadd.f32 %v1153, %v1011
      %v1155 = vadd.f32 %v1154, %v1014
      %v1156 = vadd.f32 %v1155, %v1016
      %v1157 = vadd.f32 %v1156, %v1019
      %v1158 = vadd.f32 %v1157, %v1021
      %v1159 = vadd.f32 %v1158, %v1024
      %v1160 = vadd.f32 %v1159, %v1026
      %v1161 = vadd.f32 %v1160, %v1029
      %v1162 = vadd.f32 %v1161, %v1031
      %v1163 = vadd.f32 %v1162, %v1034
      %v1164 = vadd.f32 %v1163, %v1036
      %v1165 = vrot.slane %v1164, 4
      %v1166 = vadd.f32 %v1164, %v1165
      %v1167 = vrot.slane %v1166, 2
      %v1168 = vadd.f32 %v1166, %v1167
      %v1169 = vrot.slane %v1168, 1
      %v1170 = vadd.f32 %v1168, %v1169
      %v1171 = vmul.f32 %v879, %v879
      %v1172 = vmul.f32 %v881, %v881
      %v1173 = vmul.f32 %v884, %v884
      %v1174 = vmul.f32 %v886, %v886
      %v1175 = vmul.f32 %v889, %v889
      %v1176 = vmul.f32 %v891, %v891
      %v1177 = vmul.f32 %v894, %v894
      %v1178 = vmul.f32 %v896, %v896
      %v1179 = vmul.f32 %v899, %v899
      %v1180 = vmul.f32 %v901, %v901
      %v1181 = vmul.f32 %v904, %v904
      %v1182 = vmul.f32 %v906, %v906
      %v1183 = vmul.f32 %v909, %v909
      %v1184 = vmul.f32 %v911, %v911
      %v1185 = vmul.f32 %v914, %v914
      %v1186 = vmul.f32 %v916, %v916
      %v1187 = vmul.f32 %v919, %v919
      %v1188 = vmul.f32 %v921, %v921
      %v1189 = vmul.f32 %v924, %v924
      %v1190 = vmul.f32 %v926, %v926
      %v1191 = vmul.f32 %v929, %v929
      %v1192 = vmul.f32 %v931, %v931
      %v1193 = vmul.f32 %v934, %v934
      %v1194 = vmul.f32 %v936, %v936
      %v1195 = vmul.f32 %v939, %v939
      %v1196 = vmul.f32 %v941, %v941
      %v1197 = vmul.f32 %v944, %v944
      %v1198 = vmul.f32 %v946, %v946
      %v1199 = vmul.f32 %v949, %v949
      %v1200 = vmul.f32 %v951, %v951
      %v1201 = vmul.f32 %v954, %v954
      %v1202 = vmul.f32 %v956, %v956
      %v1203 = vmul.f32 %v959, %v959
      %v1204 = vmul.f32 %v961, %v961
      %v1205 = vmul.f32 %v964, %v964
      %v1206 = vmul.f32 %v966, %v966
      %v1207 = vmul.f32 %v969, %v969
      %v1208 = vmul.f32 %v971, %v971
      %v1209 = vmul.f32 %v974, %v974
      %v1210 = vmul.f32 %v976, %v976
      %v1211 = vmul.f32 %v979, %v979
      %v1212 = vmul.f32 %v981, %v981
      %v1213 = vmul.f32 %v984, %v984
      %v1214 = vmul.f32 %v986, %v986
      %v1215 = vmul.f32 %v989, %v989
      %v1216 = vmul.f32 %v991, %v991
      %v1217 = vmul.f32 %v994, %v994
      %v1218 = vmul.f32 %v996, %v996
      %v1219 = vmul.f32 %v999, %v999
      %v1220 = vmul.f32 %v1001, %v1001
      %v1221 = vmul.f32 %v1004, %v1004
      %v1222 = vmul.f32 %v1006, %v1006
      %v1223 = vmul.f32 %v1009, %v1009
      %v1224 = vmul.f32 %v1011, %v1011
      %v1225 = vmul.f32 %v1014, %v1014
      %v1226 = vmul.f32 %v1016, %v1016
      %v1227 = vmul.f32 %v1019, %v1019
      %v1228 = vmul.f32 %v1021, %v1021
      %v1229 = vmul.f32 %v1024, %v1024
      %v1230 = vmul.f32 %v1026, %v1026
      %v1231 = vmul.f32 %v1029, %v1029
      %v1232 = vmul.f32 %v1031, %v1031
      %v1233 = vmul.f32 %v1034, %v1034
      %v1234 = vmul.f32 %v1036, %v1036
      %v1235 = vadd.f32 %v1171, %v1172
      %v1236 = vadd.f32 %v1235, %v1173
      %v1237 = vadd.f32 %v1236, %v1174
      %v1238 = vadd.f32 %v1237, %v1175
      %v1239 = vadd.f32 %v1238, %v1176
      %v1240 = vadd.f32 %v1239, %v1177
      %v1241 = vadd.f32 %v1240, %v1178
      %v1242 = vadd.f32 %v1241, %v1179
      %v1243 = vadd.f32 %v1242, %v1180
      %v1244 = vadd.f32 %v1243, %v1181
      %v1245 = vadd.f32 %v1244, %v1182
      %v1246 = vadd.f32 %v1245, %v1183
      %v1247 = vadd.f32 %v1246, %v1184
      %v1248 = vadd.f32 %v1247, %v1185
      %v1249 = vadd.f32 %v1248, %v1186
      %v1250 = vadd.f32 %v1249, %v1187
      %v1251 = vadd.f32 %v1250, %v1188
      %v1252 = vadd.f32 %v1251, %v1189
      %v1253 = vadd.f32 %v1252, %v1190
      %v1254 = vadd.f32 %v1253, %v1191
      %v1255 = vadd.f32 %v1254, %v1192
      %v1256 = vadd.f32 %v1255, %v1193
      %v1257 = vadd.f32 %v1256, %v1194
      %v1258 = vadd.f32 %v1257, %v1195
      %v1259 = vadd.f32 %v1258, %v1196
      %v1260 = vadd.f32 %v1259, %v1197
      %v1261 = vadd.f32 %v1260, %v1198
      %v1262 = vadd.f32 %v1261, %v1199
      %v1263 = vadd.f32 %v1262, %v1200
      %v1264 = vadd.f32 %v1263, %v1201
      %v1265 = vadd.f32 %v1264, %v1202
      %v1266 = vadd.f32 %v1265, %v1203
      %v1267 = vadd.f32 %v1266, %v1204
      %v1268 = vadd.f32 %v1267, %v1205
      %v1269 = vadd.f32 %v1268, %v1206
      %v1270 = vadd.f32 %v1269, %v1207
      %v1271 = vadd.f32 %v1270, %v1208
      %v1272 = vadd.f32 %v1271, %v1209
      %v1273 = vadd.f32 %v1272, %v1210
      %v1274 = vadd.f32 %v1273, %v1211
      %v1275 = vadd.f32 %v1274, %v1212
      %v1276 = vadd.f32 %v1275, %v1213
      %v1277 = vadd.f32 %v1276, %v1214
      %v1278 = vadd.f32 %v1277, %v1215
      %v1279 = vadd.f32 %v1278, %v1216
      %v1280 = vadd.f32 %v1279, %v1217
      %v1281 = vadd.f32 %v1280, %v1218
      %v1282 = vadd.f32 %v1281, %v1219
      %v1283 = vadd.f32 %v1282, %v1220
      %v1284 = vadd.f32 %v1283, %v1221
      %v1285 = vadd.f32 %v1284, %v1222
      %v1286 = vadd.f32 %v1285, %v1223
      %v1287 = vadd.f32 %v1286, %v1224
      %v1288 = vadd.f32 %v1287, %v1225
      %v1289 = vadd.f32 %v1288, %v1226
      %v1290 = vadd.f32 %v1289, %v1227
      %v1291 = vadd.f32 %v1290, %v1228
      %v1292 = vadd.f32 %v1291, %v1229
      %v1293 = vadd.f32 %v1292, %v1230
      %v1294 = vadd.f32 %v1293, %v1231
      %v1295 = vadd.f32 %v1294, %v1232
      %v1296 = vadd.f32 %v1295, %v1233
      %v1297 = vadd.f32 %v1296, %v1234
      %v1298 = vrot.slane %v1297, 4
      %v1299 = vadd.f32 %v1297, %v1298
      %v1300 = vrot.slane %v1299, 2
      %v1301 = vadd.f32 %v1299, %v1300
      %v1302 = vrot.slane %v1301, 1
      %v1303 = vadd.f32 %v1301, %v1302
      %v1304 = vlaneseq
      %v1305 = vshrl.u32 %v1304, 7
      %vm1306 = vcmp.eq.s32.totalorder %v1305, 0
      %vm1307 = vcmp.eq.s32.totalorder %v1305, 1
      %v1308 = vsel %vm1307, 1, 0
      %vm1309 = vcmp.eq.s32.totalorder %v1308, 1
      %v1310 = vsel %vm1309, %v1303, 0.0
      %v1311 = vsel %vm1306, 1, 0
      %vm1312 = vcmp.eq.s32.totalorder %v1311, 1
      %v1313 = vsel %vm1312, %v1170, %v1310
      %1314 = vst [vmem:[%s187] sm:$0xff] %v1313
      %s1315 = smul.u32 64, %s15
      %p1316 = scmp.lt.s32.totalorder %s1315, 127
      %s1317 = scalar_select %p1316, %s1315, 127
      %s1318 = smul.addr %s1317, 8
      %s1319 = scalar_lea.vmem %s2, %s1318
      %p1320 = scmp.lt.s32.totalorder %s15, 1
      %s1321 = scalar_select %p1320, %s15, 1
      %s1322 = smul.addr %s1321, 8
      %s1323 = scalar_lea.vmem %s3, %s1322
      // Predicated region
      $region29: #{conv_block_forward.6} parent=27 // pred_check
        %p1324 = pneg %p80
      $region30: #{conv_block_forward.6} parent=27 // pred_check_branch
        %1326 = sbr.rel (%p1324) target = $region32
      $region31: #{conv_block_forward.6} parent=27 // pred_region
        %s1327 = smul.u32 64, %s15
      $region32: #{conv_block_forward.6} parent=27 // pred_fallthru
        _
      // Predicated region
      $region33: #{conv_block_forward.6} parent=27 // pred_check
        %p1328 = pneg %p106
      $region34: #{conv_block_forward.6} parent=27 // pred_check_branch
        %1330 = sbr.rel (%p1328) target = $region36
      $region35: #{conv_block_forward.6} parent=27 // pred_region
        _
      $region36: #{conv_block_forward.6} parent=27 // pred_fallthru
        _
    $region28: #{conv_block_forward.6} parent=5 // pred_fallthru
      _
    %p1331 = scmp.le.s32.totalorder 2, %s10
    // Predicated region
    $region37: #{conv_block_forward.6} parent=5 // pred_check
      %p1332 = pneg %p1331
    $region38: #{conv_block_forward.6} parent=5 // pred_check_branch
      %1334 = sbr.rel (%p1332) target = $region40
    $region39: #{conv_block_forward.6} parent=5 // pred_region
      %s1335 = ssub.s32 %s10, 2
      // Predicated region
      $region41: #{conv_block_forward.6} parent=39 // pred_check
        %p1336 = pneg %p86
      $region42: #{conv_block_forward.6} parent=39 // pred_check_branch
        %1338 = sbr.rel (%p1336) target = $region44
      $region43: #{conv_block_forward.6} parent=39 // pred_region
        %s1339 = smul.u32 64, %s16
        %p1340 = scmp.lt.s32.totalorder %s1339, 127
        %s1341 = scalar_select %p1340, %s1339, 127
        %s1342 = smul.addr %s1341, 8
        %s1343 = scalar_lea.vmem %s2, %s1342
      $region44: #{conv_block_forward.6} parent=39 // pred_fallthru
        _
      // Predicated region
      $region45: #{conv_block_forward.6} parent=39 // pred_check
        %p1344 = pneg %p112
      $region46: #{conv_block_forward.6} parent=39 // pred_check_branch
        %1346 = sbr.rel (%p1344) target = $region48
      $region47: #{conv_block_forward.6} parent=39 // pred_region
        %p1347 = scmp.lt.s32.totalorder %s16, 1
        %s1348 = scalar_select %p1347, %s16, 1
        %s1349 = smul.addr %s1348, 8
        %s1350 = scalar_lea.vmem %s3, %s1349
      $region48: #{conv_block_forward.6} parent=39 // pred_fallthru
        _
    $region40: #{conv_block_forward.6} parent=5 // pred_fallthru
      _
  $region6: #{conv_block_forward.6} parent=0 // loop_footer
    %s14 = sadd.s32 1, %s10
  $region7: #{conv_block_forward.6} parent=0 // loop_footer_branch
    %9 = sbr.rel target = $region3
  $region8: #{conv_block_forward.6} parent=0 // loop_exit
    _

// kernel: conv_block_forward.7
$region0: #{conv_block_forward.7}
  #allocation0 [shape = 'u32[]', space=smem, size = 0x4, offset = 0x4, fixed_abs, tag = 'smem constant byte address 0x4 - core index']
  #allocation1 [shape = 'u32[72,128]{1,0:T(1,128)}', space=vmem, size = 0x9000, scoped, tag = 'internal scratch']
  %s0 = inlined_call_operand.vmem [shape: f32[1024,128], index: 0, kind: input, shape index: {}]
  %s1 = inlined_call_operand.vmem [shape: f32[1,128], index: 1, kind: input, shape index: {}]
  %s2 = inlined_call_operand.vmem [shape: f32[1,128], index: 2, kind: input, shape index: {}]
  %s3 = inlined_call_operand.vmem [shape: f32[1024,128], index: 3, kind: output, shape index: {}]
  %s4 = sld [smem:[#allocation0]]
  $region45: #{conv_block_forward.7} parent=0
    _
  %s6 = ssub.s32 1, %s4
  %s7 = scalar_select 0, %s6, %s4
  loop: start=0, step=1, limit=4
  $region2: #{conv_block_forward.7} parent=0 // loop_pre_header
    _
  $region3: #{conv_block_forward.7} parent=0 // loop_header
    %s9 = sphi 0, %s13
    %p10 = scmp.ge.s32.totalorder %s9, 4
    %s19 = sphi 0, %s21
    %s22 = sphi 0, %s19
    %s23 = sphi 0, %s22
    %s39 = sphi 0, %s23
    %s43 = sphi 0, %s43
    %s45 = sphi 0, %s43
    %s46 = sphi 0, %s45
    %s60 = sphi 0, %s46
    %s64 = sphi 0, %s64
    %s66 = sphi 0, %s64
    %s67 = sphi 0, %s66
    %s81 = sphi 0, %s67
    %s87 = sphi 0, %s89
    %s90 = sphi 0, %s87
    %s91 = sphi 0, %s90
    %s107 = sphi 0, %s91
  $region4: #{conv_block_forward.7} parent=0 // loop_header_branch
    %12 = sbr.rel (%p10) target = $region8
  $region5: #{conv_block_forward.7} parent=0 // loop_body
    %s14 = ssub.s32 %s9, 1
    %s15 = ssub.s32 %s9, 2
    %s16 = sadd.s32 %s9, 1
    %s17 = ssub.s32 %s9, %s16
    %p18 = scmp.eq.s32.totalorder %s17, 0
    %s20 = sadd.s32 %s19, 1
    %s21 = scalar_select %p18, %s19, %s20
    %p24 = pneg %p18
    %p25 = scmp.eq.s32.totalorder %s9, 1
    %p26 = por %p24, %p25
    %p27 = scmp.ne.s32.totalorder %s19, %s22
    %p28 = scmp.eq.s32.totalorder %s9, 0
    %p29 = por %p27, %p28
    %p30 = scmp.ne.s32.totalorder %s19, %s22
    %p31 = scmp.eq.s32.totalorder %s14, 1
    %p32 = por %p30, %p31
    %p33 = scmp.ne.s32.totalorder %s22, %s23
    %p34 = scmp.eq.s32.totalorder %s14, 0
    %p35 = por %p33, %p34
    %p36 = scmp.ne.s32.totalorder %s22, %s23
    %p37 = scmp.eq.s32.totalorder %s15, 1
    %p38 = por %p36, %p37
    %p40 = scmp.ne.s32.totalorder %s23, %s39
    %p41 = scmp.eq.s32.totalorder %s15, 0
    %p42 = por %p40, %p41
    %s44 = sadd.s32 %s43, 1
    %p47 = scmp.eq.s32.totalorder %s9, 1
    %p48 = scmp.ne.s32.totalorder %s43, %s45
    %p49 = scmp.eq.s32.totalorder %s9, 0
    %p50 = por %p48, %p49
    %p51 = scmp.ne.s32.totalorder %s43, %s45
    %p52 = scmp.eq.s32.totalorder %s14, 1
    %p53 = por %p51, %p52
    %p54 = scmp.ne.s32.totalorder %s45, %s46
    %p55 = scmp.eq.s32.totalorder %s14, 0
    %p56 = por %p54, %p55
    %p57 = scmp.ne.s32.totalorder %s45, %s46
    %p58 = scmp.eq.s32.totalorder %s15, 1
    %p59 = por %p57, %p58
    %p61 = scmp.ne.s32.totalorder %s46, %s60
    %p62 = scmp.eq.s32.totalorder %s15, 0
    %p63 = por %p61, %p62
    %s65 = sadd.s32 %s64, 1
    %p68 = scmp.eq.s32.totalorder %s9, 1
    %p69 = scmp.ne.s32.totalorder %s64, %s66
    %p70 = scmp.eq.s32.totalorder %s9, 0
    %p71 = por %p69, %p70
    %p72 = scmp.ne.s32.totalorder %s64, %s66
    %p73 = scmp.eq.s32.totalorder %s14, 1
    %p74 = por %p72, %p73
    %p75 = scmp.ne.s32.totalorder %s66, %s67
    %p76 = scmp.eq.s32.totalorder %s14, 0
    %p77 = por %p75, %p76
    %p78 = scmp.ne.s32.totalorder %s66, %s67
    %p79 = scmp.eq.s32.totalorder %s15, 1
    %p80 = por %p78, %p79
    %p82 = scmp.ne.s32.totalorder %s67, %s81
    %p83 = scmp.eq.s32.totalorder %s15, 0
    %p84 = por %p82, %p83
    %s85 = ssub.s32 %s9, %s16
    %p86 = scmp.eq.s32.totalorder %s85, 0
    %s88 = sadd.s32 %s87, 1
    %s89 = scalar_select %p86, %s87, %s88
    %p92 = pneg %p86
    %p93 = scmp.eq.s32.totalorder %s9, 1
    %p94 = por %p92, %p93
    %p95 = scmp.ne.s32.totalorder %s87, %s90
    %p96 = scmp.eq.s32.totalorder %s9, 0
    %p97 = por %p95, %p96
    %p98 = scmp.ne.s32.totalorder %s87, %s90
    %p99 = scmp.eq.s32.totalorder %s14, 1
    %p100 = por %p98, %p99
    %p101 = scmp.ne.s32.totalorder %s90, %s91
    %p102 = scmp.eq.s32.totalorder %s14, 0
    %p103 = por %p101, %p102
    %p104 = scmp.ne.s32.totalorder %s90, %s91
    %p105 = scmp.eq.s32.totalorder %s15, 1
    %p106 = por %p104, %p105
    %p108 = scmp.ne.s32.totalorder %s91, %s107
    %p109 = scmp.eq.s32.totalorder %s15, 0
    %p110 = por %p108, %p109
    %p111 = scmp.le.s32.totalorder 1, %s9
    %p112 = scmp.lt.s32.totalorder %s9, 3
    %p113 = pnand %p111, %p112
    %p114 = pneg %p113
    // Predicated region
    $region9: #{conv_block_forward.7} parent=5 // pred_check
      _
    $region10: #{conv_block_forward.7} parent=5 // pred_check_branch
      %116 = sbr.rel (%p113) target = $region12
    $region11: #{conv_block_forward.7} parent=5 // pred_region
      %s117 = ssub.s32 %s9, 1
      // Predicated region
      $region13: #{conv_block_forward.7} parent=11 // pred_check
        %p118 = pneg %p56
      $region14: #{conv_block_forward.7} parent=11 // pred_check_branch
        %120 = sbr.rel (%p118) target = $region16
      $region15: #{conv_block_forward.7} parent=11 // pred_region
        _
      $region16: #{conv_block_forward.7} parent=11 // pred_fallthru
        _
      // Predicated region
      $region17: #{conv_block_forward.7} parent=11 // pred_check
        %p121 = pneg %p77
      $region18: #{conv_block_forward.7} parent=11 // pred_check_branch
        %123 = sbr.rel (%p121) target = $region20
      $region19: #{conv_block_forward.7} parent=11 // pred_region
        _
      $region20: #{conv_block_forward.7} parent=11 // pred_fallthru
        _
    $region12: #{conv_block_forward.7} parent=5 // pred_fallthru
      _
    %p124 = scmp.lt.s32.totalorder %s9, 2
    // Predicated region
    $region21: #{conv_block_forward.7} parent=5 // pred_check
      %p125 = pneg %p124
    $region22: #{conv_block_forward.7} parent=5 // pred_check_branch
      %127 = sbr.rel (%p125) target = $region24
    $region23: #{conv_block_forward.7} parent=5 // pred_region
      // Predicated region
      $region25: #{conv_block_forward.7} parent=23 // pred_check
        %p128 = pneg %p29
      $region26: #{conv_block_forward.7} parent=23 // pred_check_branch
        %130 = sbr.rel (%p128) target = $region28
      $region27: #{conv_block_forward.7} parent=23 // pred_region
        %s131 = smul.u32 64, %s9
        %p132 = scmp.lt.s32.totalorder %s131, 127
        %s133 = scalar_select %p132, %s131, 127
        %s134 = smul.addr %s133, 8
        %s135 = scalar_lea.vmem %s0, %s134
        %s136 = smul.u32 64, %s9
      $region28: #{conv_block_forward.7} parent=23 // pred_fallthru
        _
    $region24: #{conv_block_forward.7} parent=5 // pred_fallthru
      _
    %p137 = scmp.le.s32.totalorder 1, %s9
    %p138 = scmp.lt.s32.totalorder %s9, 3
    %p139 = pnand %p137, %p138
    %p140 = pneg %p139
    // Predicated region
    $region29: #{conv_block_forward.7} parent=5 // pred_check
      _
    $region30: #{conv_block_forward.7} parent=5 // pred_check_branch
      %142 = sbr.rel (%p139) target = $region32
    $region31: #{conv_block_forward.7} parent=5 // pred_region
      %s143 = ssub.s32 %s9, 1
      %s144 = smul.u32 64, %s14
      %p145 = scmp.lt.s32.totalorder %s144, 127
      %s146 = scalar_select %p145, %s144, 127
      %s147 = smul.addr %s146, 8
      %s148 = scalar_lea.vmem %s0, %s147
      %p149 = pneg %p35
      %p150 = pneg %p32
      %p151 = pneg %p56
      %p152 = pneg %p53
      %p153 = pneg %p77
      %p154 = pneg %p74
      %p155 = pneg %p103
      %p156 = pneg %p100
      %s157 = smul.u32 64, %s14
      %p158 = scmp.lt.s32.totalorder %s157, 127
      %s159 = scalar_select %p158, %s157, 127
      %s160 = smul.addr %s159, 8
      %s161 = scalar_lea.vmem %s3, %s160
      %s162 = smul.u32 64, %s14
      %p163 = scmp.lt.s32.totalorder %s162, 127
      %s164 = scalar_select %p163, %s162, 127
      %s165 = smul.addr %s164, 8
      %s166 = scalar_lea.vmem %s0, %s165
      %s167 = smul.u32 64, %s14
      %s168 = smul.u32 64, %s14
      %p169 = scmp.lt.s32.totalorder %s168, 127
      %s170 = scalar_select %p169, %s168, 127
      %s171 = smul.addr %s170, 8
      %s172 = scalar_lea.vmem %s3, %s171
      %s173 = smul.u32 64, %s14
      %v174 = vld [vmem:[%s166] sm:$0xff]
      %v175 = vld [vmem:[%s166 + $0x8] sm:$0xff]
      %v176 = vld [vmem:[%s166 + $0x10] sm:$0xff]
      %v177 = vld [vmem:[%s166 + $0x18] sm:$0xff]
      %v178 = vld [vmem:[%s166 + $0x20] sm:$0xff]
      %v179 = vld [vmem:[%s166 + $0x28] sm:$0xff]
      %v180 = vld [vmem:[%s166 + $0x30] sm:$0xff]
      %v181 = vld [vmem:[%s166 + $0x38] sm:$0xff]
      %v182 = vld [vmem:[%s166 + $0x40] sm:$0xff]
      %v183 = vld [vmem:[%s166 + $0x48] sm:$0xff]
      %v184 = vld [vmem:[%s166 + $0x50] sm:$0xff]
      %v185 = vld [vmem:[%s166 + $0x58] sm:$0xff]
      %v186 = vld [vmem:[%s166 + $0x60] sm:$0xff]
      %v187 = vld [vmem:[%s166 + $0x68] sm:$0xff]
      %v188 = vld [vmem:[%s166 + $0x70] sm:$0xff]
      %v189 = vld [vmem:[%s166 + $0x78] sm:$0xff]
      %v190 = vld [vmem:[%s166 + $0x80] sm:$0xff]
      %v191 = vld [vmem:[%s166 + $0x88] sm:$0xff]
      %v192 = vld [vmem:[%s166 + $0x90] sm:$0xff]
      %v193 = vld [vmem:[%s166 + $0x98] sm:$0xff]
      %v194 = vld [vmem:[%s166 + $0xa0] sm:$0xff]
      %v195 = vld [vmem:[%s166 + $0xa8] sm:$0xff]
      %v196 = vld [vmem:[%s166 + $0xb0] sm:$0xff]
      %v197 = vld [vmem:[%s166 + $0xb8] sm:$0xff]
      %v198 = vld [vmem:[%s166 + $0xc0] sm:$0xff]
      %v199 = vld [vmem:[%s166 + $0xc8] sm:$0xff]
      %v200 = vld [vmem:[%s166 + $0xd0] sm:$0xff]
      %v201 = vld [vmem:[%s166 + $0xd8] sm:$0xff]
      %v202 = vld [vmem:[%s166 + $0xe0] sm:$0xff]
      %v203 = vld [vmem:[%s166 + $0xe8] sm:$0xff]
      %v204 = vld [vmem:[%s166 + $0xf0] sm:$0xff]
      %v205 = vld [vmem:[%s166 + $0xf8] sm:$0xff]
      %v206 = vld [vmem:[%s166 + $0x100] sm:$0xff]
      %v207 = vld [vmem:[%s166 + $0x108] sm:$0xff]
      %v208 = vld [vmem:[%s166 + $0x110] sm:$0xff]
      %v209 = vld [vmem:[%s166 + $0x118] sm:$0xff]
      %v210 = vld [vmem:[%s166 + $0x120] sm:$0xff]
      %v211 = vld [vmem:[%s166 + $0x128] sm:$0xff]
      %v212 = vld [vmem:[%s166 + $0x130] sm:$0xff]
      %v213 = vld [vmem:[%s166 + $0x138] sm:$0xff]
      %v214 = vld [vmem:[%s166 + $0x140] sm:$0xff]
      %v215 = vld [vmem:[%s166 + $0x148] sm:$0xff]
      %v216 = vld [vmem:[%s166 + $0x150] sm:$0xff]
      %v217 = vld [vmem:[%s166 + $0x158] sm:$0xff]
      %v218 = vld [vmem:[%s166 + $0x160] sm:$0xff]
      %v219 = vld [vmem:[%s166 + $0x168] sm:$0xff]
      %v220 = vld [vmem:[%s166 + $0x170] sm:$0xff]
      %v221 = vld [vmem:[%s166 + $0x178] sm:$0xff]
      %v222 = vld [vmem:[%s166 + $0x180] sm:$0xff]
      %v223 = vld [vmem:[%s166 + $0x188] sm:$0xff]
      %v224 = vld [vmem:[%s166 + $0x190] sm:$0xff]
      %v225 = vld [vmem:[%s166 + $0x198] sm:$0xff]
      %v226 = vld [vmem:[%s166 + $0x1a0] sm:$0xff]
      %v227 = vld [vmem:[%s166 + $0x1a8] sm:$0xff]
      %v228 = vld [vmem:[%s166 + $0x1b0] sm:$0xff]
      %v229 = vld [vmem:[%s166 + $0x1b8] sm:$0xff]
      %v230 = vld [vmem:[%s166 + $0x1c0] sm:$0xff]
      %v231 = vld [vmem:[%s166 + $0x1c8] sm:$0xff]
      %v232 = vld [vmem:[%s166 + $0x1d0] sm:$0xff]
      %v233 = vld [vmem:[%s166 + $0x1d8] sm:$0xff]
      %v234 = vld [vmem:[%s166 + $0x1e0] sm:$0xff]
      %v235 = vld [vmem:[%s166 + $0x1e8] sm:$0xff]
      %v236 = vld [vmem:[%s166 + $0x1f0] sm:$0xff]
      %v237 = vld [vmem:[%s166 + $0x1f8] sm:$0xff]
      %v238 = vld [vmem:[%s1] sm:$0x1]
      %v240 = vperm.slane %v238, 0
      %v242 = vmul.f32 %v174, %v240
      %v243 = vmul.f32 %v175, %v240
      %v244 = vmul.f32 %v176, %v240
      %v245 = vmul.f32 %v177, %v240
      %v246 = vmul.f32 %v178, %v240
      %v247 = vmul.f32 %v179, %v240
      %v248 = vmul.f32 %v180, %v240
      %v249 = vmul.f32 %v181, %v240
      %v250 = vmul.f32 %v182, %v240
      %v251 = vmul.f32 %v183, %v240
      %v252 = vmul.f32 %v184, %v240
      %v253 = vmul.f32 %v185, %v240
      %v254 = vmul.f32 %v186, %v240
      %v255 = vmul.f32 %v187, %v240
      %v256 = vmul.f32 %v188, %v240
      %v257 = vmul.f32 %v189, %v240
      %v258 = vmul.f32 %v190, %v240
      %v259 = vmul.f32 %v191, %v240
      %v260 = vmul.f32 %v192, %v240
      %v261 = vmul.f32 %v193, %v240
      %v262 = vmul.f32 %v194, %v240
      %v263 = vmul.f32 %v195, %v240
      %v264 = vmul.f32 %v196, %v240
      %v265 = vmul.f32 %v197, %v240
      %v266 = vmul.f32 %v198, %v240
      %v267 = vmul.f32 %v199, %v240
      %v268 = vmul.f32 %v200, %v240
      %v269 = vmul.f32 %v201, %v240
      %v270 = vmul.f32 %v202, %v240
      %v271 = vmul.f32 %v203, %v240
      %v272 = vmul.f32 %v204, %v240
      %v273 = vmul.f32 %v205, %v240
      %v274 = vmul.f32 %v206, %v240
      %v275 = vmul.f32 %v207, %v240
      %v276 = vmul.f32 %v208, %v240
      %v277 = vmul.f32 %v209, %v240
      %v278 = vmul.f32 %v210, %v240
      %v279 = vmul.f32 %v211, %v240
      %v280 = vmul.f32 %v212, %v240
      %v281 = vmul.f32 %v213, %v240
      %v282 = vmul.f32 %v214, %v240
      %v283 = vmul.f32 %v215, %v240
      %v284 = vmul.f32 %v216, %v240
      %v285 = vmul.f32 %v217, %v240
      %v286 = vmul.f32 %v218, %v240
      %v287 = vmul.f32 %v219, %v240
      %v288 = vmul.f32 %v220, %v240
      %v289 = vmul.f32 %v221, %v240
      %v290 = vmul.f32 %v222, %v240
      %v291 = vmul.f32 %v223, %v240
      %v292 = vmul.f32 %v224, %v240
      %v293 = vmul.f32 %v225, %v240
      %v294 = vmul.f32 %v226, %v240
      %v295 = vmul.f32 %v227, %v240
      %v296 = vmul.f32 %v228, %v240
      %v297 = vmul.f32 %v229, %v240
      %v298 = vmul.f32 %v230, %v240
      %v299 = vmul.f32 %v231, %v240
      %v300 = vmul.f32 %v232, %v240
      %v301 = vmul.f32 %v233, %v240
      %v302 = vmul.f32 %v234, %v240
      %v303 = vmul.f32 %v235, %v240
      %v304 = vmul.f32 %v236, %v240
      %v305 = vmul.f32 %v237, %v240
      %v306 = vld [vmem:[%s2] sm:$0x1]
      %v308 = vperm.slane %v306, 0
      %v310 = vadd.f32 %v242, %v308
      %v311 = vadd.f32 %v243, %v308
      %v312 = vadd.f32 %v244, %v308
      %v313 = vadd.f32 %v245, %v308
      %v314 = vadd.f32 %v246, %v308
      %v315 = vadd.f32 %v247, %v308
      %v316 = vadd.f32 %v248, %v308
      %v317 = vadd.f32 %v249, %v308
      %v318 = vadd.f32 %v250, %v308
      %v319 = vadd.f32 %v251, %v308
      %v320 = vadd.f32 %v252, %v308
      %v321 = vadd.f32 %v253, %v308
      %v322 = vadd.f32 %v254, %v308
      %v323 = vadd.f32 %v255, %v308
      %v324 = vadd.f32 %v256, %v308
      %v325 = vadd.f32 %v257, %v308
      %v326 = vadd.f32 %v258, %v308
      %v327 = vadd.f32 %v259, %v308
      %v328 = vadd.f32 %v260, %v308
      %v329 = vadd.f32 %v261, %v308
      %v330 = vadd.f32 %v262, %v308
      %v331 = vadd.f32 %v263, %v308
      %v332 = vadd.f32 %v264, %v308
      %v333 = vadd.f32 %v265, %v308
      %v334 = vadd.f32 %v266, %v308
      %v335 = vadd.f32 %v267, %v308
      %v336 = vadd.f32 %v268, %v308
      %v337 = vadd.f32 %v269, %v308
      %v338 = vadd.f32 %v270, %v308
      %v339 = vadd.f32 %v271, %v308
      %v340 = vadd.f32 %v272, %v308
      %v341 = vadd.f32 %v273, %v308
      %v342 = vadd.f32 %v274, %v308
      %v343 = vadd.f32 %v275, %v308
      %v344 = vadd.f32 %v276, %v308
      %v345 = vadd.f32 %v277, %v308
      %v346 = vadd.f32 %v278, %v308
      %v347 = vadd.f32 %v279, %v308
      %v348 = vadd.f32 %v280, %v308
      %v349 = vadd.f32 %v281, %v308
      %v350 = vadd.f32 %v282, %v308
      %v351 = vadd.f32 %v283, %v308
      %v352 = vadd.f32 %v284, %v308
      %v353 = vadd.f32 %v285, %v308
      %v354 = vadd.f32 %v286, %v308
      %v355 = vadd.f32 %v287, %v308
      %v356 = vadd.f32 %v288, %v308
      %v357 = vadd.f32 %v289, %v308
      %v358 = vadd.f32 %v290, %v308
      %v359 = vadd.f32 %v291, %v308
      %v360 = vadd.f32 %v292, %v308
      %v361 = vadd.f32 %v293, %v308
      %v362 = vadd.f32 %v294, %v308
      %v363 = vadd.f32 %v295, %v308
      %v364 = vadd.f32 %v296, %v308
      %v365 = vadd.f32 %v297, %v308
      %v366 = vadd.f32 %v298, %v308
      %v367 = vadd.f32 %v299, %v308
      %v368 = vadd.f32 %v300, %v308
      %v369 = vadd.f32 %v301, %v308
      %v370 = vadd.f32 %v302, %v308
      %v371 = vadd.f32 %v303, %v308
      %v372 = vadd.f32 %v304, %v308
      %v373 = vadd.f32 %v305, %v308
      %v374 = vmax.f32 %v310, 0.0
      %v375 = vmax.f32 %v311, 0.0
      %v376 = vmax.f32 %v312, 0.0
      %v377 = vmax.f32 %v313, 0.0
      %v378 = vmax.f32 %v314, 0.0
      %v379 = vmax.f32 %v315, 0.0
      %v380 = vmax.f32 %v316, 0.0
      %v381 = vmax.f32 %v317, 0.0
      %v382 = vmax.f32 %v318, 0.0
      %v383 = vmax.f32 %v319, 0.0
      %v384 = vmax.f32 %v320, 0.0
      %v385 = vmax.f32 %v321, 0.0
      %v386 = vmax.f32 %v322, 0.0
      %v387 = vmax.f32 %v323, 0.0
      %v388 = vmax.f32 %v324, 0.0
      %v389 = vmax.f32 %v325, 0.0
      %v390 = vmax.f32 %v326, 0.0
      %v391 = vmax.f32 %v327, 0.0
      %v392 = vmax.f32 %v328, 0.0
      %v393 = vmax.f32 %v329, 0.0
      %v394 = vmax.f32 %v330, 0.0
      %v395 = vmax.f32 %v331, 0.0
      %v396 = vmax.f32 %v332, 0.0
      %v397 = vmax.f32 %v333, 0.0
      %v398 = vmax.f32 %v334, 0.0
      %v399 = vmax.f32 %v335, 0.0
      %v400 = vmax.f32 %v336, 0.0
      %v401 = vmax.f32 %v337, 0.0
      %v402 = vmax.f32 %v338, 0.0
      %v403 = vmax.f32 %v339, 0.0
      %v404 = vmax.f32 %v340, 0.0
      %v405 = vmax.f32 %v341, 0.0
      %v406 = vmax.f32 %v342, 0.0
      %v407 = vmax.f32 %v343, 0.0
      %v408 = vmax.f32 %v344, 0.0
      %v409 = vmax.f32 %v345, 0.0
      %v410 = vmax.f32 %v346, 0.0
      %v411 = vmax.f32 %v347, 0.0
      %v412 = vmax.f32 %v348, 0.0
      %v413 = vmax.f32 %v349, 0.0
      %v414 = vmax.f32 %v350, 0.0
      %v415 = vmax.f32 %v351, 0.0
      %v416 = vmax.f32 %v352, 0.0
      %v417 = vmax.f32 %v353, 0.0
      %v418 = vmax.f32 %v354, 0.0
      %v419 = vmax.f32 %v355, 0.0
      %v420 = vmax.f32 %v356, 0.0
      %v421 = vmax.f32 %v357, 0.0
      %v422 = vmax.f32 %v358, 0.0
      %v423 = vmax.f32 %v359, 0.0
      %v424 = vmax.f32 %v360, 0.0
      %v425 = vmax.f32 %v361, 0.0
      %v426 = vmax.f32 %v362, 0.0
      %v427 = vmax.f32 %v363, 0.0
      %v428 = vmax.f32 %v364, 0.0
      %v429 = vmax.f32 %v365, 0.0
      %v430 = vmax.f32 %v366, 0.0
      %v431 = vmax.f32 %v367, 0.0
      %v432 = vmax.f32 %v368, 0.0
      %v433 = vmax.f32 %v369, 0.0
      %v434 = vmax.f32 %v370, 0.0
      %v435 = vmax.f32 %v371, 0.0
      %v436 = vmax.f32 %v372, 0.0
      %v437 = vmax.f32 %v373, 0.0
      %438 = vst [vmem:[%s172] sm:$0xff] %v374
      %439 = vst [vmem:[%s172 + $0x8] sm:$0xff] %v375
      %440 = vst [vmem:[%s172 + $0x10] sm:$0xff] %v376
      %441 = vst [vmem:[%s172 + $0x18] sm:$0xff] %v377
      %442 = vst [vmem:[%s172 + $0x20] sm:$0xff] %v378
      %443 = vst [vmem:[%s172 + $0x28] sm:$0xff] %v379
      %444 = vst [vmem:[%s172 + $0x30] sm:$0xff] %v380
      %445 = vst [vmem:[%s172 + $0x38] sm:$0xff] %v381
      %446 = vst [vmem:[%s172 + $0x40] sm:$0xff] %v382
      %447 = vst [vmem:[%s172 + $0x48] sm:$0xff] %v383
      %448 = vst [vmem:[%s172 + $0x50] sm:$0xff] %v384
      %449 = vst [vmem:[%s172 + $0x58] sm:$0xff] %v385
      %450 = vst [vmem:[%s172 + $0x60] sm:$0xff] %v386
      %451 = vst [vmem:[%s172 + $0x68] sm:$0xff] %v387
      %452 = vst [vmem:[%s172 + $0x70] sm:$0xff] %v388
      %453 = vst [vmem:[%s172 + $0x78] sm:$0xff] %v389
      %454 = vst [vmem:[%s172 + $0x80] sm:$0xff] %v390
      %455 = vst [vmem:[%s172 + $0x88] sm:$0xff] %v391
      %456 = vst [vmem:[%s172 + $0x90] sm:$0xff] %v392
      %457 = vst [vmem:[%s172 + $0x98] sm:$0xff] %v393
      %458 = vst [vmem:[%s172 + $0xa0] sm:$0xff] %v394
      %459 = vst [vmem:[%s172 + $0xa8] sm:$0xff] %v395
      %460 = vst [vmem:[%s172 + $0xb0] sm:$0xff] %v396
      %461 = vst [vmem:[%s172 + $0xb8] sm:$0xff] %v397
      %462 = vst [vmem:[%s172 + $0xc0] sm:$0xff] %v398
      %463 = vst [vmem:[%s172 + $0xc8] sm:$0xff] %v399
      %464 = vst [vmem:[%s172 + $0xd0] sm:$0xff] %v400
      %465 = vst [vmem:[%s172 + $0xd8] sm:$0xff] %v401
      %466 = vst [vmem:[%s172 + $0xe0] sm:$0xff] %v402
      %467 = vst [vmem:[%s172 + $0xe8] sm:$0xff] %v403
      %468 = vst [vmem:[%s172 + $0xf0] sm:$0xff] %v404
      %469 = vst [vmem:[%s172 + $0xf8] sm:$0xff] %v405
      %470 = vst [vmem:[%s172 + $0x100] sm:$0xff] %v406
      %471 = vst [vmem:[%s172 + $0x108] sm:$0xff] %v407
      %472 = vst [vmem:[%s172 + $0x110] sm:$0xff] %v408
      %473 = vst [vmem:[%s172 + $0x118] sm:$0xff] %v409
      %474 = vst [vmem:[%s172 + $0x120] sm:$0xff] %v410
      %475 = vst [vmem:[%s172 + $0x128] sm:$0xff] %v411
      %476 = vst [vmem:[%s172 + $0x130] sm:$0xff] %v412
      %477 = vst [vmem:[%s172 + $0x138] sm:$0xff] %v413
      %478 = vst [vmem:[%s172 + $0x140] sm:$0xff] %v414
      %479 = vst [vmem:[%s172 + $0x148] sm:$0xff] %v415
      %480 = vst [vmem:[%s172 + $0x150] sm:$0xff] %v416
      %481 = vst [vmem:[%s172 + $0x158] sm:$0xff] %v417
      %482 = vst [vmem:[%s172 + $0x160] sm:$0xff] %v418
      %483 = vst [vmem:[%s172 + $0x168] sm:$0xff] %v419
      %484 = vst [vmem:[%s172 + $0x170] sm:$0xff] %v420
      %485 = vst [vmem:[%s172 + $0x178] sm:$0xff] %v421
      %486 = vst [vmem:[%s172 + $0x180] sm:$0xff] %v422
      %487 = vst [vmem:[%s172 + $0x188] sm:$0xff] %v423
      %488 = vst [vmem:[%s172 + $0x190] sm:$0xff] %v424
      %489 = vst [vmem:[%s172 + $0x198] sm:$0xff] %v425
      %490 = vst [vmem:[%s172 + $0x1a0] sm:$0xff] %v426
      %491 = vst [vmem:[%s172 + $0x1a8] sm:$0xff] %v427
      %492 = vst [vmem:[%s172 + $0x1b0] sm:$0xff] %v428
      %493 = vst [vmem:[%s172 + $0x1b8] sm:$0xff] %v429
      %494 = vst [vmem:[%s172 + $0x1c0] sm:$0xff] %v430
      %495 = vst [vmem:[%s172 + $0x1c8] sm:$0xff] %v431
      %496 = vst [vmem:[%s172 + $0x1d0] sm:$0xff] %v432
      %497 = vst [vmem:[%s172 + $0x1d8] sm:$0xff] %v433
      %498 = vst [vmem:[%s172 + $0x1e0] sm:$0xff] %v434
      %499 = vst [vmem:[%s172 + $0x1e8] sm:$0xff] %v435
      %500 = vst [vmem:[%s172 + $0x1f0] sm:$0xff] %v436
      %501 = vst [vmem:[%s172 + $0x1f8] sm:$0xff] %v437
      %s502 = smul.u32 64, %s14
      %p503 = scmp.lt.s32.totalorder %s502, 127
      %s504 = scalar_select %p503, %s502, 127
      %s505 = smul.addr %s504, 8
      %s506 = scalar_lea.vmem %s3, %s505
      // Predicated region
      $region33: #{conv_block_forward.7} parent=31 // pred_check
        %p507 = pneg %p100
      $region34: #{conv_block_forward.7} parent=31 // pred_check_branch
        %509 = sbr.rel (%p507) target = $region36
      $region35: #{conv_block_forward.7} parent=31 // pred_region
        %s510 = smul.u32 64, %s14
      $region36: #{conv_block_forward.7} parent=31 // pred_fallthru
        _
    $region32: #{conv_block_forward.7} parent=5 // pred_fallthru
      _
    %p511 = scmp.le.s32.totalorder 2, %s9
    // Predicated region
    $region37: #{conv_block_forward.7} parent=5 // pred_check
      %p512 = pneg %p511
    $region38: #{conv_block_forward.7} parent=5 // pred_check_branch
      %514 = sbr.rel (%p512) target = $region40
    $region39: #{conv_block_forward.7} parent=5 // pred_region
      %s515 = ssub.s32 %s9, 2
      // Predicated region
      $region41: #{conv_block_forward.7} parent=39 // pred_check
        %p516 = pneg %p106
      $region42: #{conv_block_forward.7} parent=39 // pred_check_branch
        %518 = sbr.rel (%p516) target = $region44
      $region43: #{conv_block_forward.7} parent=39 // pred_region
        %s519 = smul.u32 64, %s15
        %p520 = scmp.lt.s32.totalorder %s519, 127
        %s521 = scalar_select %p520, %s519, 127
        %s522 = smul.addr %s521, 8
        %s523 = scalar_lea.vmem %s3, %s522
      $region44: #{conv_block_forward.7} parent=39 // pred_fallthru
        _
    $region40: #{conv_block_forward.7} parent=5 // pred_fallthru
      _
  $region6: #{conv_block_forward.7} parent=0 // loop_footer
    %s13 = sadd.s32 1, %s9
  $region7: #{conv_block_forward.7} parent=0 // loop_footer_branch
    %8 = sbr.rel target = $region3
  $region8: #{conv_block_forward.7} parent=0 // loop_exit
    _

</llo_original>
